<compile_context>
chip_gen: v5e
topology: v5e:2x2
jax: 0.10.0
libtpu: 0.0.40
codegen_flags: <defaults>
</compile_context>

<pallas_src>
import functools

import jax
import jax.numpy as jnp
from jax.experimental import pallas as pl
from jax.experimental.pallas import tpu as pltpu

STATE_DIM = 3                      # pendulum observation dim
ACTION_DIM = 1                     # pendulum action dim
LATENT_DIM = 2 * ACTION_DIM        # BCQ convention: latent_dim = 2 * action_dim
HID = 750
MAX_ACTION = 2.0


def _round_up(x, m):
    return ((x + m - 1) // m) * m


def _narrow_head(h, wt, b):
    """y = h @ wt.T + b for a very narrow output dim, computed on the VPU.

    h : (TB, K) f32 activations
    wt: (O,  K) f32 transposed head weight (O is 1 or 2 here)
    b : (1,  O) f32 bias
    Avoids an MXU matmul with N=O that wastes 126+/128 lanes and a (K, O)
    operand padded to full (8,128) tiles in VMEM.
    """
    out_dim = wt.shape[0]
    cols = [jnp.sum(h * wt[j:j + 1, :], axis=-1, keepdims=True)
            for j in range(out_dim)]
    y = cols[0] if out_dim == 1 else jnp.concatenate(cols, axis=1)
    return y + b


def vae_kernel(sa_ref, noise_ref,
               w_e1_ref, b_e1_ref, w_e2_ref, b_e2_ref,
               wt_mean_ref, b_mean_ref, wt_logstd_ref, b_logstd_ref,
               w_d1_ref, b_d1_ref, w_d2_ref, b_d2_ref, wt_d3_ref, b_d3_ref,
               u_ref, mean_ref, std_ref,
               dz_ref,
               *, state_dim, latent_dim, max_action):
    f32 = jnp.float32
    sa = sa_ref[...]                           # (TB, S+A) f32
    noise = noise_ref[...]                     # (TB, L)   f32

    # ---------------- encoder ----------------
    # e1: tiny K (=4), kept f32 for accuracy (negligible MXU cost).
    h = jnp.dot(sa, w_e1_ref[...], preferred_element_type=f32)
    h = jnp.maximum(h + b_e1_ref[...], 0.0)                              # (TB, 768)
    # e2: the big 768x768 weight in bf16, f32 accumulate on the MXU.
    h = jnp.dot(h.astype(jnp.bfloat16), w_e2_ref[...],
                preferred_element_type=f32)
    h = jnp.maximum(h + b_e2_ref[...], 0.0)                              # (TB, 768)

    # -------- latent heads (VPU lane-reduce, f32) --------
    mean = _narrow_head(h, wt_mean_ref[...], b_mean_ref[...])            # (TB, L)
    log_std = _narrow_head(h, wt_logstd_ref[...], b_logstd_ref[...])     # (TB, L)
    log_std = jnp.clip(log_std, -4.0, 15.0)
    std = jnp.exp(log_std)
    z = mean + std * noise                                               # (TB, L)

    # ---------------- decoder ----------------
    # Stage [state, z] into an 8-lane VMEM tile (masked lane writes) and run a
    # single fused d1 dot against the pre-packed (8, 768) weight (zero rows for
    # the unused lanes) -> one padded MXU pass instead of two.
    dz_ref[...] = jnp.zeros_like(dz_ref)
    dz_ref[:, :state_dim] = sa[:, :state_dim]
    dz_ref[:, state_dim:state_dim + latent_dim] = z
    d = jnp.dot(dz_ref[...], w_d1_ref[...], preferred_element_type=f32)
    d = jnp.maximum(d + b_d1_ref[...], 0.0)                              # (TB, 768)
    d = jnp.dot(d.astype(jnp.bfloat16), w_d2_ref[...],
                preferred_element_type=f32)
    d = jnp.maximum(d + b_d2_ref[...], 0.0)                              # (TB, 768)

    u = _narrow_head(d, wt_d3_ref[...], b_d3_ref[...])                   # (TB, A)
    u_ref[...] = max_action * jnp.tanh(u)
    mean_ref[...] = mean
    std_ref[...] = std


def prepare_params(params, *, state_dim=STATE_DIM):
    """One-time weight preparation (call once, reuse for every forward).

    * pads HID 750 -> 768 with zeros (full lane tiles),
    * casts the big 768x768 weights (e2/d2) to bf16,
    * packs d1 into an (8, 768) matrix: rows [0:S)=state rows,
      [S:S+L)=latent rows, rest zero (matches the in-kernel staging tile),
    * transposes the narrow heads to (O, 768) f32 for the VPU lane-reduce.
    """
    (w_e1, b_e1, w_e2, b_e2, w_mean, b_mean, w_logstd, b_logstd,
     w_d1, b_d1, w_d2, b_d2, w_d3, b_d3) = params
    f32 = jnp.float32
    hid = w_e2.shape[0]
    hp = _round_up(hid, 128)                   # 750 -> 768
    S = state_dim
    L = w_mean.shape[1]

    def pad_cols(w):
        return jnp.pad(w.astype(f32), ((0, 0), (0, hp - w.shape[1])))

    def pad_both(w):
        return jnp.pad(w.astype(f32),
                       ((0, hp - w.shape[0]), (0, hp - w.shape[1])))

    w_e1_p = pad_cols(w_e1)                                   # (S+A, 768) f32
    b_e1_p = pad_cols(b_e1)                                   # (1, 768)
    w_e2_p = pad_both(w_e2).astype(jnp.bfloat16)              # (768, 768) bf16
    b_e2_p = pad_cols(b_e2)
    wt_mean = pad_cols(w_mean.T)                              # (L, 768) f32
    wt_logstd = pad_cols(w_logstd.T)                          # (L, 768) f32
    w_d1_p = jnp.zeros((8, hp), f32).at[:S + L, :w_d1.shape[1]].set(
        w_d1.astype(f32))                                     # (8, 768) f32
    b_d1_p = pad_cols(b_d1)
    w_d2_p = pad_both(w_d2).astype(jnp.bfloat16)              # (768, 768) bf16
    b_d2_p = pad_cols(b_d2)
    wt_d3 = pad_cols(w_d3.T)                                  # (A, 768) f32

    return (w_e1_p, b_e1_p, w_e2_p, b_e2_p,
            wt_mean, b_mean.astype(f32), wt_logstd, b_logstd.astype(f32),
            w_d1_p, b_d1_p, w_d2_p, b_d2_p,
            wt_d3, b_d3.astype(f32))


def vae_forward(state, action, noise, prepared, *, max_action=MAX_ACTION,
                block_b=None):
    (w_e1, b_e1, w_e2, b_e2, wt_mean, b_mean, wt_logstd, b_logstd,
     w_d1, b_d1, w_d2, b_d2, wt_d3, b_d3) = prepared
    B, S = state.shape
    A = action.shape[1]
    L = noise.shape[1]

    # Concatenate encoder input once in the wrapper (cheap XLA op) instead of
    # lowering a 3-lane + 1-lane concat inside the kernel.
    sa = jnp.concatenate([state, action], axis=1).astype(jnp.float32)    # (B, S+A)
    noise = noise.astype(jnp.float32)

    # Batch tiling: weights stay resident in VMEM (constant index_map); the
    # batch axis is "parallel".  Big tiles amortize the ~0.35us per-step
    # overhead; keep >=2 grid steps when possible so v7x can use both TCs.
    if block_b is None:
        block_b = min(256, _round_up(B, 16))
        if B > 16 and _round_up(B, block_b) == block_b:      # single grid step
            block_b = max(16, _round_up((B + 1) // 2, 16))
    b_pad = _round_up(B, block_b)
    if b_pad != B:
        sa = jnp.pad(sa, ((0, b_pad - B), (0, 0)))
        noise = jnp.pad(noise, ((0, b_pad - B), (0, 0)))
    grid = (b_pad // block_b,)

    batch_spec = lambda cols: pl.BlockSpec((block_b, cols), lambda i: (i, 0))
    resident = lambda arr: pl.BlockSpec(arr.shape,
                                        lambda i, nd=arr.ndim: (0,) * nd)

    kernel = functools.partial(vae_kernel, state_dim=S, latent_dim=L,
                               max_action=max_action)
    u, mean, std = pl.pallas_call(
        kernel,
        grid=grid,
        out_shape=(jax.ShapeDtypeStruct((b_pad, A), jnp.float32),
                   jax.ShapeDtypeStruct((b_pad, L), jnp.float32),
                   jax.ShapeDtypeStruct((b_pad, L), jnp.float32)),
        in_specs=[batch_spec(S + A), batch_spec(L),
                  resident(w_e1), resident(b_e1),
                  resident(w_e2), resident(b_e2),
                  resident(wt_mean), resident(b_mean),
                  resident(wt_logstd), resident(b_logstd),
                  resident(w_d1), resident(b_d1),
                  resident(w_d2), resident(b_d2),
                  resident(wt_d3), resident(b_d3)],
        out_specs=(batch_spec(A), batch_spec(L), batch_spec(L)),
        scratch_shapes=[pltpu.VMEM((block_b, 8), jnp.float32)],  # [state,z] staging
        compiler_params=pltpu.CompilerParams(
            dimension_semantics=("parallel",),
            vmem_limit_bytes=48 * 1024 * 1024),
    )(sa, noise,
      w_e1, b_e1, w_e2, b_e2,
      wt_mean, b_mean, wt_logstd, b_logstd,
      w_d1, b_d1, w_d2, b_d2, wt_d3, b_d3)

    if b_pad != B:
        u, mean, std = u[:B], mean[:B], std[:B]
    return u, mean, std


def init_params(key):
    """Deterministic synthetic parameters with the shapes implied by VAE.__init__."""
    ks = jax.random.split(key, 14)

    def lin(kw, kb, fin, fout):
        w = jax.random.normal(kw, (fin, fout), jnp.float32) * (1.0 / jnp.sqrt(fin))
        b = jax.random.normal(kb, (1, fout), jnp.float32) * 0.01
        return w, b

    in_e = STATE_DIM + ACTION_DIM
    in_d = STATE_DIM + LATENT_DIM
    w_e1, b_e1 = lin(ks[0], ks[1], in_e, HID)
    w_e2, b_e2 = lin(ks[2], ks[3], HID, HID)
    w_mean, b_mean = lin(ks[4], ks[5], HID, LATENT_DIM)
    w_logstd, b_logstd = lin(ks[6], ks[7], HID, LATENT_DIM)
    w_d1, b_d1 = lin(ks[8], ks[9], in_d, HID)
    w_d2, b_d2 = lin(ks[10], ks[11], HID, HID)
    w_d3, b_d3 = lin(ks[12], ks[13], HID, ACTION_DIM)
    return (w_e1, b_e1, w_e2, b_e2, w_mean, b_mean, w_logstd, b_logstd,
            w_d1, b_d1, w_d2, b_d2, w_d3, b_d3)


def vae_ref(state, action, noise, params, *, max_action=MAX_ACTION):
    """Pure-JAX f32 reference matching the PyTorch forward (eps supplied)."""
    (w_e1, b_e1, w_e2, b_e2, w_mean, b_mean, w_logstd, b_logstd,
     w_d1, b_d1, w_d2, b_d2, w_d3, b_d3) = params
    h = jax.nn.relu(jnp.concatenate([state, action], 1) @ w_e1 + b_e1)
    h = jax.nn.relu(h @ w_e2 + b_e2)
    mean = h @ w_mean + b_mean
    log_std = jnp.clip(h @ w_logstd + b_logstd, -4.0, 15.0)
    std = jnp.exp(log_std)
    z = mean + std * noise
    d = jax.nn.relu(jnp.concatenate([state, z], 1) @ w_d1 + b_d1)
    d = jax.nn.relu(d @ w_d2 + b_d2)
    u = max_action * jnp.tanh(d @ w_d3 + b_d3)
    return u, mean, std


if __name__ == "__main__":
    key = jax.random.PRNGKey(0)
    kp, ks, ka, kn = jax.random.split(key, 4)

    B = 48
    params = init_params(kp)
    # One-time weight preparation (hoisted out of the per-call forward).
    prepared = jax.block_until_ready(prepare_params(params))

    state = jax.random.normal(ks, (B, STATE_DIM), jnp.float32)
    action = jnp.clip(jax.random.normal(ka, (B, ACTION_DIM), jnp.float32),
                      -MAX_ACTION, MAX_ACTION)
    noise = jax.random.normal(kn, (B, LATENT_DIM), jnp.float32)

    fwd = jax.jit(vae_forward)
    u, mean, std = jax.block_until_ready(fwd(state, action, noise, prepared))

    u_ref, mean_ref, std_ref = vae_ref(state, action, noise, params)
    assert u.shape == (B, ACTION_DIM), u.shape
    assert mean.shape == (B, LATENT_DIM), mean.shape
    assert std.shape == (B, LATENT_DIM), std.shape
    # e2/d2 run bf16 on the MXU vs. the f32 reference -> loosened tolerance
    # (still catches any semantic bug, which would give O(1) discrepancies).
    assert jnp.allclose(u, u_ref, atol=1e-1, rtol=1e-1), (u, u_ref)
    assert jnp.allclose(mean, mean_ref, atol=1e-1, rtol=1e-1), (mean, mean_ref)
    assert jnp.allclose(std, std_ref, atol=1e-1, rtol=1e-1), (std, std_ref)

    print("KERNEL_OK")
</pallas_src>

<mosaic_0001>
module attributes {stable_mosaic.version = 11 : i64} {
  func.func @vae_kernel(%arg0: i32, %arg1: memref<32x4xf32, #tpu.memory_space<vmem>>, %arg2: memref<32x2xf32, #tpu.memory_space<vmem>>, %arg3: memref<4x768xf32, #tpu.memory_space<vmem>>, %arg4: memref<1x768xf32, #tpu.memory_space<vmem>>, %arg5: memref<768x768xbf16, #tpu.memory_space<vmem>>, %arg6: memref<1x768xf32, #tpu.memory_space<vmem>>, %arg7: memref<2x768xf32, #tpu.memory_space<vmem>>, %arg8: memref<1x2xf32, #tpu.memory_space<vmem>>, %arg9: memref<2x768xf32, #tpu.memory_space<vmem>>, %arg10: memref<1x2xf32, #tpu.memory_space<vmem>>, %arg11: memref<8x768xf32, #tpu.memory_space<vmem>>, %arg12: memref<1x768xf32, #tpu.memory_space<vmem>>, %arg13: memref<768x768xbf16, #tpu.memory_space<vmem>>, %arg14: memref<1x768xf32, #tpu.memory_space<vmem>>, %arg15: memref<1x768xf32, #tpu.memory_space<vmem>>, %arg16: memref<1x1xf32, #tpu.memory_space<vmem>>, %arg17: memref<32x1xf32, #tpu.memory_space<vmem>>, %arg18: memref<32x2xf32, #tpu.memory_space<vmem>>, %arg19: memref<32x2xf32, #tpu.memory_space<vmem>>, %arg20: memref<32x8xf32, #tpu.memory_space<vmem>>) attributes {dimension_semantics = [#tpu.dimension_semantics<parallel>], iteration_bounds = array<i64: 2>, scalar_prefetch = 0 : i64, scratch_operands = 1 : i64, tpu.core_type = #tpu.core_type<tc>, window_params = [{transform_indices = @transform_0, window_bounds = array<i64: 32, 4>}, {transform_indices = @transform_1, window_bounds = array<i64: 32, 2>}, {pipeline_mode = #tpu.pipeline_mode<synchronous>, transform_indices = @transform_2, window_bounds = array<i64: 4, 768>}, {pipeline_mode = #tpu.pipeline_mode<synchronous>, transform_indices = @transform_3, window_bounds = array<i64: 1, 768>}, {pipeline_mode = #tpu.pipeline_mode<synchronous>, transform_indices = @transform_4, window_bounds = array<i64: 768, 768>}, {pipeline_mode = #tpu.pipeline_mode<synchronous>, transform_indices = @transform_5, window_bounds = array<i64: 1, 768>}, {pipeline_mode = #tpu.pipeline_mode<synchronous>, transform_indices = @transform_6, window_bounds = array<i64: 2, 768>}, {pipeline_mode = #tpu.pipeline_mode<synchronous>, transform_indices = @transform_7, window_bounds = array<i64: 1, 2>}, {pipeline_mode = #tpu.pipeline_mode<synchronous>, transform_indices = @transform_8, window_bounds = array<i64: 2, 768>}, {pipeline_mode = #tpu.pipeline_mode<synchronous>, transform_indices = @transform_9, window_bounds = array<i64: 1, 2>}, {pipeline_mode = #tpu.pipeline_mode<synchronous>, transform_indices = @transform_10, window_bounds = array<i64: 8, 768>}, {pipeline_mode = #tpu.pipeline_mode<synchronous>, transform_indices = @transform_11, window_bounds = array<i64: 1, 768>}, {pipeline_mode = #tpu.pipeline_mode<synchronous>, transform_indices = @transform_12, window_bounds = array<i64: 768, 768>}, {pipeline_mode = #tpu.pipeline_mode<synchronous>, transform_indices = @transform_13, window_bounds = array<i64: 1, 768>}, {pipeline_mode = #tpu.pipeline_mode<synchronous>, transform_indices = @transform_14, window_bounds = array<i64: 1, 768>}, {pipeline_mode = #tpu.pipeline_mode<synchronous>, transform_indices = @transform_15, window_bounds = array<i64: 1, 1>}, {transform_indices = @transform_16, window_bounds = array<i64: 32, 1>}, {transform_indices = @transform_17, window_bounds = array<i64: 32, 2>}, {transform_indices = @transform_18, window_bounds = array<i64: 32, 2>}]} {
    %c0 = arith.constant 0 : index
    %c0_0 = arith.constant 0 : index
    %0 = vector.load %arg1[%c0, %c0_0] : memref<32x4xf32, #tpu.memory_space<vmem>>, vector<32x4xf32>
    %c0_1 = arith.constant 0 : index
    %c0_2 = arith.constant 0 : index
    %1 = vector.load %arg2[%c0_1, %c0_2] : memref<32x2xf32, #tpu.memory_space<vmem>>, vector<32x2xf32>
    %c0_3 = arith.constant 0 : index
    %c0_4 = arith.constant 0 : index
    %2 = vector.load %arg3[%c0_3, %c0_4] : memref<4x768xf32, #tpu.memory_space<vmem>>, vector<4x768xf32>
    %cst = arith.constant dense<0.000000e+00> : vector<32x768xf32>
    %3 = tpu.matmul %0, %2, %cst {dimension_numbers = #tpu.dot_dimension_numbers<[1], [0], [0], [1], [0, 0, 1, 1], [], []>} : vector<32x4xf32>, vector<4x768xf32>, vector<32x768xf32> -> vector<32x768xf32>
    %c0_5 = arith.constant 0 : index
    %c0_6 = arith.constant 0 : index
    %4 = vector.load %arg4[%c0_5, %c0_6] : memref<1x768xf32, #tpu.memory_space<vmem>>, vector<1x768xf32>
    %5 = vector.broadcast %4 : vector<1x768xf32> to vector<32x768xf32>
    %6 = arith.addf %3, %5 : vector<32x768xf32>
    %cst_7 = arith.constant 0.000000e+00 : f32
    %7 = vector.broadcast %cst_7 : f32 to vector<32x768xf32>
    %8 = arith.maximumf %6, %7 : vector<32x768xf32>
    %9 = arith.truncf %8 : vector<32x768xf32> to vector<32x768xbf16>
    %c0_8 = arith.constant 0 : index
    %c0_9 = arith.constant 0 : index
    %10 = vector.load %arg5[%c0_8, %c0_9] : memref<768x768xbf16, #tpu.memory_space<vmem>>, vector<768x768xbf16>
    %cst_10 = arith.constant dense<0.000000e+00> : vector<32x768xf32>
    %11 = tpu.matmul %9, %10, %cst_10 {dimension_numbers = #tpu.dot_dimension_numbers<[1], [0], [0], [1], [0, 0, 1, 1], [], []>} : vector<32x768xbf16>, vector<768x768xbf16>, vector<32x768xf32> -> vector<32x768xf32>
    %c0_11 = arith.constant 0 : index
    %c0_12 = arith.constant 0 : index
    %12 = vector.load %arg6[%c0_11, %c0_12] : memref<1x768xf32, #tpu.memory_space<vmem>>, vector<1x768xf32>
    %13 = vector.broadcast %12 : vector<1x768xf32> to vector<32x768xf32>
    %14 = arith.addf %11, %13 : vector<32x768xf32>
    %cst_13 = arith.constant 0.000000e+00 : f32
    %15 = vector.broadcast %cst_13 : f32 to vector<32x768xf32>
    %16 = arith.maximumf %14, %15 : vector<32x768xf32>
    %c0_14 = arith.constant 0 : index
    %c0_15 = arith.constant 0 : index
    %17 = vector.load %arg7[%c0_14, %c0_15] : memref<2x768xf32, #tpu.memory_space<vmem>>, vector<2x768xf32>
    %c0_16 = arith.constant 0 : index
    %c0_17 = arith.constant 0 : index
    %18 = vector.load %arg8[%c0_16, %c0_17] : memref<1x2xf32, #tpu.memory_space<vmem>>, vector<1x2xf32>
    %19 = vector.extract_strided_slice %17 {offsets = [0, 0], sizes = [1, 768], strides = [1, 1]} : vector<2x768xf32> to vector<1x768xf32>
    %20 = vector.broadcast %19 : vector<1x768xf32> to vector<32x768xf32>
    %21 = arith.mulf %16, %20 : vector<32x768xf32>
    %cst_18 = arith.constant dense<0.000000e+00> : vector<32xf32>
    %22 = vector.multi_reduction <add>, %21, %cst_18 [1] : vector<32x768xf32> to vector<32xf32>
    %23 = vector.shape_cast %22 : vector<32xf32> to vector<32x1xf32>
    %24 = vector.extract_strided_slice %17 {offsets = [1, 0], sizes = [1, 768], strides = [1, 1]} : vector<2x768xf32> to vector<1x768xf32>
    %25 = vector.broadcast %24 : vector<1x768xf32> to vector<32x768xf32>
    %26 = arith.mulf %16, %25 : vector<32x768xf32>
    %cst_19 = arith.constant dense<0.000000e+00> : vector<32xf32>
    %27 = vector.multi_reduction <add>, %26, %cst_19 [1] : vector<32x768xf32> to vector<32xf32>
    %28 = vector.shape_cast %27 : vector<32xf32> to vector<32x1xf32>
    %29 = tpu.concatenate %23, %28 in 1 : vector<32x1xf32>, vector<32x1xf32> -> vector<32x2xf32>
    %30 = vector.broadcast %18 : vector<1x2xf32> to vector<32x2xf32>
    %31 = arith.addf %29, %30 : vector<32x2xf32>
    %c0_20 = arith.constant 0 : index
    %c0_21 = arith.constant 0 : index
    %32 = vector.load %arg9[%c0_20, %c0_21] : memref<2x768xf32, #tpu.memory_space<vmem>>, vector<2x768xf32>
    %c0_22 = arith.constant 0 : index
    %c0_23 = arith.constant 0 : index
    %33 = vector.load %arg10[%c0_22, %c0_23] : memref<1x2xf32, #tpu.memory_space<vmem>>, vector<1x2xf32>
    %34 = vector.extract_strided_slice %32 {offsets = [0, 0], sizes = [1, 768], strides = [1, 1]} : vector<2x768xf32> to vector<1x768xf32>
    %35 = vector.broadcast %34 : vector<1x768xf32> to vector<32x768xf32>
    %36 = arith.mulf %16, %35 : vector<32x768xf32>
    %cst_24 = arith.constant dense<0.000000e+00> : vector<32xf32>
    %37 = vector.multi_reduction <add>, %36, %cst_24 [1] : vector<32x768xf32> to vector<32xf32>
    %38 = vector.shape_cast %37 : vector<32xf32> to vector<32x1xf32>
    %39 = vector.extract_strided_slice %32 {offsets = [1, 0], sizes = [1, 768], strides = [1, 1]} : vector<2x768xf32> to vector<1x768xf32>
    %40 = vector.broadcast %39 : vector<1x768xf32> to vector<32x768xf32>
    %41 = arith.mulf %16, %40 : vector<32x768xf32>
    %cst_25 = arith.constant dense<0.000000e+00> : vector<32xf32>
    %42 = vector.multi_reduction <add>, %41, %cst_25 [1] : vector<32x768xf32> to vector<32xf32>
    %43 = vector.shape_cast %42 : vector<32xf32> to vector<32x1xf32>
    %44 = tpu.concatenate %38, %43 in 1 : vector<32x1xf32>, vector<32x1xf32> -> vector<32x2xf32>
    %45 = vector.broadcast %33 : vector<1x2xf32> to vector<32x2xf32>
    %46 = arith.addf %44, %45 : vector<32x2xf32>
    %cst_26 = arith.constant -4.000000e+00 : f32
    %cst_27 = arith.constant 1.500000e+01 : f32
    %47 = vector.broadcast %cst_26 : f32 to vector<32x2xf32>
    %48 = arith.maximumf %47, %46 : vector<32x2xf32>
    %49 = vector.broadcast %cst_27 : f32 to vector<32x2xf32>
    %50 = arith.minimumf %49, %48 : vector<32x2xf32>
    %51 = math.exp %50 : vector<32x2xf32>
    %52 = arith.mulf %51, %1 : vector<32x2xf32>
    %53 = arith.addf %31, %52 : vector<32x2xf32>
    %cst_28 = arith.constant 0.000000e+00 : f32
    %54 = vector.broadcast %cst_28 : f32 to vector<32x8xf32>
    %c0_29 = arith.constant 0 : index
    %c0_30 = arith.constant 0 : index
    %55 = vector.load %arg20[%c0_29, %c0_30] : memref<32x8xf32, #tpu.memory_space<vmem>>, vector<32x8xf32>
    tpu.vector_store %arg20[%c0_29, %c0_30], %54 {strides = array<i32>} : memref<32x8xf32, #tpu.memory_space<vmem>>, vector<32x8xf32>,
    %56 = vector.extract_strided_slice %0 {offsets = [0, 0], sizes = [32, 3], strides = [1, 1]} : vector<32x4xf32> to vector<32x3xf32>
    %c0_31 = arith.constant 0 : index
    %c0_32 = arith.constant 0 : index
    %57 = vector.load %arg20[%c0_31, %c0_32] : memref<32x8xf32, #tpu.memory_space<vmem>>, vector<32x3xf32>
    tpu.vector_store %arg20[%c0_31, %c0_32], %56 {strides = array<i32>} : memref<32x8xf32, #tpu.memory_space<vmem>>, vector<32x3xf32>,
    %c0_33 = arith.constant 0 : index
    %c3 = arith.constant 3 : index
    %58 = vector.load %arg20[%c0_33, %c3] : memref<32x8xf32, #tpu.memory_space<vmem>>, vector<32x2xf32>
    tpu.vector_store %arg20[%c0_33, %c3], %53 {strides = array<i32>} : memref<32x8xf32, #tpu.memory_space<vmem>>, vector<32x2xf32>,
    %c0_34 = arith.constant 0 : index
    %c0_35 = arith.constant 0 : index
    %59 = vector.load %arg20[%c0_34, %c0_35] : memref<32x8xf32, #tpu.memory_space<vmem>>, vector<32x8xf32>
    %c0_36 = arith.constant 0 : index
    %c0_37 = arith.constant 0 : index
    %60 = vector.load %arg11[%c0_36, %c0_37] : memref<8x768xf32, #tpu.memory_space<vmem>>, vector<8x768xf32>
    %cst_38 = arith.constant dense<0.000000e+00> : vector<32x768xf32>
    %61 = tpu.matmul %59, %60, %cst_38 {dimension_numbers = #tpu.dot_dimension_numbers<[1], [0], [0], [1], [0, 0, 1, 1], [], []>} : vector<32x8xf32>, vector<8x768xf32>, vector<32x768xf32> -> vector<32x768xf32>
    %c0_39 = arith.constant 0 : index
    %c0_40 = arith.constant 0 : index
    %62 = vector.load %arg12[%c0_39, %c0_40] : memref<1x768xf32, #tpu.memory_space<vmem>>, vector<1x768xf32>
    %63 = vector.broadcast %62 : vector<1x768xf32> to vector<32x768xf32>
    %64 = arith.addf %61, %63 : vector<32x768xf32>
    %cst_41 = arith.constant 0.000000e+00 : f32
    %65 = vector.broadcast %cst_41 : f32 to vector<32x768xf32>
    %66 = arith.maximumf %64, %65 : vector<32x768xf32>
    %67 = arith.truncf %66 : vector<32x768xf32> to vector<32x768xbf16>
    %c0_42 = arith.constant 0 : index
    %c0_43 = arith.constant 0 : index
    %68 = vector.load %arg13[%c0_42, %c0_43] : memref<768x768xbf16, #tpu.memory_space<vmem>>, vector<768x768xbf16>
    %cst_44 = arith.constant dense<0.000000e+00> : vector<32x768xf32>
    %69 = tpu.matmul %67, %68, %cst_44 {dimension_numbers = #tpu.dot_dimension_numbers<[1], [0], [0], [1], [0, 0, 1, 1], [], []>} : vector<32x768xbf16>, vector<768x768xbf16>, vector<32x768xf32> -> vector<32x768xf32>
    %c0_45 = arith.constant 0 : index
    %c0_46 = arith.constant 0 : index
    %70 = vector.load %arg14[%c0_45, %c0_46] : memref<1x768xf32, #tpu.memory_space<vmem>>, vector<1x768xf32>
    %71 = vector.broadcast %70 : vector<1x768xf32> to vector<32x768xf32>
    %72 = arith.addf %69, %71 : vector<32x768xf32>
    %cst_47 = arith.constant 0.000000e+00 : f32
    %73 = vector.broadcast %cst_47 : f32 to vector<32x768xf32>
    %74 = arith.maximumf %72, %73 : vector<32x768xf32>
    %c0_48 = arith.constant 0 : index
    %c0_49 = arith.constant 0 : index
    %75 = vector.load %arg15[%c0_48, %c0_49] : memref<1x768xf32, #tpu.memory_space<vmem>>, vector<1x768xf32>
    %c0_50 = arith.constant 0 : index
    %c0_51 = arith.constant 0 : index
    %76 = vector.load %arg16[%c0_50, %c0_51] : memref<1x1xf32, #tpu.memory_space<vmem>>, vector<1x1xf32>
    %77 = vector.broadcast %75 : vector<1x768xf32> to vector<32x768xf32>
    %78 = arith.mulf %74, %77 : vector<32x768xf32>
    %cst_52 = arith.constant dense<0.000000e+00> : vector<32xf32>
    %79 = vector.multi_reduction <add>, %78, %cst_52 [1] : vector<32x768xf32> to vector<32xf32>
    %80 = vector.shape_cast %79 : vector<32xf32> to vector<32x1xf32>
    %81 = vector.broadcast %76 : vector<1x1xf32> to vector<32x1xf32>
    %82 = arith.addf %80, %81 : vector<32x1xf32>
    %83 = math.tanh %82 : vector<32x1xf32>
    %cst_53 = arith.constant 2.000000e+00 : f32
    %84 = vector.broadcast %cst_53 : f32 to vector<32x1xf32>
    %85 = arith.mulf %84, %83 : vector<32x1xf32>
    %c0_54 = arith.constant 0 : index
    %c0_55 = arith.constant 0 : index
    %86 = vector.load %arg17[%c0_54, %c0_55] : memref<32x1xf32, #tpu.memory_space<vmem>>, vector<32x1xf32>
    tpu.vector_store %arg17[%c0_54, %c0_55], %85 {strides = array<i32>} : memref<32x1xf32, #tpu.memory_space<vmem>>, vector<32x1xf32>,
    %c0_56 = arith.constant 0 : index
    %c0_57 = arith.constant 0 : index
    %87 = vector.load %arg18[%c0_56, %c0_57] : memref<32x2xf32, #tpu.memory_space<vmem>>, vector<32x2xf32>
    tpu.vector_store %arg18[%c0_56, %c0_57], %31 {strides = array<i32>} : memref<32x2xf32, #tpu.memory_space<vmem>>, vector<32x2xf32>,
    %c0_58 = arith.constant 0 : index
    %c0_59 = arith.constant 0 : index
    %88 = vector.load %arg19[%c0_58, %c0_59] : memref<32x2xf32, #tpu.memory_space<vmem>>, vector<32x2xf32>
    tpu.vector_store %arg19[%c0_58, %c0_59], %51 {strides = array<i32>} : memref<32x2xf32, #tpu.memory_space<vmem>>, vector<32x2xf32>,
    return
  }
  func.func @transform_0(%arg0: i32) -> (i32, i32) {
    %c0_i32 = arith.constant 0 : i32
    %c0_i32_0 = arith.constant 0 : i32
    return %arg0, %c0_i32 : i32, i32
  }
  func.func @transform_1(%arg0: i32) -> (i32, i32) {
    %c0_i32 = arith.constant 0 : i32
    %c0_i32_0 = arith.constant 0 : i32
    return %arg0, %c0_i32 : i32, i32
  }
  func.func @transform_2(%arg0: i32) -> (i32, i32) {
    %c0_i32 = arith.constant 0 : i32
    %c0_i32_0 = arith.constant 0 : i32
    %c0_i32_1 = arith.constant 0 : i32
    return %c0_i32, %c0_i32_0 : i32, i32
  }
  func.func @transform_3(%arg0: i32) -> (i32, i32) {
    %c0_i32 = arith.constant 0 : i32
    %c0_i32_0 = arith.constant 0 : i32
    %c0_i32_1 = arith.constant 0 : i32
    return %c0_i32, %c0_i32_0 : i32, i32
  }
  func.func @transform_4(%arg0: i32) -> (i32, i32) {
    %c0_i32 = arith.constant 0 : i32
    %c0_i32_0 = arith.constant 0 : i32
    %c0_i32_1 = arith.constant 0 : i32
    return %c0_i32, %c0_i32_0 : i32, i32
  }
  func.func @transform_5(%arg0: i32) -> (i32, i32) {
    %c0_i32 = arith.constant 0 : i32
    %c0_i32_0 = arith.constant 0 : i32
    %c0_i32_1 = arith.constant 0 : i32
    return %c0_i32, %c0_i32_0 : i32, i32
  }
  func.func @transform_6(%arg0: i32) -> (i32, i32) {
    %c0_i32 = arith.constant 0 : i32
    %c0_i32_0 = arith.constant 0 : i32
    %c0_i32_1 = arith.constant 0 : i32
    return %c0_i32, %c0_i32_0 : i32, i32
  }
  func.func @transform_7(%arg0: i32) -> (i32, i32) {
    %c0_i32 = arith.constant 0 : i32
    %c0_i32_0 = arith.constant 0 : i32
    %c0_i32_1 = arith.constant 0 : i32
    return %c0_i32, %c0_i32_0 : i32, i32
  }
  func.func @transform_8(%arg0: i32) -> (i32, i32) {
    %c0_i32 = arith.constant 0 : i32
    %c0_i32_0 = arith.constant 0 : i32
    %c0_i32_1 = arith.constant 0 : i32
    return %c0_i32, %c0_i32_0 : i32, i32
  }
  func.func @transform_9(%arg0: i32) -> (i32, i32) {
    %c0_i32 = arith.constant 0 : i32
    %c0_i32_0 = arith.constant 0 : i32
    %c0_i32_1 = arith.constant 0 : i32
    return %c0_i32, %c0_i32_0 : i32, i32
  }
  func.func @transform_10(%arg0: i32) -> (i32, i32) {
    %c0_i32 = arith.constant 0 : i32
    %c0_i32_0 = arith.constant 0 : i32
    %c0_i32_1 = arith.constant 0 : i32
    return %c0_i32, %c0_i32_0 : i32, i32
  }
  func.func @transform_11(%arg0: i32) -> (i32, i32) {
    %c0_i32 = arith.constant 0 : i32
    %c0_i32_0 = arith.constant 0 : i32
    %c0_i32_1 = arith.constant 0 : i32
    return %c0_i32, %c0_i32_0 : i32, i32
  }
  func.func @transform_12(%arg0: i32) -> (i32, i32) {
    %c0_i32 = arith.constant 0 : i32
    %c0_i32_0 = arith.constant 0 : i32
    %c0_i32_1 = arith.constant 0 : i32
    return %c0_i32, %c0_i32_0 : i32, i32
  }
  func.func @transform_13(%arg0: i32) -> (i32, i32) {
    %c0_i32 = arith.constant 0 : i32
    %c0_i32_0 = arith.constant 0 : i32
    %c0_i32_1 = arith.constant 0 : i32
    return %c0_i32, %c0_i32_0 : i32, i32
  }
  func.func @transform_14(%arg0: i32) -> (i32, i32) {
    %c0_i32 = arith.constant 0 : i32
    %c0_i32_0 = arith.constant 0 : i32
    %c0_i32_1 = arith.constant 0 : i32
    return %c0_i32, %c0_i32_0 : i32, i32
  }
  func.func @transform_15(%arg0: i32) -> (i32, i32) {
    %c0_i32 = arith.constant 0 : i32
    %c0_i32_0 = arith.constant 0 : i32
    %c0_i32_1 = arith.constant 0 : i32
    return %c0_i32, %c0_i32_0 : i32, i32
  }
  func.func @transform_16(%arg0: i32) -> (i32, i32) {
    %c0_i32 = arith.constant 0 : i32
    %c0_i32_0 = arith.constant 0 : i32
    return %arg0, %c0_i32 : i32, i32
  }
  func.func @transform_17(%arg0: i32) -> (i32, i32) {
    %c0_i32 = arith.constant 0 : i32
    %c0_i32_0 = arith.constant 0 : i32
    return %arg0, %c0_i32 : i32, i32
  }
  func.func @transform_18(%arg0: i32) -> (i32, i32) {
    %c0_i32 = arith.constant 0 : i32
    %c0_i32_0 = arith.constant 0 : i32
    return %arg0, %c0_i32 : i32, i32
  }
}

</mosaic_0001>

<llo_original>
// kernel: vae_forward.1
$region0: #{vae_forward.1}
  #allocation0 [shape = 'u32[]', space=smem, size = 0x4, offset = 0x4, fixed_abs, tag = 'smem constant byte address 0x4 - core index']
  #allocation1 [shape = 'u32[72,128]{1,0:T(1,128)}', space=vmem, size = 0x9000, scoped, tag = 'internal scratch']
  #allocation2 [shape = 'f32[32,8]{1,0:T(8,128)}', space=vmem, size = 0x4000, scoped, tag = 'scratch operand']
  #allocation3 [shape = 'f32[1,1]{1,0:T(1,128)S(1)}', space=vmem, size = 0x200, scoped, tag = 'scoped memory for vae_forward.1']
  %s0 = inlined_call_operand.vmem [shape: f32[64,4], index: 0, kind: input, shape index: {}]
  %s1 = inlined_call_operand.vmem [shape: f32[64,2], index: 1, kind: input, shape index: {}]
  %s2 = inlined_call_operand.hbm [shape: f32[4,768], index: 2, kind: input, shape index: {}]
  %s3 = inlined_call_operand.hbm [shape: f32[1,768], index: 3, kind: input, shape index: {}]
  %s4 = inlined_call_operand.hbm [shape: bf16[768,768], index: 4, kind: input, shape index: {}]
  %s5 = inlined_call_operand.hbm [shape: f32[1,768], index: 5, kind: input, shape index: {}]
  %s6 = inlined_call_operand.hbm [shape: f32[2,768], index: 6, kind: input, shape index: {}]
  %s7 = inlined_call_operand.hbm [shape: f32[1,2], index: 7, kind: input, shape index: {}]
  %s8 = inlined_call_operand.hbm [shape: f32[2,768], index: 8, kind: input, shape index: {}]
  %s9 = inlined_call_operand.hbm [shape: f32[1,2], index: 9, kind: input, shape index: {}]
  %s10 = inlined_call_operand.hbm [shape: f32[8,768], index: 10, kind: input, shape index: {}]
  %s11 = inlined_call_operand.hbm [shape: f32[1,768], index: 11, kind: input, shape index: {}]
  %s12 = inlined_call_operand.hbm [shape: bf16[768,768], index: 12, kind: input, shape index: {}]
  %s13 = inlined_call_operand.hbm [shape: f32[1,768], index: 13, kind: input, shape index: {}]
  %s14 = inlined_call_operand.hbm [shape: f32[1,768], index: 14, kind: input, shape index: {}]
  %s15 = inlined_call_operand.<no memory space> [shape: f32[1,1], index: 15, kind: input, shape index: {}]
  %s16 = inlined_call_operand.vmem [shape: f32[64,1], index: 16, kind: output, shape index: {0}]
  %s17 = inlined_call_operand.vmem [shape: f32[64,2], index: 17, kind: output, shape index: {1}]
  %s18 = inlined_call_operand.vmem [shape: f32[64,2], index: 18, kind: output, shape index: {2}]
  %19 = xla_tuple %s16, %s17, %s18
  %s20 = sld [smem:[#allocation0]]
  $region165: #{vae_forward.1} parent=0
    _
  %s22 = ssub.s32 1, %s20
  %s23 = scalar_select 0, %s22, %s20
  %v24 = vstv %s15
  %25 = vst [vmem:[#allocation3] sm:$0x1] %v24
  $region1: #{vae_forward.1} parent=0
    #allocation4 [shape = 'u8[12288]{0}', space=vmem, size = 0x3000, scoped, tag = 'input window, operand 2, single buffered']
    #allocation5 [shape = 's32[2]{0}', space=sflag, size = 0x8, scoped, tag = 'scoped memory for vae_forward.1']
    #allocation6 [shape = 'u8[3072]{0}', space=vmem, size = 0xc00, scoped, tag = 'input window, operand 3, single buffered']
    #allocation7 [shape = 's32[1]{0}', space=sflag, size = 0x4, scoped, tag = 'scoped memory for vae_forward.1']
    #allocation8 [shape = 'u8[1179648]{0}', space=vmem, size = 0x120000, scoped, tag = 'input window, operand 4, single buffered']
    #allocation9 [shape = 'u8[3072]{0}', space=vmem, size = 0xc00, scoped, tag = 'input window, operand 5, single buffered']
    #allocation10 [shape = 's32[1]{0}', space=sflag, size = 0x4, scoped, tag = 'scoped memory for vae_forward.1']
    #allocation11 [shape = 'u8[6144]{0}', space=vmem, size = 0x1800, scoped, tag = 'input window, operand 6, single buffered']
    #allocation12 [shape = 'u8[512]{0}', space=vmem, size = 0x400, scoped, tag = 'input window, operand 7, single buffered']
    #allocation13 [shape = 's32[1]{0}', space=sflag, size = 0x4, scoped, tag = 'scoped memory for vae_forward.1']
    #allocation14 [shape = 'u8[6144]{0}', space=vmem, size = 0x1800, scoped, tag = 'input window, operand 8, single buffered']
    #allocation15 [shape = 'u8[512]{0}', space=vmem, size = 0x400, scoped, tag = 'input window, operand 9, single buffered']
    #allocation16 [shape = 's32[1]{0}', space=sflag, size = 0x4, scoped, tag = 'scoped memory for vae_forward.1']
    #allocation17 [shape = 'u8[24576]{0}', space=vmem, size = 0x6000, scoped, tag = 'input window, operand 10, single buffered']
    #allocation18 [shape = 'u8[3072]{0}', space=vmem, size = 0xc00, scoped, tag = 'input window, operand 11, single buffered']
    #allocation19 [shape = 's32[1]{0}', space=sflag, size = 0x4, scoped, tag = 'scoped memory for vae_forward.1']
    #allocation20 [shape = 'u8[1179648]{0}', space=vmem, size = 0x120000, scoped, tag = 'input window, operand 12, single buffered']
    #allocation21 [shape = 'u8[3072]{0}', space=vmem, size = 0xc00, scoped, tag = 'input window, operand 13, single buffered']
    #allocation22 [shape = 's32[1]{0}', space=sflag, size = 0x4, scoped, tag = 'scoped memory for vae_forward.1']
    #allocation23 [shape = 'u8[3072]{0}', space=vmem, size = 0xc00, scoped, tag = 'input window, operand 14, single buffered']
    %26 = vsyncpa [#allocation5], 0
    %27 = vsyncpa [#allocation7], 0
    %28 = vsyncpa [#allocation10], 0
    %29 = vsyncpa [#allocation13], 0
    %30 = vsyncpa [#allocation16], 0
    %31 = vsyncpa [#allocation19], 0
    %32 = vsyncpa [#allocation22], 0
    loop: start=0, step=1, limit=4
    $region2: #{vae_forward.1} parent=1 // loop_pre_header
      _
    $region3: #{vae_forward.1} parent=1 // loop_header
      %s34 = sphi 0, %s38
      %p35 = scmp.ge.s32.totalorder %s34, 4
      %s44 = sphi 0, %s46
      %s47 = sphi 0, %s44
      %s48 = sphi 0, %s47
      %s64 = sphi 0, %s48
      %s70 = sphi 0, %s72
      %s73 = sphi 0, %s70
      %s74 = sphi 0, %s73
      %s90 = sphi 0, %s74
      %s94 = sphi 0, %s94
      %s96 = sphi 0, %s94
      %s97 = sphi 0, %s96
      %s111 = sphi 0, %s97
      %s115 = sphi 0, %s115
      %s117 = sphi 0, %s115
      %s118 = sphi 0, %s117
      %s132 = sphi 0, %s118
      %s136 = sphi 0, %s136
      %s138 = sphi 0, %s136
      %s139 = sphi 0, %s138
      %s153 = sphi 0, %s139
      %s157 = sphi 0, %s157
      %s159 = sphi 0, %s157
      %s160 = sphi 0, %s159
      %s174 = sphi 0, %s160
      %s178 = sphi 0, %s178
      %s180 = sphi 0, %s178
      %s181 = sphi 0, %s180
      %s195 = sphi 0, %s181
      %s199 = sphi 0, %s199
      %s201 = sphi 0, %s199
      %s202 = sphi 0, %s201
      %s216 = sphi 0, %s202
      %s220 = sphi 0, %s220
      %s222 = sphi 0, %s220
      %s223 = sphi 0, %s222
      %s237 = sphi 0, %s223
      %s241 = sphi 0, %s241
      %s243 = sphi 0, %s241
      %s244 = sphi 0, %s243
      %s258 = sphi 0, %s244
      %s262 = sphi 0, %s262
      %s264 = sphi 0, %s262
      %s265 = sphi 0, %s264
      %s279 = sphi 0, %s265
      %s283 = sphi 0, %s283
      %s285 = sphi 0, %s283
      %s286 = sphi 0, %s285
      %s300 = sphi 0, %s286
      %s304 = sphi 0, %s304
      %s306 = sphi 0, %s304
      %s307 = sphi 0, %s306
      %s321 = sphi 0, %s307
      %s325 = sphi 0, %s325
      %s327 = sphi 0, %s325
      %s328 = sphi 0, %s327
      %s342 = sphi 0, %s328
      %s346 = sphi 0, %s346
      %s348 = sphi 0, %s346
      %s349 = sphi 0, %s348
      %s363 = sphi 0, %s349
      %s367 = sphi 0, %s367
      %s369 = sphi 0, %s367
      %s370 = sphi 0, %s369
      %s384 = sphi 0, %s370
      %s390 = sphi 0, %s392
      %s393 = sphi 0, %s390
      %s394 = sphi 0, %s393
      %s410 = sphi 0, %s394
      %s416 = sphi 0, %s418
      %s419 = sphi 0, %s416
      %s420 = sphi 0, %s419
      %s436 = sphi 0, %s420
      %s442 = sphi 0, %s444
      %s445 = sphi 0, %s442
      %s446 = sphi 0, %s445
      %s462 = sphi 0, %s446
    $region4: #{vae_forward.1} parent=1 // loop_header_branch
      %37 = sbr.rel (%p35) target = $region8
    $region5: #{vae_forward.1} parent=1 // loop_body
      %s39 = ssub.s32 %s34, 1
      %s40 = ssub.s32 %s34, 2
      %s41 = sadd.s32 %s34, 1
      %s42 = ssub.s32 %s34, %s41
      %p43 = scmp.eq.s32.totalorder %s42, 0
      %s45 = sadd.s32 %s44, 1
      %s46 = scalar_select %p43, %s44, %s45
      %p49 = pneg %p43
      %p50 = scmp.eq.s32.totalorder %s34, 1
      %p51 = por %p49, %p50
      %p52 = scmp.ne.s32.totalorder %s44, %s47
      %p53 = scmp.eq.s32.totalorder %s34, 0
      %p54 = por %p52, %p53
      %p55 = scmp.ne.s32.totalorder %s44, %s47
      %p56 = scmp.eq.s32.totalorder %s39, 1
      %p57 = por %p55, %p56
      %p58 = scmp.ne.s32.totalorder %s47, %s48
      %p59 = scmp.eq.s32.totalorder %s39, 0
      %p60 = por %p58, %p59
      %p61 = scmp.ne.s32.totalorder %s47, %s48
      %p62 = scmp.eq.s32.totalorder %s40, 1
      %p63 = por %p61, %p62
      %p65 = scmp.ne.s32.totalorder %s48, %s64
      %p66 = scmp.eq.s32.totalorder %s40, 0
      %p67 = por %p65, %p66
      %s68 = ssub.s32 %s34, %s41
      %p69 = scmp.eq.s32.totalorder %s68, 0
      %s71 = sadd.s32 %s70, 1
      %s72 = scalar_select %p69, %s70, %s71
      %p75 = pneg %p69
      %p76 = scmp.eq.s32.totalorder %s34, 1
      %p77 = por %p75, %p76
      %p78 = scmp.ne.s32.totalorder %s70, %s73
      %p79 = scmp.eq.s32.totalorder %s34, 0
      %p80 = por %p78, %p79
      %p81 = scmp.ne.s32.totalorder %s70, %s73
      %p82 = scmp.eq.s32.totalorder %s39, 1
      %p83 = por %p81, %p82
      %p84 = scmp.ne.s32.totalorder %s73, %s74
      %p85 = scmp.eq.s32.totalorder %s39, 0
      %p86 = por %p84, %p85
      %p87 = scmp.ne.s32.totalorder %s73, %s74
      %p88 = scmp.eq.s32.totalorder %s40, 1
      %p89 = por %p87, %p88
      %p91 = scmp.ne.s32.totalorder %s74, %s90
      %p92 = scmp.eq.s32.totalorder %s40, 0
      %p93 = por %p91, %p92
      %s95 = sadd.s32 %s94, 1
      %p98 = scmp.eq.s32.totalorder %s34, 1
      %p99 = scmp.ne.s32.totalorder %s94, %s96
      %p100 = scmp.eq.s32.totalorder %s34, 0
      %p101 = por %p99, %p100
      %p102 = scmp.ne.s32.totalorder %s94, %s96
      %p103 = scmp.eq.s32.totalorder %s39, 1
      %p104 = por %p102, %p103
      %p105 = scmp.ne.s32.totalorder %s96, %s97
      %p106 = scmp.eq.s32.totalorder %s39, 0
      %p107 = por %p105, %p106
      %p108 = scmp.ne.s32.totalorder %s96, %s97
      %p109 = scmp.eq.s32.totalorder %s40, 1
      %p110 = por %p108, %p109
      %p112 = scmp.ne.s32.totalorder %s97, %s111
      %p113 = scmp.eq.s32.totalorder %s40, 0
      %p114 = por %p112, %p113
      %s116 = sadd.s32 %s115, 1
      %p119 = scmp.eq.s32.totalorder %s34, 1
      %p120 = scmp.ne.s32.totalorder %s115, %s117
      %p121 = scmp.eq.s32.totalorder %s34, 0
      %p122 = por %p120, %p121
      %p123 = scmp.ne.s32.totalorder %s115, %s117
      %p124 = scmp.eq.s32.totalorder %s39, 1
      %p125 = por %p123, %p124
      %p126 = scmp.ne.s32.totalorder %s117, %s118
      %p127 = scmp.eq.s32.totalorder %s39, 0
      %p128 = por %p126, %p127
      %p129 = scmp.ne.s32.totalorder %s117, %s118
      %p130 = scmp.eq.s32.totalorder %s40, 1
      %p131 = por %p129, %p130
      %p133 = scmp.ne.s32.totalorder %s118, %s132
      %p134 = scmp.eq.s32.totalorder %s40, 0
      %p135 = por %p133, %p134
      %s137 = sadd.s32 %s136, 1
      %p140 = scmp.eq.s32.totalorder %s34, 1
      %p141 = scmp.ne.s32.totalorder %s136, %s138
      %p142 = scmp.eq.s32.totalorder %s34, 0
      %p143 = por %p141, %p142
      %p144 = scmp.ne.s32.totalorder %s136, %s138
      %p145 = scmp.eq.s32.totalorder %s39, 1
      %p146 = por %p144, %p145
      %p147 = scmp.ne.s32.totalorder %s138, %s139
      %p148 = scmp.eq.s32.totalorder %s39, 0
      %p149 = por %p147, %p148
      %p150 = scmp.ne.s32.totalorder %s138, %s139
      %p151 = scmp.eq.s32.totalorder %s40, 1
      %p152 = por %p150, %p151
      %p154 = scmp.ne.s32.totalorder %s139, %s153
      %p155 = scmp.eq.s32.totalorder %s40, 0
      %p156 = por %p154, %p155
      %s158 = sadd.s32 %s157, 1
      %p161 = scmp.eq.s32.totalorder %s34, 1
      %p162 = scmp.ne.s32.totalorder %s157, %s159
      %p163 = scmp.eq.s32.totalorder %s34, 0
      %p164 = por %p162, %p163
      %p165 = scmp.ne.s32.totalorder %s157, %s159
      %p166 = scmp.eq.s32.totalorder %s39, 1
      %p167 = por %p165, %p166
      %p168 = scmp.ne.s32.totalorder %s159, %s160
      %p169 = scmp.eq.s32.totalorder %s39, 0
      %p170 = por %p168, %p169
      %p171 = scmp.ne.s32.totalorder %s159, %s160
      %p172 = scmp.eq.s32.totalorder %s40, 1
      %p173 = por %p171, %p172
      %p175 = scmp.ne.s32.totalorder %s160, %s174
      %p176 = scmp.eq.s32.totalorder %s40, 0
      %p177 = por %p175, %p176
      %s179 = sadd.s32 %s178, 1
      %p182 = scmp.eq.s32.totalorder %s34, 1
      %p183 = scmp.ne.s32.totalorder %s178, %s180
      %p184 = scmp.eq.s32.totalorder %s34, 0
      %p185 = por %p183, %p184
      %p186 = scmp.ne.s32.totalorder %s178, %s180
      %p187 = scmp.eq.s32.totalorder %s39, 1
      %p188 = por %p186, %p187
      %p189 = scmp.ne.s32.totalorder %s180, %s181
      %p190 = scmp.eq.s32.totalorder %s39, 0
      %p191 = por %p189, %p190
      %p192 = scmp.ne.s32.totalorder %s180, %s181
      %p193 = scmp.eq.s32.totalorder %s40, 1
      %p194 = por %p192, %p193
      %p196 = scmp.ne.s32.totalorder %s181, %s195
      %p197 = scmp.eq.s32.totalorder %s40, 0
      %p198 = por %p196, %p197
      %s200 = sadd.s32 %s199, 1
      %p203 = scmp.eq.s32.totalorder %s34, 1
      %p204 = scmp.ne.s32.totalorder %s199, %s201
      %p205 = scmp.eq.s32.totalorder %s34, 0
      %p206 = por %p204, %p205
      %p207 = scmp.ne.s32.totalorder %s199, %s201
      %p208 = scmp.eq.s32.totalorder %s39, 1
      %p209 = por %p207, %p208
      %p210 = scmp.ne.s32.totalorder %s201, %s202
      %p211 = scmp.eq.s32.totalorder %s39, 0
      %p212 = por %p210, %p211
      %p213 = scmp.ne.s32.totalorder %s201, %s202
      %p214 = scmp.eq.s32.totalorder %s40, 1
      %p215 = por %p213, %p214
      %p217 = scmp.ne.s32.totalorder %s202, %s216
      %p218 = scmp.eq.s32.totalorder %s40, 0
      %p219 = por %p217, %p218
      %s221 = sadd.s32 %s220, 1
      %p224 = scmp.eq.s32.totalorder %s34, 1
      %p225 = scmp.ne.s32.totalorder %s220, %s222
      %p226 = scmp.eq.s32.totalorder %s34, 0
      %p227 = por %p225, %p226
      %p228 = scmp.ne.s32.totalorder %s220, %s222
      %p229 = scmp.eq.s32.totalorder %s39, 1
      %p230 = por %p228, %p229
      %p231 = scmp.ne.s32.totalorder %s222, %s223
      %p232 = scmp.eq.s32.totalorder %s39, 0
      %p233 = por %p231, %p232
      %p234 = scmp.ne.s32.totalorder %s222, %s223
      %p235 = scmp.eq.s32.totalorder %s40, 1
      %p236 = por %p234, %p235
      %p238 = scmp.ne.s32.totalorder %s223, %s237
      %p239 = scmp.eq.s32.totalorder %s40, 0
      %p240 = por %p238, %p239
      %s242 = sadd.s32 %s241, 1
      %p245 = scmp.eq.s32.totalorder %s34, 1
      %p246 = scmp.ne.s32.totalorder %s241, %s243
      %p247 = scmp.eq.s32.totalorder %s34, 0
      %p248 = por %p246, %p247
      %p249 = scmp.ne.s32.totalorder %s241, %s243
      %p250 = scmp.eq.s32.totalorder %s39, 1
      %p251 = por %p249, %p250
      %p252 = scmp.ne.s32.totalorder %s243, %s244
      %p253 = scmp.eq.s32.totalorder %s39, 0
      %p254 = por %p252, %p253
      %p255 = scmp.ne.s32.totalorder %s243, %s244
      %p256 = scmp.eq.s32.totalorder %s40, 1
      %p257 = por %p255, %p256
      %p259 = scmp.ne.s32.totalorder %s244, %s258
      %p260 = scmp.eq.s32.totalorder %s40, 0
      %p261 = por %p259, %p260
      %s263 = sadd.s32 %s262, 1
      %p266 = scmp.eq.s32.totalorder %s34, 1
      %p267 = scmp.ne.s32.totalorder %s262, %s264
      %p268 = scmp.eq.s32.totalorder %s34, 0
      %p269 = por %p267, %p268
      %p270 = scmp.ne.s32.totalorder %s262, %s264
      %p271 = scmp.eq.s32.totalorder %s39, 1
      %p272 = por %p270, %p271
      %p273 = scmp.ne.s32.totalorder %s264, %s265
      %p274 = scmp.eq.s32.totalorder %s39, 0
      %p275 = por %p273, %p274
      %p276 = scmp.ne.s32.totalorder %s264, %s265
      %p277 = scmp.eq.s32.totalorder %s40, 1
      %p278 = por %p276, %p277
      %p280 = scmp.ne.s32.totalorder %s265, %s279
      %p281 = scmp.eq.s32.totalorder %s40, 0
      %p282 = por %p280, %p281
      %s284 = sadd.s32 %s283, 1
      %p287 = scmp.eq.s32.totalorder %s34, 1
      %p288 = scmp.ne.s32.totalorder %s283, %s285
      %p289 = scmp.eq.s32.totalorder %s34, 0
      %p290 = por %p288, %p289
      %p291 = scmp.ne.s32.totalorder %s283, %s285
      %p292 = scmp.eq.s32.totalorder %s39, 1
      %p293 = por %p291, %p292
      %p294 = scmp.ne.s32.totalorder %s285, %s286
      %p295 = scmp.eq.s32.totalorder %s39, 0
      %p296 = por %p294, %p295
      %p297 = scmp.ne.s32.totalorder %s285, %s286
      %p298 = scmp.eq.s32.totalorder %s40, 1
      %p299 = por %p297, %p298
      %p301 = scmp.ne.s32.totalorder %s286, %s300
      %p302 = scmp.eq.s32.totalorder %s40, 0
      %p303 = por %p301, %p302
      %s305 = sadd.s32 %s304, 1
      %p308 = scmp.eq.s32.totalorder %s34, 1
      %p309 = scmp.ne.s32.totalorder %s304, %s306
      %p310 = scmp.eq.s32.totalorder %s34, 0
      %p311 = por %p309, %p310
      %p312 = scmp.ne.s32.totalorder %s304, %s306
      %p313 = scmp.eq.s32.totalorder %s39, 1
      %p314 = por %p312, %p313
      %p315 = scmp.ne.s32.totalorder %s306, %s307
      %p316 = scmp.eq.s32.totalorder %s39, 0
      %p317 = por %p315, %p316
      %p318 = scmp.ne.s32.totalorder %s306, %s307
      %p319 = scmp.eq.s32.totalorder %s40, 1
      %p320 = por %p318, %p319
      %p322 = scmp.ne.s32.totalorder %s307, %s321
      %p323 = scmp.eq.s32.totalorder %s40, 0
      %p324 = por %p322, %p323
      %s326 = sadd.s32 %s325, 1
      %p329 = scmp.eq.s32.totalorder %s34, 1
      %p330 = scmp.ne.s32.totalorder %s325, %s327
      %p331 = scmp.eq.s32.totalorder %s34, 0
      %p332 = por %p330, %p331
      %p333 = scmp.ne.s32.totalorder %s325, %s327
      %p334 = scmp.eq.s32.totalorder %s39, 1
      %p335 = por %p333, %p334
      %p336 = scmp.ne.s32.totalorder %s327, %s328
      %p337 = scmp.eq.s32.totalorder %s39, 0
      %p338 = por %p336, %p337
      %p339 = scmp.ne.s32.totalorder %s327, %s328
      %p340 = scmp.eq.s32.totalorder %s40, 1
      %p341 = por %p339, %p340
      %p343 = scmp.ne.s32.totalorder %s328, %s342
      %p344 = scmp.eq.s32.totalorder %s40, 0
      %p345 = por %p343, %p344
      %s347 = sadd.s32 %s346, 1
      %p350 = scmp.eq.s32.totalorder %s34, 1
      %p351 = scmp.ne.s32.totalorder %s346, %s348
      %p352 = scmp.eq.s32.totalorder %s34, 0
      %p353 = por %p351, %p352
      %p354 = scmp.ne.s32.totalorder %s346, %s348
      %p355 = scmp.eq.s32.totalorder %s39, 1
      %p356 = por %p354, %p355
      %p357 = scmp.ne.s32.totalorder %s348, %s349
      %p358 = scmp.eq.s32.totalorder %s39, 0
      %p359 = por %p357, %p358
      %p360 = scmp.ne.s32.totalorder %s348, %s349
      %p361 = scmp.eq.s32.totalorder %s40, 1
      %p362 = por %p360, %p361
      %p364 = scmp.ne.s32.totalorder %s349, %s363
      %p365 = scmp.eq.s32.totalorder %s40, 0
      %p366 = por %p364, %p365
      %s368 = sadd.s32 %s367, 1
      %p371 = scmp.eq.s32.totalorder %s34, 1
      %p372 = scmp.ne.s32.totalorder %s367, %s369
      %p373 = scmp.eq.s32.totalorder %s34, 0
      %p374 = por %p372, %p373
      %p375 = scmp.ne.s32.totalorder %s367, %s369
      %p376 = scmp.eq.s32.totalorder %s39, 1
      %p377 = por %p375, %p376
      %p378 = scmp.ne.s32.totalorder %s369, %s370
      %p379 = scmp.eq.s32.totalorder %s39, 0
      %p380 = por %p378, %p379
      %p381 = scmp.ne.s32.totalorder %s369, %s370
      %p382 = scmp.eq.s32.totalorder %s40, 1
      %p383 = por %p381, %p382
      %p385 = scmp.ne.s32.totalorder %s370, %s384
      %p386 = scmp.eq.s32.totalorder %s40, 0
      %p387 = por %p385, %p386
      %s388 = ssub.s32 %s34, %s41
      %p389 = scmp.eq.s32.totalorder %s388, 0
      %s391 = sadd.s32 %s390, 1
      %s392 = scalar_select %p389, %s390, %s391
      %p395 = pneg %p389
      %p396 = scmp.eq.s32.totalorder %s34, 1
      %p397 = por %p395, %p396
      %p398 = scmp.ne.s32.totalorder %s390, %s393
      %p399 = scmp.eq.s32.totalorder %s34, 0
      %p400 = por %p398, %p399
      %p401 = scmp.ne.s32.totalorder %s390, %s393
      %p402 = scmp.eq.s32.totalorder %s39, 1
      %p403 = por %p401, %p402
      %p404 = scmp.ne.s32.totalorder %s393, %s394
      %p405 = scmp.eq.s32.totalorder %s39, 0
      %p406 = por %p404, %p405
      %p407 = scmp.ne.s32.totalorder %s393, %s394
      %p408 = scmp.eq.s32.totalorder %s40, 1
      %p409 = por %p407, %p408
      %p411 = scmp.ne.s32.totalorder %s394, %s410
      %p412 = scmp.eq.s32.totalorder %s40, 0
      %p413 = por %p411, %p412
      %s414 = ssub.s32 %s34, %s41
      %p415 = scmp.eq.s32.totalorder %s414, 0
      %s417 = sadd.s32 %s416, 1
      %s418 = scalar_select %p415, %s416, %s417
      %p421 = pneg %p415
      %p422 = scmp.eq.s32.totalorder %s34, 1
      %p423 = por %p421, %p422
      %p424 = scmp.ne.s32.totalorder %s416, %s419
      %p425 = scmp.eq.s32.totalorder %s34, 0
      %p426 = por %p424, %p425
      %p427 = scmp.ne.s32.totalorder %s416, %s419
      %p428 = scmp.eq.s32.totalorder %s39, 1
      %p429 = por %p427, %p428
      %p430 = scmp.ne.s32.totalorder %s419, %s420
      %p431 = scmp.eq.s32.totalorder %s39, 0
      %p432 = por %p430, %p431
      %p433 = scmp.ne.s32.totalorder %s419, %s420
      %p434 = scmp.eq.s32.totalorder %s40, 1
      %p435 = por %p433, %p434
      %p437 = scmp.ne.s32.totalorder %s420, %s436
      %p438 = scmp.eq.s32.totalorder %s40, 0
      %p439 = por %p437, %p438
      %s440 = ssub.s32 %s34, %s41
      %p441 = scmp.eq.s32.totalorder %s440, 0
      %s443 = sadd.s32 %s442, 1
      %s444 = scalar_select %p441, %s442, %s443
      %p447 = pneg %p441
      %p448 = scmp.eq.s32.totalorder %s34, 1
      %p449 = por %p447, %p448
      %p450 = scmp.ne.s32.totalorder %s442, %s445
      %p451 = scmp.eq.s32.totalorder %s34, 0
      %p452 = por %p450, %p451
      %p453 = scmp.ne.s32.totalorder %s442, %s445
      %p454 = scmp.eq.s32.totalorder %s39, 1
      %p455 = por %p453, %p454
      %p456 = scmp.ne.s32.totalorder %s445, %s446
      %p457 = scmp.eq.s32.totalorder %s39, 0
      %p458 = por %p456, %p457
      %p459 = scmp.ne.s32.totalorder %s445, %s446
      %p460 = scmp.eq.s32.totalorder %s40, 1
      %p461 = por %p459, %p460
      %p463 = scmp.ne.s32.totalorder %s446, %s462
      %p464 = scmp.eq.s32.totalorder %s40, 0
      %p465 = por %p463, %p464
      %p466 = scmp.le.s32.totalorder 1, %s34
      %p467 = scmp.lt.s32.totalorder %s34, 3
      %p468 = pnand %p466, %p467
      %p469 = pneg %p468
      // Predicated region
      $region9: #{vae_forward.1} parent=5 // pred_check
        _
      $region10: #{vae_forward.1} parent=5 // pred_check_branch
        %471 = sbr.rel (%p468) target = $region12
      $region11: #{vae_forward.1} parent=5 // pred_region
        %s472 = ssub.s32 %s34, 1
        // Predicated region
        $region13: #{vae_forward.1} parent=11 // pred_check
          %p473 = pneg %p107
        $region14: #{vae_forward.1} parent=11 // pred_check_branch
          %475 = sbr.rel (%p473) target = $region16
        $region15: #{vae_forward.1} parent=11 // pred_region
          %477 = vsyncadd [#allocation5], 0
          %s479 = sshll.u32 %s2, 4
          %s480 = int_to_ptr.hbm [resolvable:$true] %s479
          %s481 = sshll.u32 [#allocation4], 4
          %s482 = int_to_ptr.vmem [resolvable:$true] %s481
          %484 = dma.hbm_to_vmem [thread:$0]  %s480, 384, %s482, [#allocation5]
        $region16: #{vae_forward.1} parent=11 // pred_fallthru
          _
        // Predicated region
        $region17: #{vae_forward.1} parent=11 // pred_check
          %p485 = pneg %p128
        $region18: #{vae_forward.1} parent=11 // pred_check_branch
          %487 = sbr.rel (%p485) target = $region20
        $region19: #{vae_forward.1} parent=11 // pred_region
          %489 = vsyncadd [#allocation7], 0
          %s491 = sshll.u32 %s3, 4
          %s492 = int_to_ptr.hbm [resolvable:$true] %s491
          %s493 = sshll.u32 [#allocation6], 4
          %s494 = int_to_ptr.vmem [resolvable:$true] %s493
          %496 = dma.hbm_to_vmem [thread:$0]  %s492, 96, %s494, [#allocation7]
        $region20: #{vae_forward.1} parent=11 // pred_fallthru
          _
        // Predicated region
        $region21: #{vae_forward.1} parent=11 // pred_check
          %p497 = pneg %p149
        $region22: #{vae_forward.1} parent=11 // pred_check_branch
          %499 = sbr.rel (%p497) target = $region24
        $region23: #{vae_forward.1} parent=11 // pred_region
          %501 = vsyncadd [#allocation7], 0
          %s502 = sshll.u32 %s4, 4
          %s503 = int_to_ptr.hbm [resolvable:$true] %s502
          %s504 = sshll.u32 [#allocation8], 4
          %s505 = int_to_ptr.vmem [resolvable:$true] %s504
          %510 = dma.hbm_to_vmem [thread:$0]  %s503, 36864, %s505, [#allocation7], 384, 384, 24
        $region24: #{vae_forward.1} parent=11 // pred_fallthru
          _
        // Predicated region
        $region25: #{vae_forward.1} parent=11 // pred_check
          %p511 = pneg %p170
        $region26: #{vae_forward.1} parent=11 // pred_check_branch
          %513 = sbr.rel (%p511) target = $region28
        $region27: #{vae_forward.1} parent=11 // pred_region
          %515 = vsyncadd [#allocation10], 0
          %s517 = sshll.u32 %s5, 4
          %s518 = int_to_ptr.hbm [resolvable:$true] %s517
          %s519 = sshll.u32 [#allocation9], 4
          %s520 = int_to_ptr.vmem [resolvable:$true] %s519
          %522 = dma.hbm_to_vmem [thread:$0]  %s518, 96, %s520, [#allocation10]
        $region28: #{vae_forward.1} parent=11 // pred_fallthru
          _
        // Predicated region
        $region29: #{vae_forward.1} parent=11 // pred_check
          %p523 = pneg %p191
        $region30: #{vae_forward.1} parent=11 // pred_check_branch
          %525 = sbr.rel (%p523) target = $region32
        $region31: #{vae_forward.1} parent=11 // pred_region
          %527 = vsyncadd [#allocation10], 0
          %s529 = sshll.u32 %s6, 4
          %s530 = int_to_ptr.hbm [resolvable:$true] %s529
          %s531 = sshll.u32 [#allocation11], 4
          %s532 = int_to_ptr.vmem [resolvable:$true] %s531
          %534 = dma.hbm_to_vmem [thread:$0]  %s530, 192, %s532, [#allocation10]
        $region32: #{vae_forward.1} parent=11 // pred_fallthru
          _
        // Predicated region
        $region33: #{vae_forward.1} parent=11 // pred_check
          %p535 = pneg %p212
        $region34: #{vae_forward.1} parent=11 // pred_check_branch
          %537 = sbr.rel (%p535) target = $region36
        $region35: #{vae_forward.1} parent=11 // pred_region
          %539 = vsyncadd [#allocation13], 0
          %s541 = sshll.u32 %s7, 4
          %s542 = int_to_ptr.hbm [resolvable:$true] %s541
          %s543 = sshll.u32 [#allocation12], 4
          %s544 = int_to_ptr.vmem [resolvable:$true] %s543
          %546 = dma.hbm_to_vmem [thread:$0]  %s542, 16, %s544, [#allocation13]
        $region36: #{vae_forward.1} parent=11 // pred_fallthru
          _
        // Predicated region
        $region37: #{vae_forward.1} parent=11 // pred_check
          %p547 = pneg %p233
        $region38: #{vae_forward.1} parent=11 // pred_check_branch
          %549 = sbr.rel (%p547) target = $region40
        $region39: #{vae_forward.1} parent=11 // pred_region
          %551 = vsyncadd [#allocation13], 0
          %s553 = sshll.u32 %s8, 4
          %s554 = int_to_ptr.hbm [resolvable:$true] %s553
          %s555 = sshll.u32 [#allocation14], 4
          %s556 = int_to_ptr.vmem [resolvable:$true] %s555
          %558 = dma.hbm_to_vmem [thread:$0]  %s554, 192, %s556, [#allocation13]
        $region40: #{vae_forward.1} parent=11 // pred_fallthru
          _
        // Predicated region
        $region41: #{vae_forward.1} parent=11 // pred_check
          %p559 = pneg %p254
        $region42: #{vae_forward.1} parent=11 // pred_check_branch
          %561 = sbr.rel (%p559) target = $region44
        $region43: #{vae_forward.1} parent=11 // pred_region
          %563 = vsyncadd [#allocation16], 0
          %s565 = sshll.u32 %s9, 4
          %s566 = int_to_ptr.hbm [resolvable:$true] %s565
          %s567 = sshll.u32 [#allocation15], 4
          %s568 = int_to_ptr.vmem [resolvable:$true] %s567
          %570 = dma.hbm_to_vmem [thread:$0]  %s566, 16, %s568, [#allocation16]
        $region44: #{vae_forward.1} parent=11 // pred_fallthru
          _
        // Predicated region
        $region45: #{vae_forward.1} parent=11 // pred_check
          %p571 = pneg %p275
        $region46: #{vae_forward.1} parent=11 // pred_check_branch
          %573 = sbr.rel (%p571) target = $region48
        $region47: #{vae_forward.1} parent=11 // pred_region
          %575 = vsyncadd [#allocation16], 0
          %s577 = sshll.u32 %s10, 4
          %s578 = int_to_ptr.hbm [resolvable:$true] %s577
          %s579 = sshll.u32 [#allocation17], 4
          %s580 = int_to_ptr.vmem [resolvable:$true] %s579
          %582 = dma.hbm_to_vmem [thread:$0]  %s578, 768, %s580, [#allocation16]
        $region48: #{vae_forward.1} parent=11 // pred_fallthru
          _
        // Predicated region
        $region49: #{vae_forward.1} parent=11 // pred_check
          %p583 = pneg %p296
        $region50: #{vae_forward.1} parent=11 // pred_check_branch
          %585 = sbr.rel (%p583) target = $region52
        $region51: #{vae_forward.1} parent=11 // pred_region
          %587 = vsyncadd [#allocation19], 0
          %s589 = sshll.u32 %s11, 4
          %s590 = int_to_ptr.hbm [resolvable:$true] %s589
          %s591 = sshll.u32 [#allocation18], 4
          %s592 = int_to_ptr.vmem [resolvable:$true] %s591
          %594 = dma.hbm_to_vmem [thread:$0]  %s590, 96, %s592, [#allocation19]
        $region52: #{vae_forward.1} parent=11 // pred_fallthru
          _
        // Predicated region
        $region53: #{vae_forward.1} parent=11 // pred_check
          %p595 = pneg %p317
        $region54: #{vae_forward.1} parent=11 // pred_check_branch
          %597 = sbr.rel (%p595) target = $region56
        $region55: #{vae_forward.1} parent=11 // pred_region
          %599 = vsyncadd [#allocation19], 0
          %s600 = sshll.u32 %s12, 4
          %s601 = int_to_ptr.hbm [resolvable:$true] %s600
          %s602 = sshll.u32 [#allocation20], 4
          %s603 = int_to_ptr.vmem [resolvable:$true] %s602
          %608 = dma.hbm_to_vmem [thread:$0]  %s601, 36864, %s603, [#allocation19], 384, 384, 24
        $region56: #{vae_forward.1} parent=11 // pred_fallthru
          _
        // Predicated region
        $region57: #{vae_forward.1} parent=11 // pred_check
          %p609 = pneg %p338
        $region58: #{vae_forward.1} parent=11 // pred_check_branch
          %611 = sbr.rel (%p609) target = $region60
        $region59: #{vae_forward.1} parent=11 // pred_region
          %613 = vsyncadd [#allocation22], 0
          %s615 = sshll.u32 %s13, 4
          %s616 = int_to_ptr.hbm [resolvable:$true] %s615
          %s617 = sshll.u32 [#allocation21], 4
          %s618 = int_to_ptr.vmem [resolvable:$true] %s617
          %620 = dma.hbm_to_vmem [thread:$0]  %s616, 96, %s618, [#allocation22]
        $region60: #{vae_forward.1} parent=11 // pred_fallthru
          _
        // Predicated region
        $region61: #{vae_forward.1} parent=11 // pred_check
          %p621 = pneg %p359
        $region62: #{vae_forward.1} parent=11 // pred_check_branch
          %623 = sbr.rel (%p621) target = $region64
        $region63: #{vae_forward.1} parent=11 // pred_region
          %625 = vsyncadd [#allocation22], 0
          %s627 = sshll.u32 %s14, 4
          %s628 = int_to_ptr.hbm [resolvable:$true] %s627
          %s629 = sshll.u32 [#allocation23], 4
          %s630 = int_to_ptr.vmem [resolvable:$true] %s629
          %632 = dma.hbm_to_vmem [thread:$0]  %s628, 96, %s630, [#allocation22]
        $region64: #{vae_forward.1} parent=11 // pred_fallthru
          _
        // Predicated region
        $region65: #{vae_forward.1} parent=11 // pred_check
          %p633 = pneg %p380
        $region66: #{vae_forward.1} parent=11 // pred_check_branch
          %635 = sbr.rel (%p633) target = $region68
        $region67: #{vae_forward.1} parent=11 // pred_region
          _
        $region68: #{vae_forward.1} parent=11 // pred_fallthru
          _
      $region12: #{vae_forward.1} parent=5 // pred_fallthru
        _
      %p636 = scmp.lt.s32.totalorder %s34, 2
      // Predicated region
      $region69: #{vae_forward.1} parent=5 // pred_check
        %p637 = pneg %p636
      $region70: #{vae_forward.1} parent=5 // pred_check_branch
        %639 = sbr.rel (%p637) target = $region72
      $region71: #{vae_forward.1} parent=5 // pred_region
        // Predicated region
        $region73: #{vae_forward.1} parent=71 // pred_check
          %p640 = pneg %p54
        $region74: #{vae_forward.1} parent=71 // pred_check_branch
          %642 = sbr.rel (%p640) target = $region76
        $region75: #{vae_forward.1} parent=71 // pred_region
          %s643 = smul.u32 4, %s34
          %p644 = scmp.lt.s32.totalorder %s643, 7
          %s645 = scalar_select %p644, %s643, 7
          %s646 = smul.addr %s645, 8
          %s647 = scalar_lea.vmem %s0, %s646
          %s648 = smul.u32 4, %s34
        $region76: #{vae_forward.1} parent=71 // pred_fallthru
          _
        // Predicated region
        $region77: #{vae_forward.1} parent=71 // pred_check
          %p649 = pneg %p80
        $region78: #{vae_forward.1} parent=71 // pred_check_branch
          %651 = sbr.rel (%p649) target = $region80
        $region79: #{vae_forward.1} parent=71 // pred_region
          %s652 = smul.u32 4, %s34
          %p653 = scmp.lt.s32.totalorder %s652, 7
          %s654 = scalar_select %p653, %s652, 7
          %s655 = smul.addr %s654, 8
          %s656 = scalar_lea.vmem %s1, %s655
          %s657 = smul.u32 4, %s34
        $region80: #{vae_forward.1} parent=71 // pred_fallthru
          _
      $region72: #{vae_forward.1} parent=5 // pred_fallthru
        _
      %p658 = scmp.le.s32.totalorder 1, %s34
      %p659 = scmp.lt.s32.totalorder %s34, 3
      %p660 = pnand %p658, %p659
      %p661 = pneg %p660
      // Predicated region
      $region81: #{vae_forward.1} parent=5 // pred_check
        _
      $region82: #{vae_forward.1} parent=5 // pred_check_branch
        %663 = sbr.rel (%p660) target = $region84
      $region83: #{vae_forward.1} parent=5 // pred_region
        %s664 = ssub.s32 %s34, 1
        // Predicated region
        $region85: #{vae_forward.1} parent=83 // pred_check
          %p665 = pneg %p107
        $region86: #{vae_forward.1} parent=83 // pred_check_branch
          %667 = sbr.rel (%p665) target = $region88
        $region87: #{vae_forward.1} parent=83 // pred_region
          %669 = dma.done [#allocation5], 384
        $region88: #{vae_forward.1} parent=83 // pred_fallthru
          _
        // Predicated region
        $region89: #{vae_forward.1} parent=83 // pred_check
          %p670 = pneg %p128
        $region90: #{vae_forward.1} parent=83 // pred_check_branch
          %672 = sbr.rel (%p670) target = $region92
        $region91: #{vae_forward.1} parent=83 // pred_region
          %674 = dma.done [#allocation7], 96
        $region92: #{vae_forward.1} parent=83 // pred_fallthru
          _
        // Predicated region
        $region93: #{vae_forward.1} parent=83 // pred_check
          %p675 = pneg %p149
        $region94: #{vae_forward.1} parent=83 // pred_check_branch
          %677 = sbr.rel (%p675) target = $region96
        $region95: #{vae_forward.1} parent=83 // pred_region
          %679 = dma.done [#allocation7], 36864
        $region96: #{vae_forward.1} parent=83 // pred_fallthru
          _
        // Predicated region
        $region97: #{vae_forward.1} parent=83 // pred_check
          %p680 = pneg %p170
        $region98: #{vae_forward.1} parent=83 // pred_check_branch
          %682 = sbr.rel (%p680) target = $region100
        $region99: #{vae_forward.1} parent=83 // pred_region
          %684 = dma.done [#allocation10], 96
        $region100: #{vae_forward.1} parent=83 // pred_fallthru
          _
        // Predicated region
        $region101: #{vae_forward.1} parent=83 // pred_check
          %p685 = pneg %p191
        $region102: #{vae_forward.1} parent=83 // pred_check_branch
          %687 = sbr.rel (%p685) target = $region104
        $region103: #{vae_forward.1} parent=83 // pred_region
          %689 = dma.done [#allocation10], 192
        $region104: #{vae_forward.1} parent=83 // pred_fallthru
          _
        // Predicated region
        $region105: #{vae_forward.1} parent=83 // pred_check
          %p690 = pneg %p212
        $region106: #{vae_forward.1} parent=83 // pred_check_branch
          %692 = sbr.rel (%p690) target = $region108
        $region107: #{vae_forward.1} parent=83 // pred_region
          %694 = dma.done [#allocation13], 16
        $region108: #{vae_forward.1} parent=83 // pred_fallthru
          _
        // Predicated region
        $region109: #{vae_forward.1} parent=83 // pred_check
          %p695 = pneg %p233
        $region110: #{vae_forward.1} parent=83 // pred_check_branch
          %697 = sbr.rel (%p695) target = $region112
        $region111: #{vae_forward.1} parent=83 // pred_region
          %699 = dma.done [#allocation13], 192
        $region112: #{vae_forward.1} parent=83 // pred_fallthru
          _
        // Predicated region
        $region113: #{vae_forward.1} parent=83 // pred_check
          %p700 = pneg %p254
        $region114: #{vae_forward.1} parent=83 // pred_check_branch
          %702 = sbr.rel (%p700) target = $region116
        $region115: #{vae_forward.1} parent=83 // pred_region
          %704 = dma.done [#allocation16], 16
        $region116: #{vae_forward.1} parent=83 // pred_fallthru
          _
        // Predicated region
        $region117: #{vae_forward.1} parent=83 // pred_check
          %p705 = pneg %p275
        $region118: #{vae_forward.1} parent=83 // pred_check_branch
          %707 = sbr.rel (%p705) target = $region120
        $region119: #{vae_forward.1} parent=83 // pred_region
          %709 = dma.done [#allocation16], 768
        $region120: #{vae_forward.1} parent=83 // pred_fallthru
          _
        // Predicated region
        $region121: #{vae_forward.1} parent=83 // pred_check
          %p710 = pneg %p296
        $region122: #{vae_forward.1} parent=83 // pred_check_branch
          %712 = sbr.rel (%p710) target = $region124
        $region123: #{vae_forward.1} parent=83 // pred_region
          %714 = dma.done [#allocation19], 96
        $region124: #{vae_forward.1} parent=83 // pred_fallthru
          _
        // Predicated region
        $region125: #{vae_forward.1} parent=83 // pred_check
          %p715 = pneg %p317
        $region126: #{vae_forward.1} parent=83 // pred_check_branch
          %717 = sbr.rel (%p715) target = $region128
        $region127: #{vae_forward.1} parent=83 // pred_region
          %719 = dma.done [#allocation19], 36864
        $region128: #{vae_forward.1} parent=83 // pred_fallthru
          _
        // Predicated region
        $region129: #{vae_forward.1} parent=83 // pred_check
          %p720 = pneg %p338
        $region130: #{vae_forward.1} parent=83 // pred_check_branch
          %722 = sbr.rel (%p720) target = $region132
        $region131: #{vae_forward.1} parent=83 // pred_region
          %724 = dma.done [#allocation22], 96
        $region132: #{vae_forward.1} parent=83 // pred_fallthru
          _
        // Predicated region
        $region133: #{vae_forward.1} parent=83 // pred_check
          %p725 = pneg %p359
        $region134: #{vae_forward.1} parent=83 // pred_check_branch
          %727 = sbr.rel (%p725) target = $region136
        $region135: #{vae_forward.1} parent=83 // pred_region
          %729 = dma.done [#allocation22], 96
        $region136: #{vae_forward.1} parent=83 // pred_fallthru
          _
        %s730 = smul.u32 4, %s39
        %p731 = scmp.lt.s32.totalorder %s730, 7
        %s732 = scalar_select %p731, %s730, 7
        %s733 = smul.addr %s732, 8
        %s734 = scalar_lea.vmem %s0, %s733
        %p735 = pneg %p60
        %p736 = pneg %p57
        %s737 = smul.u32 4, %s39
        %p738 = scmp.lt.s32.totalorder %s737, 7
        %s739 = scalar_select %p738, %s737, 7
        %s740 = smul.addr %s739, 8
        %s741 = scalar_lea.vmem %s1, %s740
        %p742 = pneg %p86
        %p743 = pneg %p83
        %p744 = pneg %p107
        %p745 = pneg %p104
        %p746 = pneg %p128
        %p747 = pneg %p125
        %p748 = pneg %p149
        %p749 = pneg %p146
        %p750 = pneg %p170
        %p751 = pneg %p167
        %p752 = pneg %p191
        %p753 = pneg %p188
        %p754 = pneg %p212
        %p755 = pneg %p209
        %p756 = pneg %p233
        %p757 = pneg %p230
        %p758 = pneg %p254
        %p759 = pneg %p251
        %p760 = pneg %p275
        %p761 = pneg %p272
        %p762 = pneg %p296
        %p763 = pneg %p293
        %p764 = pneg %p317
        %p765 = pneg %p314
        %p766 = pneg %p338
        %p767 = pneg %p335
        %p768 = pneg %p359
        %p769 = pneg %p356
        %p770 = pneg %p380
        %p771 = pneg %p377
        %p772 = pneg %p406
        %p773 = pneg %p403
        %s774 = smul.u32 4, %s39
        %p775 = scmp.lt.s32.totalorder %s774, 7
        %s776 = scalar_select %p775, %s774, 7
        %s777 = smul.addr %s776, 8
        %s778 = scalar_lea.vmem %s16, %s777
        %p779 = pneg %p432
        %p780 = pneg %p429
        %s781 = smul.u32 4, %s39
        %p782 = scmp.lt.s32.totalorder %s781, 7
        %s783 = scalar_select %p782, %s781, 7
        %s784 = smul.addr %s783, 8
        %s785 = scalar_lea.vmem %s17, %s784
        %p786 = pneg %p458
        %p787 = pneg %p455
        %s788 = smul.u32 4, %s39
        %p789 = scmp.lt.s32.totalorder %s788, 7
        %s790 = scalar_select %p789, %s788, 7
        %s791 = smul.addr %s790, 8
        %s792 = scalar_lea.vmem %s18, %s791
        %s793 = smul.u32 4, %s39
        %p794 = scmp.lt.s32.totalorder %s793, 7
        %s795 = scalar_select %p794, %s793, 7
        %s796 = smul.addr %s795, 8
        %s797 = scalar_lea.vmem %s0, %s796
        %s798 = smul.u32 4, %s39
        %s799 = smul.u32 4, %s39
        %p800 = scmp.lt.s32.totalorder %s799, 7
        %s801 = scalar_select %p800, %s799, 7
        %s802 = smul.addr %s801, 8
        %s803 = scalar_lea.vmem %s1, %s802
        %s804 = smul.u32 4, %s39
        %s805 = smul.u32 4, %s39
        %p806 = scmp.lt.s32.totalorder %s805, 7
        %s807 = scalar_select %p806, %s805, 7
        %s808 = smul.addr %s807, 8
        %s809 = scalar_lea.vmem %s16, %s808
        %s810 = smul.u32 4, %s39
        %s811 = smul.u32 4, %s39
        %p812 = scmp.lt.s32.totalorder %s811, 7
        %s813 = scalar_select %p812, %s811, 7
        %s814 = smul.addr %s813, 8
        %s815 = scalar_lea.vmem %s17, %s814
        %s816 = smul.u32 4, %s39
        %s817 = smul.u32 4, %s39
        %p818 = scmp.lt.s32.totalorder %s817, 7
        %s819 = scalar_select %p818, %s817, 7
        %s820 = smul.addr %s819, 8
        %s821 = scalar_lea.vmem %s18, %s820
        %s822 = smul.u32 4, %s39
        %v823 = vld [vmem:[%s797] sm:$0xff]
        %v824 = vld [vmem:[%s797 + $0x8] sm:$0xff]
        %v825 = vld [vmem:[%s797 + $0x10] sm:$0xff]
        %v826 = vld [vmem:[%s797 + $0x18] sm:$0xff]
        %v827 = vld [vmem:[%s803] sm:$0xff]
        %v828 = vld [vmem:[%s803 + $0x8] sm:$0xff]
        %v829 = vld [vmem:[%s803 + $0x10] sm:$0xff]
        %v830 = vld [vmem:[%s803 + $0x18] sm:$0xff]
        %v831 = vld [vmem:[#allocation4] sm:$0xff]
        %v832 = vld [vmem:[#allocation4 + $0x8] sm:$0xff]
        %v833 = vld [vmem:[#allocation4 + $0x10] sm:$0xff]
        %v834 = vld [vmem:[#allocation6] sm:$0x3f]
        %v836 = vperm.slane %v834, 0
        %v837 = vperm.slane %v834, 1
        %v838 = vperm.slane %v834, 2
        %v839 = vperm.slane %v834, 3
        %v840 = vperm.slane %v834, 4
        %v841 = vperm.slane %v834, 5
        %851 = vst [vmem:[#allocation1] ss:$2 sm:$0xff] %v831
        %s852 = scalar_lea.vmem [#allocation1], 16
        %853 = vst [vmem:[%s852] ss:$2 sm:$0xff] %v832
        %s854 = scalar_lea.vmem [#allocation1], 32
        %855 = vst [vmem:[%s854] ss:$2 sm:$0xff] %v833
        %v856 = vld.sshfl [vmem:[#allocation1] sm:$0xff pattern:$0x75316420]
        %v857 = vld.sshfl [vmem:[#allocation1 + $0x8] sm:$0xff pattern:$0x75316420]
        %v858 = vld.sshfl [vmem:[#allocation1 + $0x10] sm:$0xff pattern:$0x75316420]
        %v859 = vld.sshfl [vmem:[#allocation1 + $0x18] sm:$0xff pattern:$0x75316420]
        %v860 = vld.sshfl [vmem:[#allocation1 + $0x20] sm:$0xff pattern:$0x75316420]
        %v861 = vld.sshfl [vmem:[#allocation1 + $0x28] sm:$0xff pattern:$0x75316420]
        %vm862 = vcmask 31744
        %v864 = vsel %vm862, %v823, 0
        %v867 = vsel %vm862, %v824, 0
        %v870 = vsel %vm862, %v825, 0
        %v873 = vsel %vm862, %v826, 0
        %vm875 = vcmask 1043456
        %v876 = vsel %vm875, %v856, 0
        %v878 = vsel %vm875, %v857, 0
        %v880 = vsel %vm875, %v858, 0
        %v882 = vsel %vm875, %v859, 0
        %v884 = vsel %vm875, %v860, 0
        %v886 = vsel %vm875, %v861, 0
        %888 = vmatpush.msra.mxu0 0.0
        %889 = vmatpush.msra.mxu0 0.0
        %890 = vmatpush.msra.mxu0 0.0
        %891 = vmatpush.msra.mxu0 0.0
        %892 = vmatpush.msra.mxu0 0.0
        %893 = vmatpush.msra.mxu0 0.0
        %894 = vmatpush.msra.mxu0 0.0
        %895 = vmatpush.msra.mxu0 0.0
        %896 = vmatpush.msra.mxu0 0.0
        %897 = vmatpush.msra.mxu0 0.0
        %898 = vmatpush.msra.mxu0 0.0
        %899 = vmatpush.msra.mxu0 0.0
        %900 = vmatpush.msra.mxu0 0.0
        %901 = vmatpush.msra.mxu0 0.0
        %902 = vmatpush.msra.mxu0 0.0
        %903 = vmatpush.msra.mxu0 %v876
        %904 = vmatmul.f32.gmra.mxu0 %v864
        %v905 = vpop.f32.mrf.mxu0
        %v906 = vadd.f32 %v836, %v905
        %907 = vmatmul.f32.gmra.mxu0 %v867
        %v908 = vpop.f32.mrf.mxu0
        %v909 = vadd.f32 %v836, %v908
        %910 = vmatmul.f32.gmra.mxu0 %v870
        %v911 = vpop.f32.mrf.mxu0
        %v912 = vadd.f32 %v836, %v911
        %913 = vmatmul.f32.gmra.mxu0 %v873
        %v914 = vpop.f32.mrf.mxu0
        %v915 = vadd.f32 %v836, %v914
        %916 = vdwg.mxu0
        %917 = vmatpush.msra.mxu0 0.0
        %918 = vmatpush.msra.mxu0 0.0
        %919 = vmatpush.msra.mxu0 0.0
        %920 = vmatpush.msra.mxu0 0.0
        %921 = vmatpush.msra.mxu0 0.0
        %922 = vmatpush.msra.mxu0 0.0
        %923 = vmatpush.msra.mxu0 0.0
        %924 = vmatpush.msra.mxu0 0.0
        %925 = vmatpush.msra.mxu0 0.0
        %926 = vmatpush.msra.mxu0 0.0
        %927 = vmatpush.msra.mxu0 0.0
        %928 = vmatpush.msra.mxu0 0.0
        %929 = vmatpush.msra.mxu0 0.0
        %930 = vmatpush.msra.mxu0 0.0
        %931 = vmatpush.msra.mxu0 0.0
        %932 = vmatpush.msra.mxu0 %v878
        %933 = vmatmul.f32.gmra.mxu0 %v864
        %v934 = vpop.f32.mrf.mxu0
        %v935 = vadd.f32 %v837, %v934
        %936 = vmatmul.f32.gmra.mxu0 %v867
        %v937 = vpop.f32.mrf.mxu0
        %v938 = vadd.f32 %v837, %v937
        %939 = vmatmul.f32.gmra.mxu0 %v870
        %v940 = vpop.f32.mrf.mxu0
        %v941 = vadd.f32 %v837, %v940
        %942 = vmatmul.f32.gmra.mxu0 %v873
        %v943 = vpop.f32.mrf.mxu0
        %v944 = vadd.f32 %v837, %v943
        %945 = vdwg.mxu0
        %946 = vmatpush.msra.mxu0 0.0
        %947 = vmatpush.msra.mxu0 0.0
        %948 = vmatpush.msra.mxu0 0.0
        %949 = vmatpush.msra.mxu0 0.0
        %950 = vmatpush.msra.mxu0 0.0
        %951 = vmatpush.msra.mxu0 0.0
        %952 = vmatpush.msra.mxu0 0.0
        %953 = vmatpush.msra.mxu0 0.0
        %954 = vmatpush.msra.mxu0 0.0
        %955 = vmatpush.msra.mxu0 0.0
        %956 = vmatpush.msra.mxu0 0.0
        %957 = vmatpush.msra.mxu0 0.0
        %958 = vmatpush.msra.mxu0 0.0
        %959 = vmatpush.msra.mxu0 0.0
        %960 = vmatpush.msra.mxu0 0.0
        %961 = vmatpush.msra.mxu0 %v880
        %962 = vmatmul.f32.gmra.mxu0 %v864
        %v963 = vpop.f32.mrf.mxu0
        %v964 = vadd.f32 %v838, %v963
        %965 = vmatmul.f32.gmra.mxu0 %v867
        %v966 = vpop.f32.mrf.mxu0
        %v967 = vadd.f32 %v838, %v966
        %968 = vmatmul.f32.gmra.mxu0 %v870
        %v969 = vpop.f32.mrf.mxu0
        %v970 = vadd.f32 %v838, %v969
        %971 = vmatmul.f32.gmra.mxu0 %v873
        %v972 = vpop.f32.mrf.mxu0
        %v973 = vadd.f32 %v838, %v972
        %974 = vdwg.mxu0
        %975 = vmatpush.msra.mxu0 0.0
        %976 = vmatpush.msra.mxu0 0.0
        %977 = vmatpush.msra.mxu0 0.0
        %978 = vmatpush.msra.mxu0 0.0
        %979 = vmatpush.msra.mxu0 0.0
        %980 = vmatpush.msra.mxu0 0.0
        %981 = vmatpush.msra.mxu0 0.0
        %982 = vmatpush.msra.mxu0 0.0
        %983 = vmatpush.msra.mxu0 0.0
        %984 = vmatpush.msra.mxu0 0.0
        %985 = vmatpush.msra.mxu0 0.0
        %986 = vmatpush.msra.mxu0 0.0
        %987 = vmatpush.msra.mxu0 0.0
        %988 = vmatpush.msra.mxu0 0.0
        %989 = vmatpush.msra.mxu0 0.0
        %990 = vmatpush.msra.mxu0 %v882
        %991 = vmatmul.f32.gmra.mxu0 %v864
        %v992 = vpop.f32.mrf.mxu0
        %v993 = vadd.f32 %v839, %v992
        %994 = vmatmul.f32.gmra.mxu0 %v867
        %v995 = vpop.f32.mrf.mxu0
        %v996 = vadd.f32 %v839, %v995
        %997 = vmatmul.f32.gmra.mxu0 %v870
        %v998 = vpop.f32.mrf.mxu0
        %v999 = vadd.f32 %v839, %v998
        %1000 = vmatmul.f32.gmra.mxu0 %v873
        %v1001 = vpop.f32.mrf.mxu0
        %v1002 = vadd.f32 %v839, %v1001
        %1003 = vdwg.mxu0
        %1004 = vmatpush.msra.mxu0 0.0
        %1005 = vmatpush.msra.mxu0 0.0
        %1006 = vmatpush.msra.mxu0 0.0
        %1007 = vmatpush.msra.mxu0 0.0
        %1008 = vmatpush.msra.mxu0 0.0
        %1009 = vmatpush.msra.mxu0 0.0
        %1010 = vmatpush.msra.mxu0 0.0
        %1011 = vmatpush.msra.mxu0 0.0
        %1012 = vmatpush.msra.mxu0 0.0
        %1013 = vmatpush.msra.mxu0 0.0
        %1014 = vmatpush.msra.mxu0 0.0
        %1015 = vmatpush.msra.mxu0 0.0
        %1016 = vmatpush.msra.mxu0 0.0
        %1017 = vmatpush.msra.mxu0 0.0
        %1018 = vmatpush.msra.mxu0 0.0
        %1019 = vmatpush.msra.mxu0 %v884
        %1020 = vmatmul.f32.gmra.mxu0 %v864
        %v1021 = vpop.f32.mrf.mxu0
        %v1022 = vadd.f32 %v840, %v1021
        %1023 = vmatmul.f32.gmra.mxu0 %v867
        %v1024 = vpop.f32.mrf.mxu0
        %v1025 = vadd.f32 %v840, %v1024
        %1026 = vmatmul.f32.gmra.mxu0 %v870
        %v1027 = vpop.f32.mrf.mxu0
        %v1028 = vadd.f32 %v840, %v1027
        %1029 = vmatmul.f32.gmra.mxu0 %v873
        %v1030 = vpop.f32.mrf.mxu0
        %v1031 = vadd.f32 %v840, %v1030
        %1032 = vdwg.mxu0
        %1033 = vmatpush.msra.mxu0 0.0
        %1034 = vmatpush.msra.mxu0 0.0
        %1035 = vmatpush.msra.mxu0 0.0
        %1036 = vmatpush.msra.mxu0 0.0
        %1037 = vmatpush.msra.mxu0 0.0
        %1038 = vmatpush.msra.mxu0 0.0
        %1039 = vmatpush.msra.mxu0 0.0
        %1040 = vmatpush.msra.mxu0 0.0
        %1041 = vmatpush.msra.mxu0 0.0
        %1042 = vmatpush.msra.mxu0 0.0
        %1043 = vmatpush.msra.mxu0 0.0
        %1044 = vmatpush.msra.mxu0 0.0
        %1045 = vmatpush.msra.mxu0 0.0
        %1046 = vmatpush.msra.mxu0 0.0
        %1047 = vmatpush.msra.mxu0 0.0
        %1048 = vmatpush.msra.mxu0 %v886
        %1049 = vmatmul.f32.gmra.mxu0 %v864
        %v1050 = vpop.f32.mrf.mxu0
        %v1051 = vadd.f32 %v841, %v1050
        %1052 = vmatmul.f32.gmra.mxu0 %v867
        %v1053 = vpop.f32.mrf.mxu0
        %v1054 = vadd.f32 %v841, %v1053
        %1055 = vmatmul.f32.gmra.mxu0 %v870
        %v1056 = vpop.f32.mrf.mxu0
        %v1057 = vadd.f32 %v841, %v1056
        %1058 = vmatmul.f32.gmra.mxu0 %v873
        %v1059 = vpop.f32.mrf.mxu0
        %v1060 = vadd.f32 %v841, %v1059
        %1061 = vdwg.mxu0
        %v1062 = vmax.f32 %v906, 0.0
        %v1063 = vmax.f32 %v935, 0.0
        %v1064 = vmax.f32 %v964, 0.0
        %v1065 = vmax.f32 %v993, 0.0
        %v1066 = vmax.f32 %v1022, 0.0
        %v1067 = vmax.f32 %v1051, 0.0
        %v1068 = vmax.f32 %v909, 0.0
        %v1069 = vmax.f32 %v938, 0.0
        %v1070 = vmax.f32 %v967, 0.0
        %v1071 = vmax.f32 %v996, 0.0
        %v1072 = vmax.f32 %v1025, 0.0
        %v1073 = vmax.f32 %v1054, 0.0
        %v1074 = vmax.f32 %v912, 0.0
        %v1075 = vmax.f32 %v941, 0.0
        %v1076 = vmax.f32 %v970, 0.0
        %v1077 = vmax.f32 %v999, 0.0
        %v1078 = vmax.f32 %v1028, 0.0
        %v1079 = vmax.f32 %v1057, 0.0
        %v1080 = vmax.f32 %v915, 0.0
        %v1081 = vmax.f32 %v944, 0.0
        %v1082 = vmax.f32 %v973, 0.0
        %v1083 = vmax.f32 %v1002, 0.0
        %v1084 = vmax.f32 %v1031, 0.0
        %v1085 = vmax.f32 %v1060, 0.0
        %v1086 = vpack.c.bf16 %v1068, %v1062
        %v1087 = vpack.c.bf16 %v1069, %v1063
        %v1088 = vpack.c.bf16 %v1070, %v1064
        %v1089 = vpack.c.bf16 %v1071, %v1065
        %v1090 = vpack.c.bf16 %v1072, %v1066
        %v1091 = vpack.c.bf16 %v1073, %v1067
        %v1092 = vpack.c.bf16 %v1080, %v1074
        %v1093 = vpack.c.bf16 %v1081, %v1075
        %v1094 = vpack.c.bf16 %v1082, %v1076
        %v1095 = vpack.c.bf16 %v1083, %v1077
        %v1096 = vpack.c.bf16 %v1084, %v1078
        %v1097 = vpack.c.bf16 %v1085, %v1079
        %v1098 = vld [vmem:[#allocation8] sm:$0xff]
        %v1099 = vld [vmem:[#allocation8 + $0x8] sm:$0xff]
        %v1100 = vld [vmem:[#allocation8 + $0x10] sm:$0xff]
        %v1101 = vld [vmem:[#allocation8 + $0x18] sm:$0xff]
        %v1102 = vld [vmem:[#allocation8 + $0x20] sm:$0xff]
        %v1103 = vld [vmem:[#allocation8 + $0x28] sm:$0xff]
        %v1104 = vld [vmem:[#allocation8 + $0x30] sm:$0xff]
        %v1105 = vld [vmem:[#allocation8 + $0x38] sm:$0xff]
        %v1106 = vld [vmem:[#allocation8 + $0x40] sm:$0xff]
        %v1107 = vld [vmem:[#allocation8 + $0x48] sm:$0xff]
        %v1108 = vld [vmem:[#allocation8 + $0x50] sm:$0xff]
        %v1109 = vld [vmem:[#allocation8 + $0x58] sm:$0xff]
        %v1110 = vld [vmem:[#allocation8 + $0x60] sm:$0xff]
        %v1111 = vld [vmem:[#allocation8 + $0x68] sm:$0xff]
        %v1112 = vld [vmem:[#allocation8 + $0x70] sm:$0xff]
        %v1113 = vld [vmem:[#allocation8 + $0x78] sm:$0xff]
        %v1114 = vld [vmem:[#allocation8 + $0x80] sm:$0xff]
        %v1115 = vld [vmem:[#allocation8 + $0x88] sm:$0xff]
        %v1116 = vld [vmem:[#allocation8 + $0x90] sm:$0xff]
        %v1117 = vld [vmem:[#allocation8 + $0x98] sm:$0xff]
        %v1118 = vld [vmem:[#allocation8 + $0xa0] sm:$0xff]
        %v1119 = vld [vmem:[#allocation8 + $0xa8] sm:$0xff]
        %v1120 = vld [vmem:[#allocation8 + $0xb0] sm:$0xff]
        %v1121 = vld [vmem:[#allocation8 + $0xb8] sm:$0xff]
        %v1122 = vld [vmem:[#allocation8 + $0xc0] sm:$0xff]
        %v1123 = vld [vmem:[#allocation8 + $0xc8] sm:$0xff]
        %v1124 = vld [vmem:[#allocation8 + $0xd0] sm:$0xff]
        %v1125 = vld [vmem:[#allocation8 + $0xd8] sm:$0xff]
        %v1126 = vld [vmem:[#allocation8 + $0xe0] sm:$0xff]
        %v1127 = vld [vmem:[#allocation8 + $0xe8] sm:$0xff]
        %v1128 = vld [vmem:[#allocation8 + $0xf0] sm:$0xff]
        %v1129 = vld [vmem:[#allocation8 + $0xf8] sm:$0xff]
        %v1130 = vld [vmem:[#allocation8 + $0x100] sm:$0xff]
        %v1131 = vld [vmem:[#allocation8 + $0x108] sm:$0xff]
        %v1132 = vld [vmem:[#allocation8 + $0x110] sm:$0xff]
        %v1133 = vld [vmem:[#allocation8 + $0x118] sm:$0xff]
        %v1134 = vld [vmem:[#allocation8 + $0x120] sm:$0xff]
        %v1135 = vld [vmem:[#allocation8 + $0x128] sm:$0xff]
        %v1136 = vld [vmem:[#allocation8 + $0x130] sm:$0xff]
        %v1137 = vld [vmem:[#allocation8 + $0x138] sm:$0xff]
        %v1138 = vld [vmem:[#allocation8 + $0x140] sm:$0xff]
        %v1139 = vld [vmem:[#allocation8 + $0x148] sm:$0xff]
        %v1140 = vld [vmem:[#allocation8 + $0x150] sm:$0xff]
        %v1141 = vld [vmem:[#allocation8 + $0x158] sm:$0xff]
        %v1142 = vld [vmem:[#allocation8 + $0x160] sm:$0xff]
        %v1143 = vld [vmem:[#allocation8 + $0x168] sm:$0xff]
        %v1144 = vld [vmem:[#allocation8 + $0x170] sm:$0xff]
        %v1145 = vld [vmem:[#allocation8 + $0x178] sm:$0xff]
        %v1146 = vld [vmem:[#allocation8 + $0x180] sm:$0xff]
        %v1147 = vld [vmem:[#allocation8 + $0x188] sm:$0xff]
        %v1148 = vld [vmem:[#allocation8 + $0x190] sm:$0xff]
        %v1149 = vld [vmem:[#allocation8 + $0x198] sm:$0xff]
        %v1150 = vld [vmem:[#allocation8 + $0x1a0] sm:$0xff]
        %v1151 = vld [vmem:[#allocation8 + $0x1a8] sm:$0xff]
        %v1152 = vld [vmem:[#allocation8 + $0x1b0] sm:$0xff]
        %v1153 = vld [vmem:[#allocation8 + $0x1b8] sm:$0xff]
        %v1154 = vld [vmem:[#allocation8 + $0x1c0] sm:$0xff]
        %v1155 = vld [vmem:[#allocation8 + $0x1c8] sm:$0xff]
        %v1156 = vld [vmem:[#allocation8 + $0x1d0] sm:$0xff]
        %v1157 = vld [vmem:[#allocation8 + $0x1d8] sm:$0xff]
        %v1158 = vld [vmem:[#allocation8 + $0x1e0] sm:$0xff]
        %v1159 = vld [vmem:[#allocation8 + $0x1e8] sm:$0xff]
        %v1160 = vld [vmem:[#allocation8 + $0x1f0] sm:$0xff]
        %v1161 = vld [vmem:[#allocation8 + $0x1f8] sm:$0xff]
        %v1162 = vld [vmem:[#allocation8 + $0x200] sm:$0xff]
        %v1163 = vld [vmem:[#allocation8 + $0x208] sm:$0xff]
        %v1164 = vld [vmem:[#allocation8 + $0x210] sm:$0xff]
        %v1165 = vld [vmem:[#allocation8 + $0x218] sm:$0xff]
        %v1166 = vld [vmem:[#allocation8 + $0x220] sm:$0xff]
        %v1167 = vld [vmem:[#allocation8 + $0x228] sm:$0xff]
        %v1168 = vld [vmem:[#allocation8 + $0x230] sm:$0xff]
        %v1169 = vld [vmem:[#allocation8 + $0x238] sm:$0xff]
        %v1170 = vld [vmem:[#allocation8 + $0x240] sm:$0xff]
        %v1171 = vld [vmem:[#allocation8 + $0x248] sm:$0xff]
        %v1172 = vld [vmem:[#allocation8 + $0x250] sm:$0xff]
        %v1173 = vld [vmem:[#allocation8 + $0x258] sm:$0xff]
        %v1174 = vld [vmem:[#allocation8 + $0x260] sm:$0xff]
        %v1175 = vld [vmem:[#allocation8 + $0x268] sm:$0xff]
        %v1176 = vld [vmem:[#allocation8 + $0x270] sm:$0xff]
        %v1177 = vld [vmem:[#allocation8 + $0x278] sm:$0xff]
        %v1178 = vld [vmem:[#allocation8 + $0x280] sm:$0xff]
        %v1179 = vld [vmem:[#allocation8 + $0x288] sm:$0xff]
        %v1180 = vld [vmem:[#allocation8 + $0x290] sm:$0xff]
        %v1181 = vld [vmem:[#allocation8 + $0x298] sm:$0xff]
        %v1182 = vld [vmem:[#allocation8 + $0x2a0] sm:$0xff]
        %v1183 = vld [vmem:[#allocation8 + $0x2a8] sm:$0xff]
        %v1184 = vld [vmem:[#allocation8 + $0x2b0] sm:$0xff]
        %v1185 = vld [vmem:[#allocation8 + $0x2b8] sm:$0xff]
        %v1186 = vld [vmem:[#allocation8 + $0x2c0] sm:$0xff]
        %v1187 = vld [vmem:[#allocation8 + $0x2c8] sm:$0xff]
        %v1188 = vld [vmem:[#allocation8 + $0x2d0] sm:$0xff]
        %v1189 = vld [vmem:[#allocation8 + $0x2d8] sm:$0xff]
        %v1190 = vld [vmem:[#allocation8 + $0x2e0] sm:$0xff]
        %v1191 = vld [vmem:[#allocation8 + $0x2e8] sm:$0xff]
        %v1192 = vld [vmem:[#allocation8 + $0x2f0] sm:$0xff]
        %v1193 = vld [vmem:[#allocation8 + $0x2f8] sm:$0xff]
        %v1194 = vld [vmem:[#allocation8 + $0x300] sm:$0xff]
        %v1195 = vld [vmem:[#allocation8 + $0x308] sm:$0xff]
        %v1196 = vld [vmem:[#allocation8 + $0x310] sm:$0xff]
        %v1197 = vld [vmem:[#allocation8 + $0x318] sm:$0xff]
        %v1198 = vld [vmem:[#allocation8 + $0x320] sm:$0xff]
        %v1199 = vld [vmem:[#allocation8 + $0x328] sm:$0xff]
        %v1200 = vld [vmem:[#allocation8 + $0x330] sm:$0xff]
        %v1201 = vld [vmem:[#allocation8 + $0x338] sm:$0xff]
        %v1202 = vld [vmem:[#allocation8 + $0x340] sm:$0xff]
        %v1203 = vld [vmem:[#allocation8 + $0x348] sm:$0xff]
        %v1204 = vld [vmem:[#allocation8 + $0x350] sm:$0xff]
        %v1205 = vld [vmem:[#allocation8 + $0x358] sm:$0xff]
        %v1206 = vld [vmem:[#allocation8 + $0x360] sm:$0xff]
        %v1207 = vld [vmem:[#allocation8 + $0x368] sm:$0xff]
        %v1208 = vld [vmem:[#allocation8 + $0x370] sm:$0xff]
        %v1209 = vld [vmem:[#allocation8 + $0x378] sm:$0xff]
        %v1210 = vld [vmem:[#allocation8 + $0x380] sm:$0xff]
        %v1211 = vld [vmem:[#allocation8 + $0x388] sm:$0xff]
        %v1212 = vld [vmem:[#allocation8 + $0x390] sm:$0xff]
        %v1213 = vld [vmem:[#allocation8 + $0x398] sm:$0xff]
        %v1214 = vld [vmem:[#allocation8 + $0x3a0] sm:$0xff]
        %v1215 = vld [vmem:[#allocation8 + $0x3a8] sm:$0xff]
        %v1216 = vld [vmem:[#allocation8 + $0x3b0] sm:$0xff]
        %v1217 = vld [vmem:[#allocation8 + $0x3b8] sm:$0xff]
        %v1218 = vld [vmem:[#allocation8 + $0x3c0] sm:$0xff]
        %v1219 = vld [vmem:[#allocation8 + $0x3c8] sm:$0xff]
        %v1220 = vld [vmem:[#allocation8 + $0x3d0] sm:$0xff]
        %v1221 = vld [vmem:[#allocation8 + $0x3d8] sm:$0xff]
        %v1222 = vld [vmem:[#allocation8 + $0x3e0] sm:$0xff]
        %v1223 = vld [vmem:[#allocation8 + $0x3e8] sm:$0xff]
        %v1224 = vld [vmem:[#allocation8 + $0x3f0] sm:$0xff]
        %v1225 = vld [vmem:[#allocation8 + $0x3f8] sm:$0xff]
        %v1226 = vld [vmem:[#allocation8 + $0x400] sm:$0xff]
        %v1227 = vld [vmem:[#allocation8 + $0x408] sm:$0xff]
        %v1228 = vld [vmem:[#allocation8 + $0x410] sm:$0xff]
        %v1229 = vld [vmem:[#allocation8 + $0x418] sm:$0xff]
        %v1230 = vld [vmem:[#allocation8 + $0x420] sm:$0xff]
        %v1231 = vld [vmem:[#allocation8 + $0x428] sm:$0xff]
        %v1232 = vld [vmem:[#allocation8 + $0x430] sm:$0xff]
        %v1233 = vld [vmem:[#allocation8 + $0x438] sm:$0xff]
        %v1234 = vld [vmem:[#allocation8 + $0x440] sm:$0xff]
        %v1235 = vld [vmem:[#allocation8 + $0x448] sm:$0xff]
        %v1236 = vld [vmem:[#allocation8 + $0x450] sm:$0xff]
        %v1237 = vld [vmem:[#allocation8 + $0x458] sm:$0xff]
        %v1238 = vld [vmem:[#allocation8 + $0x460] sm:$0xff]
        %v1239 = vld [vmem:[#allocation8 + $0x468] sm:$0xff]
        %v1240 = vld [vmem:[#allocation8 + $0x470] sm:$0xff]
        %v1241 = vld [vmem:[#allocation8 + $0x478] sm:$0xff]
        %v1242 = vld [vmem:[#allocation8 + $0x480] sm:$0xff]
        %v1243 = vld [vmem:[#allocation8 + $0x488] sm:$0xff]
        %v1244 = vld [vmem:[#allocation8 + $0x490] sm:$0xff]
        %v1245 = vld [vmem:[#allocation8 + $0x498] sm:$0xff]
        %v1246 = vld [vmem:[#allocation8 + $0x4a0] sm:$0xff]
        %v1247 = vld [vmem:[#allocation8 + $0x4a8] sm:$0xff]
        %v1248 = vld [vmem:[#allocation8 + $0x4b0] sm:$0xff]
        %v1249 = vld [vmem:[#allocation8 + $0x4b8] sm:$0xff]
        %v1250 = vld [vmem:[#allocation8 + $0x4c0] sm:$0xff]
        %v1251 = vld [vmem:[#allocation8 + $0x4c8] sm:$0xff]
        %v1252 = vld [vmem:[#allocation8 + $0x4d0] sm:$0xff]
        %v1253 = vld [vmem:[#allocation8 + $0x4d8] sm:$0xff]
        %v1254 = vld [vmem:[#allocation8 + $0x4e0] sm:$0xff]
        %v1255 = vld [vmem:[#allocation8 + $0x4e8] sm:$0xff]
        %v1256 = vld [vmem:[#allocation8 + $0x4f0] sm:$0xff]
        %v1257 = vld [vmem:[#allocation8 + $0x4f8] sm:$0xff]
        %v1258 = vld [vmem:[#allocation8 + $0x500] sm:$0xff]
        %v1259 = vld [vmem:[#allocation8 + $0x508] sm:$0xff]
        %v1260 = vld [vmem:[#allocation8 + $0x510] sm:$0xff]
        %v1261 = vld [vmem:[#allocation8 + $0x518] sm:$0xff]
        %v1262 = vld [vmem:[#allocation8 + $0x520] sm:$0xff]
        %v1263 = vld [vmem:[#allocation8 + $0x528] sm:$0xff]
        %v1264 = vld [vmem:[#allocation8 + $0x530] sm:$0xff]
        %v1265 = vld [vmem:[#allocation8 + $0x538] sm:$0xff]
        %v1266 = vld [vmem:[#allocation8 + $0x540] sm:$0xff]
        %v1267 = vld [vmem:[#allocation8 + $0x548] sm:$0xff]
        %v1268 = vld [vmem:[#allocation8 + $0x550] sm:$0xff]
        %v1269 = vld [vmem:[#allocation8 + $0x558] sm:$0xff]
        %v1270 = vld [vmem:[#allocation8 + $0x560] sm:$0xff]
        %v1271 = vld [vmem:[#allocation8 + $0x568] sm:$0xff]
        %v1272 = vld [vmem:[#allocation8 + $0x570] sm:$0xff]
        %v1273 = vld [vmem:[#allocation8 + $0x578] sm:$0xff]
        %v1274 = vld [vmem:[#allocation8 + $0x580] sm:$0xff]
        %v1275 = vld [vmem:[#allocation8 + $0x588] sm:$0xff]
        %v1276 = vld [vmem:[#allocation8 + $0x590] sm:$0xff]
        %v1277 = vld [vmem:[#allocation8 + $0x598] sm:$0xff]
        %v1278 = vld [vmem:[#allocation8 + $0x5a0] sm:$0xff]
        %v1279 = vld [vmem:[#allocation8 + $0x5a8] sm:$0xff]
        %v1280 = vld [vmem:[#allocation8 + $0x5b0] sm:$0xff]
        %v1281 = vld [vmem:[#allocation8 + $0x5b8] sm:$0xff]
        %v1282 = vld [vmem:[#allocation8 + $0x5c0] sm:$0xff]
        %v1283 = vld [vmem:[#allocation8 + $0x5c8] sm:$0xff]
        %v1284 = vld [vmem:[#allocation8 + $0x5d0] sm:$0xff]
        %v1285 = vld [vmem:[#allocation8 + $0x5d8] sm:$0xff]
        %v1286 = vld [vmem:[#allocation8 + $0x5e0] sm:$0xff]
        %v1287 = vld [vmem:[#allocation8 + $0x5e8] sm:$0xff]
        %v1288 = vld [vmem:[#allocation8 + $0x5f0] sm:$0xff]
        %v1289 = vld [vmem:[#allocation8 + $0x5f8] sm:$0xff]
        %v1290 = vld [vmem:[#allocation8 + $0x600] sm:$0xff]
        %v1291 = vld [vmem:[#allocation8 + $0x608] sm:$0xff]
        %v1292 = vld [vmem:[#allocation8 + $0x610] sm:$0xff]
        %v1293 = vld [vmem:[#allocation8 + $0x618] sm:$0xff]
        %v1294 = vld [vmem:[#allocation8 + $0x620] sm:$0xff]
        %v1295 = vld [vmem:[#allocation8 + $0x628] sm:$0xff]
        %v1296 = vld [vmem:[#allocation8 + $0x630] sm:$0xff]
        %v1297 = vld [vmem:[#allocation8 + $0x638] sm:$0xff]
        %v1298 = vld [vmem:[#allocation8 + $0x640] sm:$0xff]
        %v1299 = vld [vmem:[#allocation8 + $0x648] sm:$0xff]
        %v1300 = vld [vmem:[#allocation8 + $0x650] sm:$0xff]
        %v1301 = vld [vmem:[#allocation8 + $0x658] sm:$0xff]
        %v1302 = vld [vmem:[#allocation8 + $0x660] sm:$0xff]
        %v1303 = vld [vmem:[#allocation8 + $0x668] sm:$0xff]
        %v1304 = vld [vmem:[#allocation8 + $0x670] sm:$0xff]
        %v1305 = vld [vmem:[#allocation8 + $0x678] sm:$0xff]
        %v1306 = vld [vmem:[#allocation8 + $0x680] sm:$0xff]
        %v1307 = vld [vmem:[#allocation8 + $0x688] sm:$0xff]
        %v1308 = vld [vmem:[#allocation8 + $0x690] sm:$0xff]
        %v1309 = vld [vmem:[#allocation8 + $0x698] sm:$0xff]
        %v1310 = vld [vmem:[#allocation8 + $0x6a0] sm:$0xff]
        %v1311 = vld [vmem:[#allocation8 + $0x6a8] sm:$0xff]
        %v1312 = vld [vmem:[#allocation8 + $0x6b0] sm:$0xff]
        %v1313 = vld [vmem:[#allocation8 + $0x6b8] sm:$0xff]
        %v1314 = vld [vmem:[#allocation8 + $0x6c0] sm:$0xff]
        %v1315 = vld [vmem:[#allocation8 + $0x6c8] sm:$0xff]
        %v1316 = vld [vmem:[#allocation8 + $0x6d0] sm:$0xff]
        %v1317 = vld [vmem:[#allocation8 + $0x6d8] sm:$0xff]
        %v1318 = vld [vmem:[#allocation8 + $0x6e0] sm:$0xff]
        %v1319 = vld [vmem:[#allocation8 + $0x6e8] sm:$0xff]
        %v1320 = vld [vmem:[#allocation8 + $0x6f0] sm:$0xff]
        %v1321 = vld [vmem:[#allocation8 + $0x6f8] sm:$0xff]
        %v1322 = vld [vmem:[#allocation8 + $0x700] sm:$0xff]
        %v1323 = vld [vmem:[#allocation8 + $0x708] sm:$0xff]
        %v1324 = vld [vmem:[#allocation8 + $0x710] sm:$0xff]
        %v1325 = vld [vmem:[#allocation8 + $0x718] sm:$0xff]
        %v1326 = vld [vmem:[#allocation8 + $0x720] sm:$0xff]
        %v1327 = vld [vmem:[#allocation8 + $0x728] sm:$0xff]
        %v1328 = vld [vmem:[#allocation8 + $0x730] sm:$0xff]
        %v1329 = vld [vmem:[#allocation8 + $0x738] sm:$0xff]
        %v1330 = vld [vmem:[#allocation8 + $0x740] sm:$0xff]
        %v1331 = vld [vmem:[#allocation8 + $0x748] sm:$0xff]
        %v1332 = vld [vmem:[#allocation8 + $0x750] sm:$0xff]
        %v1333 = vld [vmem:[#allocation8 + $0x758] sm:$0xff]
        %v1334 = vld [vmem:[#allocation8 + $0x760] sm:$0xff]
        %v1335 = vld [vmem:[#allocation8 + $0x768] sm:$0xff]
        %v1336 = vld [vmem:[#allocation8 + $0x770] sm:$0xff]
        %v1337 = vld [vmem:[#allocation8 + $0x778] sm:$0xff]
        %v1338 = vld [vmem:[#allocation8 + $0x780] sm:$0xff]
        %v1339 = vld [vmem:[#allocation8 + $0x788] sm:$0xff]
        %v1340 = vld [vmem:[#allocation8 + $0x790] sm:$0xff]
        %v1341 = vld [vmem:[#allocation8 + $0x798] sm:$0xff]
        %v1342 = vld [vmem:[#allocation8 + $0x7a0] sm:$0xff]
        %v1343 = vld [vmem:[#allocation8 + $0x7a8] sm:$0xff]
        %v1344 = vld [vmem:[#allocation8 + $0x7b0] sm:$0xff]
        %v1345 = vld [vmem:[#allocation8 + $0x7b8] sm:$0xff]
        %v1346 = vld [vmem:[#allocation8 + $0x7c0] sm:$0xff]
        %v1347 = vld [vmem:[#allocation8 + $0x7c8] sm:$0xff]
        %v1348 = vld [vmem:[#allocation8 + $0x7d0] sm:$0xff]
        %v1349 = vld [vmem:[#allocation8 + $0x7d8] sm:$0xff]
        %v1350 = vld [vmem:[#allocation8 + $0x7e0] sm:$0xff]
        %v1351 = vld [vmem:[#allocation8 + $0x7e8] sm:$0xff]
        %v1352 = vld [vmem:[#allocation8 + $0x7f0] sm:$0xff]
        %v1353 = vld [vmem:[#allocation8 + $0x7f8] sm:$0xff]
        %v1354 = vld [vmem:[#allocation8 + $0x800] sm:$0xff]
        %v1355 = vld [vmem:[#allocation8 + $0x808] sm:$0xff]
        %v1356 = vld [vmem:[#allocation8 + $0x810] sm:$0xff]
        %v1357 = vld [vmem:[#allocation8 + $0x818] sm:$0xff]
        %v1358 = vld [vmem:[#allocation8 + $0x820] sm:$0xff]
        %v1359 = vld [vmem:[#allocation8 + $0x828] sm:$0xff]
        %v1360 = vld [vmem:[#allocation8 + $0x830] sm:$0xff]
        %v1361 = vld [vmem:[#allocation8 + $0x838] sm:$0xff]
        %v1362 = vld [vmem:[#allocation8 + $0x840] sm:$0xff]
        %v1363 = vld [vmem:[#allocation8 + $0x848] sm:$0xff]
        %v1364 = vld [vmem:[#allocation8 + $0x850] sm:$0xff]
        %v1365 = vld [vmem:[#allocation8 + $0x858] sm:$0xff]
        %v1366 = vld [vmem:[#allocation8 + $0x860] sm:$0xff]
        %v1367 = vld [vmem:[#allocation8 + $0x868] sm:$0xff]
        %v1368 = vld [vmem:[#allocation8 + $0x870] sm:$0xff]
        %v1369 = vld [vmem:[#allocation8 + $0x878] sm:$0xff]
        %v1370 = vld [vmem:[#allocation8 + $0x880] sm:$0xff]
        %v1371 = vld [vmem:[#allocation8 + $0x888] sm:$0xff]
        %v1372 = vld [vmem:[#allocation8 + $0x890] sm:$0xff]
        %v1373 = vld [vmem:[#allocation8 + $0x898] sm:$0xff]
        %v1374 = vld [vmem:[#allocation8 + $0x8a0] sm:$0xff]
        %v1375 = vld [vmem:[#allocation8 + $0x8a8] sm:$0xff]
        %v1376 = vld [vmem:[#allocation8 + $0x8b0] sm:$0xff]
        %v1377 = vld [vmem:[#allocation8 + $0x8b8] sm:$0xff]
        %v1378 = vld [vmem:[#allocation8 + $0x8c0] sm:$0xff]
        %v1379 = vld [vmem:[#allocation8 + $0x8c8] sm:$0xff]
        %v1380 = vld [vmem:[#allocation8 + $0x8d0] sm:$0xff]
        %v1381 = vld [vmem:[#allocation8 + $0x8d8] sm:$0xff]
        %v1382 = vld [vmem:[#allocation8 + $0x8e0] sm:$0xff]
        %v1383 = vld [vmem:[#allocation8 + $0x8e8] sm:$0xff]
        %v1384 = vld [vmem:[#allocation8 + $0x8f0] sm:$0xff]
        %v1385 = vld [vmem:[#allocation8 + $0x8f8] sm:$0xff]
        %v1386 = vld [vmem:[#allocation9] sm:$0x3f]
        %v1388 = vperm.slane %v1386, 0
        %v1389 = vperm.slane %v1386, 1
        %v1390 = vperm.slane %v1386, 2
        %v1391 = vperm.slane %v1386, 3
        %v1392 = vperm.slane %v1386, 4
        %v1393 = vperm.slane %v1386, 5
        %v1688 = vunpack.c.l.b16 %v1098
        %v1689 = vunpack.c.h.b16 %v1098
        %v1690 = vunpack.c.l.b16 %v1099
        %v1691 = vunpack.c.h.b16 %v1099
        %v1692 = vunpack.c.l.b16 %v1100
        %v1693 = vunpack.c.h.b16 %v1100
        %v1694 = vunpack.c.l.b16 %v1101
        %v1695 = vunpack.c.h.b16 %v1101
        %v1696 = vunpack.c.l.b16 %v1102
        %v1697 = vunpack.c.h.b16 %v1102
        %v1698 = vunpack.c.l.b16 %v1103
        %v1699 = vunpack.c.h.b16 %v1103
        %v1700 = vunpack.c.l.b16 %v1104
        %v1701 = vunpack.c.h.b16 %v1104
        %v1702 = vunpack.c.l.b16 %v1105
        %v1703 = vunpack.c.h.b16 %v1105
        %v1704 = vunpack.c.l.b16 %v1106
        %v1705 = vunpack.c.h.b16 %v1106
        %v1706 = vunpack.c.l.b16 %v1107
        %v1707 = vunpack.c.h.b16 %v1107
        %v1708 = vunpack.c.l.b16 %v1108
        %v1709 = vunpack.c.h.b16 %v1108
        %v1710 = vunpack.c.l.b16 %v1109
        %v1711 = vunpack.c.h.b16 %v1109
        %v1712 = vunpack.c.l.b16 %v1110
        %v1713 = vunpack.c.h.b16 %v1110
        %v1714 = vunpack.c.l.b16 %v1111
        %v1715 = vunpack.c.h.b16 %v1111
        %v1716 = vunpack.c.l.b16 %v1112
        %v1717 = vunpack.c.h.b16 %v1112
        %v1718 = vunpack.c.l.b16 %v1113
        %v1719 = vunpack.c.h.b16 %v1113
        %v1720 = vunpack.c.l.b16 %v1114
        %v1721 = vunpack.c.h.b16 %v1114
        %v1722 = vunpack.c.l.b16 %v1115
        %v1723 = vunpack.c.h.b16 %v1115
        %v1724 = vunpack.c.l.b16 %v1116
        %v1725 = vunpack.c.h.b16 %v1116
        %v1726 = vunpack.c.l.b16 %v1117
        %v1727 = vunpack.c.h.b16 %v1117
        %v1728 = vunpack.c.l.b16 %v1118
        %v1729 = vunpack.c.h.b16 %v1118
        %v1730 = vunpack.c.l.b16 %v1119
        %v1731 = vunpack.c.h.b16 %v1119
        %v1732 = vunpack.c.l.b16 %v1120
        %v1733 = vunpack.c.h.b16 %v1120
        %v1734 = vunpack.c.l.b16 %v1121
        %v1735 = vunpack.c.h.b16 %v1121
        %v1736 = vunpack.c.l.b16 %v1122
        %v1737 = vunpack.c.h.b16 %v1122
        %v1738 = vunpack.c.l.b16 %v1123
        %v1739 = vunpack.c.h.b16 %v1123
        %v1740 = vunpack.c.l.b16 %v1124
        %v1741 = vunpack.c.h.b16 %v1124
        %v1742 = vunpack.c.l.b16 %v1125
        %v1743 = vunpack.c.h.b16 %v1125
        %v1744 = vunpack.c.l.b16 %v1126
        %v1745 = vunpack.c.h.b16 %v1126
        %v1746 = vunpack.c.l.b16 %v1127
        %v1747 = vunpack.c.h.b16 %v1127
        %v1748 = vunpack.c.l.b16 %v1128
        %v1749 = vunpack.c.h.b16 %v1128
        %v1750 = vunpack.c.l.b16 %v1129
        %v1751 = vunpack.c.h.b16 %v1129
        %v1752 = vunpack.c.l.b16 %v1130
        %v1753 = vunpack.c.h.b16 %v1130
        %v1754 = vunpack.c.l.b16 %v1131
        %v1755 = vunpack.c.h.b16 %v1131
        %v1756 = vunpack.c.l.b16 %v1132
        %v1757 = vunpack.c.h.b16 %v1132
        %v1758 = vunpack.c.l.b16 %v1133
        %v1759 = vunpack.c.h.b16 %v1133
        %v1760 = vunpack.c.l.b16 %v1134
        %v1761 = vunpack.c.h.b16 %v1134
        %v1762 = vunpack.c.l.b16 %v1135
        %v1763 = vunpack.c.h.b16 %v1135
        %v1764 = vunpack.c.l.b16 %v1136
        %v1765 = vunpack.c.h.b16 %v1136
        %v1766 = vunpack.c.l.b16 %v1137
        %v1767 = vunpack.c.h.b16 %v1137
        %v1768 = vunpack.c.l.b16 %v1138
        %v1769 = vunpack.c.h.b16 %v1138
        %v1770 = vunpack.c.l.b16 %v1139
        %v1771 = vunpack.c.h.b16 %v1139
        %v1772 = vunpack.c.l.b16 %v1140
        %v1773 = vunpack.c.h.b16 %v1140
        %v1774 = vunpack.c.l.b16 %v1141
        %v1775 = vunpack.c.h.b16 %v1141
        %v1776 = vunpack.c.l.b16 %v1142
        %v1777 = vunpack.c.h.b16 %v1142
        %v1778 = vunpack.c.l.b16 %v1143
        %v1779 = vunpack.c.h.b16 %v1143
        %v1780 = vunpack.c.l.b16 %v1144
        %v1781 = vunpack.c.h.b16 %v1144
        %v1782 = vunpack.c.l.b16 %v1145
        %v1783 = vunpack.c.h.b16 %v1145
        %v1784 = vunpack.c.l.b16 %v1146
        %v1785 = vunpack.c.h.b16 %v1146
        %v1786 = vunpack.c.l.b16 %v1147
        %v1787 = vunpack.c.h.b16 %v1147
        %v1788 = vunpack.c.l.b16 %v1148
        %v1789 = vunpack.c.h.b16 %v1148
        %v1790 = vunpack.c.l.b16 %v1149
        %v1791 = vunpack.c.h.b16 %v1149
        %v1792 = vunpack.c.l.b16 %v1150
        %v1793 = vunpack.c.h.b16 %v1150
        %v1794 = vunpack.c.l.b16 %v1151
        %v1795 = vunpack.c.h.b16 %v1151
        %v1796 = vunpack.c.l.b16 %v1152
        %v1797 = vunpack.c.h.b16 %v1152
        %v1798 = vunpack.c.l.b16 %v1153
        %v1799 = vunpack.c.h.b16 %v1153
        %v1800 = vunpack.c.l.b16 %v1154
        %v1801 = vunpack.c.h.b16 %v1154
        %v1802 = vunpack.c.l.b16 %v1155
        %v1803 = vunpack.c.h.b16 %v1155
        %v1804 = vunpack.c.l.b16 %v1156
        %v1805 = vunpack.c.h.b16 %v1156
        %v1806 = vunpack.c.l.b16 %v1157
        %v1807 = vunpack.c.h.b16 %v1157
        %v1808 = vunpack.c.l.b16 %v1158
        %v1809 = vunpack.c.h.b16 %v1158
        %v1810 = vunpack.c.l.b16 %v1159
        %v1811 = vunpack.c.h.b16 %v1159
        %v1812 = vunpack.c.l.b16 %v1160
        %v1813 = vunpack.c.h.b16 %v1160
        %v1814 = vunpack.c.l.b16 %v1161
        %v1815 = vunpack.c.h.b16 %v1161
        %v1816 = vunpack.c.l.b16 %v1162
        %v1817 = vunpack.c.h.b16 %v1162
        %v1818 = vunpack.c.l.b16 %v1163
        %v1819 = vunpack.c.h.b16 %v1163
        %v1820 = vunpack.c.l.b16 %v1164
        %v1821 = vunpack.c.h.b16 %v1164
        %v1822 = vunpack.c.l.b16 %v1165
        %v1823 = vunpack.c.h.b16 %v1165
        %v1824 = vunpack.c.l.b16 %v1166
        %v1825 = vunpack.c.h.b16 %v1166
        %v1826 = vunpack.c.l.b16 %v1167
        %v1827 = vunpack.c.h.b16 %v1167
        %v1828 = vunpack.c.l.b16 %v1168
        %v1829 = vunpack.c.h.b16 %v1168
        %v1830 = vunpack.c.l.b16 %v1169
        %v1831 = vunpack.c.h.b16 %v1169
        %v1832 = vunpack.c.l.b16 %v1170
        %v1833 = vunpack.c.h.b16 %v1170
        %v1834 = vunpack.c.l.b16 %v1171
        %v1835 = vunpack.c.h.b16 %v1171
        %v1836 = vunpack.c.l.b16 %v1172
        %v1837 = vunpack.c.h.b16 %v1172
        %v1838 = vunpack.c.l.b16 %v1173
        %v1839 = vunpack.c.h.b16 %v1173
        %v1840 = vunpack.c.l.b16 %v1174
        %v1841 = vunpack.c.h.b16 %v1174
        %v1842 = vunpack.c.l.b16 %v1175
        %v1843 = vunpack.c.h.b16 %v1175
        %v1844 = vunpack.c.l.b16 %v1176
        %v1845 = vunpack.c.h.b16 %v1176
        %v1846 = vunpack.c.l.b16 %v1177
        %v1847 = vunpack.c.h.b16 %v1177
        %v1848 = vunpack.c.l.b16 %v1178
        %v1849 = vunpack.c.h.b16 %v1178
        %v1850 = vunpack.c.l.b16 %v1179
        %v1851 = vunpack.c.h.b16 %v1179
        %v1852 = vunpack.c.l.b16 %v1180
        %v1853 = vunpack.c.h.b16 %v1180
        %v1854 = vunpack.c.l.b16 %v1181
        %v1855 = vunpack.c.h.b16 %v1181
        %v1856 = vunpack.c.l.b16 %v1182
        %v1857 = vunpack.c.h.b16 %v1182
        %v1858 = vunpack.c.l.b16 %v1183
        %v1859 = vunpack.c.h.b16 %v1183
        %v1860 = vunpack.c.l.b16 %v1184
        %v1861 = vunpack.c.h.b16 %v1184
        %v1862 = vunpack.c.l.b16 %v1185
        %v1863 = vunpack.c.h.b16 %v1185
        %v1864 = vunpack.c.l.b16 %v1186
        %v1865 = vunpack.c.h.b16 %v1186
        %v1866 = vunpack.c.l.b16 %v1187
        %v1867 = vunpack.c.h.b16 %v1187
        %v1868 = vunpack.c.l.b16 %v1188
        %v1869 = vunpack.c.h.b16 %v1188
        %v1870 = vunpack.c.l.b16 %v1189
        %v1871 = vunpack.c.h.b16 %v1189
        %v1872 = vunpack.c.l.b16 %v1190
        %v1873 = vunpack.c.h.b16 %v1190
        %v1874 = vunpack.c.l.b16 %v1191
        %v1875 = vunpack.c.h.b16 %v1191
        %v1876 = vunpack.c.l.b16 %v1192
        %v1877 = vunpack.c.h.b16 %v1192
        %v1878 = vunpack.c.l.b16 %v1193
        %v1879 = vunpack.c.h.b16 %v1193
        %v1880 = vunpack.c.l.b16 %v1194
        %v1881 = vunpack.c.h.b16 %v1194
        %v1882 = vunpack.c.l.b16 %v1195
        %v1883 = vunpack.c.h.b16 %v1195
        %v1884 = vunpack.c.l.b16 %v1196
        %v1885 = vunpack.c.h.b16 %v1196
        %v1886 = vunpack.c.l.b16 %v1197
        %v1887 = vunpack.c.h.b16 %v1197
        %v1888 = vunpack.c.l.b16 %v1198
        %v1889 = vunpack.c.h.b16 %v1198
        %v1890 = vunpack.c.l.b16 %v1199
        %v1891 = vunpack.c.h.b16 %v1199
        %v1892 = vunpack.c.l.b16 %v1200
        %v1893 = vunpack.c.h.b16 %v1200
        %v1894 = vunpack.c.l.b16 %v1201
        %v1895 = vunpack.c.h.b16 %v1201
        %v1896 = vunpack.c.l.b16 %v1202
        %v1897 = vunpack.c.h.b16 %v1202
        %v1898 = vunpack.c.l.b16 %v1203
        %v1899 = vunpack.c.h.b16 %v1203
        %v1900 = vunpack.c.l.b16 %v1204
        %v1901 = vunpack.c.h.b16 %v1204
        %v1902 = vunpack.c.l.b16 %v1205
        %v1903 = vunpack.c.h.b16 %v1205
        %v1904 = vunpack.c.l.b16 %v1206
        %v1905 = vunpack.c.h.b16 %v1206
        %v1906 = vunpack.c.l.b16 %v1207
        %v1907 = vunpack.c.h.b16 %v1207
        %v1908 = vunpack.c.l.b16 %v1208
        %v1909 = vunpack.c.h.b16 %v1208
        %v1910 = vunpack.c.l.b16 %v1209
        %v1911 = vunpack.c.h.b16 %v1209
        %v1912 = vunpack.c.l.b16 %v1210
        %v1913 = vunpack.c.h.b16 %v1210
        %v1914 = vunpack.c.l.b16 %v1211
        %v1915 = vunpack.c.h.b16 %v1211
        %v1916 = vunpack.c.l.b16 %v1212
        %v1917 = vunpack.c.h.b16 %v1212
        %v1918 = vunpack.c.l.b16 %v1213
        %v1919 = vunpack.c.h.b16 %v1213
        %v1920 = vunpack.c.l.b16 %v1214
        %v1921 = vunpack.c.h.b16 %v1214
        %v1922 = vunpack.c.l.b16 %v1215
        %v1923 = vunpack.c.h.b16 %v1215
        %v1924 = vunpack.c.l.b16 %v1216
        %v1925 = vunpack.c.h.b16 %v1216
        %v1926 = vunpack.c.l.b16 %v1217
        %v1927 = vunpack.c.h.b16 %v1217
        %v1928 = vunpack.c.l.b16 %v1218
        %v1929 = vunpack.c.h.b16 %v1218
        %v1930 = vunpack.c.l.b16 %v1219
        %v1931 = vunpack.c.h.b16 %v1219
        %v1932 = vunpack.c.l.b16 %v1220
        %v1933 = vunpack.c.h.b16 %v1220
        %v1934 = vunpack.c.l.b16 %v1221
        %v1935 = vunpack.c.h.b16 %v1221
        %v1936 = vunpack.c.l.b16 %v1222
        %v1937 = vunpack.c.h.b16 %v1222
        %v1938 = vunpack.c.l.b16 %v1223
        %v1939 = vunpack.c.h.b16 %v1223
        %v1940 = vunpack.c.l.b16 %v1224
        %v1941 = vunpack.c.h.b16 %v1224
        %v1942 = vunpack.c.l.b16 %v1225
        %v1943 = vunpack.c.h.b16 %v1225
        %v1944 = vunpack.c.l.b16 %v1226
        %v1945 = vunpack.c.h.b16 %v1226
        %v1946 = vunpack.c.l.b16 %v1227
        %v1947 = vunpack.c.h.b16 %v1227
        %v1948 = vunpack.c.l.b16 %v1228
        %v1949 = vunpack.c.h.b16 %v1228
        %v1950 = vunpack.c.l.b16 %v1229
        %v1951 = vunpack.c.h.b16 %v1229
        %v1952 = vunpack.c.l.b16 %v1230
        %v1953 = vunpack.c.h.b16 %v1230
        %v1954 = vunpack.c.l.b16 %v1231
        %v1955 = vunpack.c.h.b16 %v1231
        %v1956 = vunpack.c.l.b16 %v1232
        %v1957 = vunpack.c.h.b16 %v1232
        %v1958 = vunpack.c.l.b16 %v1233
        %v1959 = vunpack.c.h.b16 %v1233
        %v1960 = vunpack.c.l.b16 %v1234
        %v1961 = vunpack.c.h.b16 %v1234
        %v1962 = vunpack.c.l.b16 %v1235
        %v1963 = vunpack.c.h.b16 %v1235
        %v1964 = vunpack.c.l.b16 %v1236
        %v1965 = vunpack.c.h.b16 %v1236
        %v1966 = vunpack.c.l.b16 %v1237
        %v1967 = vunpack.c.h.b16 %v1237
        %v1968 = vunpack.c.l.b16 %v1238
        %v1969 = vunpack.c.h.b16 %v1238
        %v1970 = vunpack.c.l.b16 %v1239
        %v1971 = vunpack.c.h.b16 %v1239
        %v1972 = vunpack.c.l.b16 %v1240
        %v1973 = vunpack.c.h.b16 %v1240
        %v1974 = vunpack.c.l.b16 %v1241
        %v1975 = vunpack.c.h.b16 %v1241
        %v1976 = vunpack.c.l.b16 %v1242
        %v1977 = vunpack.c.h.b16 %v1242
        %v1978 = vunpack.c.l.b16 %v1243
        %v1979 = vunpack.c.h.b16 %v1243
        %v1980 = vunpack.c.l.b16 %v1244
        %v1981 = vunpack.c.h.b16 %v1244
        %v1982 = vunpack.c.l.b16 %v1245
        %v1983 = vunpack.c.h.b16 %v1245
        %v1984 = vunpack.c.l.b16 %v1246
        %v1985 = vunpack.c.h.b16 %v1246
        %v1986 = vunpack.c.l.b16 %v1247
        %v1987 = vunpack.c.h.b16 %v1247
        %v1988 = vunpack.c.l.b16 %v1248
        %v1989 = vunpack.c.h.b16 %v1248
        %v1990 = vunpack.c.l.b16 %v1249
        %v1991 = vunpack.c.h.b16 %v1249
        %v1992 = vunpack.c.l.b16 %v1250
        %v1993 = vunpack.c.h.b16 %v1250
        %v1994 = vunpack.c.l.b16 %v1251
        %v1995 = vunpack.c.h.b16 %v1251
        %v1996 = vunpack.c.l.b16 %v1252
        %v1997 = vunpack.c.h.b16 %v1252
        %v1998 = vunpack.c.l.b16 %v1253
        %v1999 = vunpack.c.h.b16 %v1253
        %v2000 = vunpack.c.l.b16 %v1254
        %v2001 = vunpack.c.h.b16 %v1254
        %v2002 = vunpack.c.l.b16 %v1255
        %v2003 = vunpack.c.h.b16 %v1255
        %v2004 = vunpack.c.l.b16 %v1256
        %v2005 = vunpack.c.h.b16 %v1256
        %v2006 = vunpack.c.l.b16 %v1257
        %v2007 = vunpack.c.h.b16 %v1257
        %v2008 = vunpack.c.l.b16 %v1258
        %v2009 = vunpack.c.h.b16 %v1258
        %v2010 = vunpack.c.l.b16 %v1259
        %v2011 = vunpack.c.h.b16 %v1259
        %v2012 = vunpack.c.l.b16 %v1260
        %v2013 = vunpack.c.h.b16 %v1260
        %v2014 = vunpack.c.l.b16 %v1261
        %v2015 = vunpack.c.h.b16 %v1261
        %v2016 = vunpack.c.l.b16 %v1262
        %v2017 = vunpack.c.h.b16 %v1262
        %v2018 = vunpack.c.l.b16 %v1263
        %v2019 = vunpack.c.h.b16 %v1263
        %v2020 = vunpack.c.l.b16 %v1264
        %v2021 = vunpack.c.h.b16 %v1264
        %v2022 = vunpack.c.l.b16 %v1265
        %v2023 = vunpack.c.h.b16 %v1265
        %v2024 = vunpack.c.l.b16 %v1266
        %v2025 = vunpack.c.h.b16 %v1266
        %v2026 = vunpack.c.l.b16 %v1267
        %v2027 = vunpack.c.h.b16 %v1267
        %v2028 = vunpack.c.l.b16 %v1268
        %v2029 = vunpack.c.h.b16 %v1268
        %v2030 = vunpack.c.l.b16 %v1269
        %v2031 = vunpack.c.h.b16 %v1269
        %v2032 = vunpack.c.l.b16 %v1270
        %v2033 = vunpack.c.h.b16 %v1270
        %v2034 = vunpack.c.l.b16 %v1271
        %v2035 = vunpack.c.h.b16 %v1271
        %v2036 = vunpack.c.l.b16 %v1272
        %v2037 = vunpack.c.h.b16 %v1272
        %v2038 = vunpack.c.l.b16 %v1273
        %v2039 = vunpack.c.h.b16 %v1273
        %v2040 = vunpack.c.l.b16 %v1274
        %v2041 = vunpack.c.h.b16 %v1274
        %v2042 = vunpack.c.l.b16 %v1275
        %v2043 = vunpack.c.h.b16 %v1275
        %v2044 = vunpack.c.l.b16 %v1276
        %v2045 = vunpack.c.h.b16 %v1276
        %v2046 = vunpack.c.l.b16 %v1277
        %v2047 = vunpack.c.h.b16 %v1277
        %v2048 = vunpack.c.l.b16 %v1278
        %v2049 = vunpack.c.h.b16 %v1278
        %v2050 = vunpack.c.l.b16 %v1279
        %v2051 = vunpack.c.h.b16 %v1279
        %v2052 = vunpack.c.l.b16 %v1280
        %v2053 = vunpack.c.h.b16 %v1280
        %v2054 = vunpack.c.l.b16 %v1281
        %v2055 = vunpack.c.h.b16 %v1281
        %v2056 = vunpack.c.l.b16 %v1282
        %v2057 = vunpack.c.h.b16 %v1282
        %v2058 = vunpack.c.l.b16 %v1283
        %v2059 = vunpack.c.h.b16 %v1283
        %v2060 = vunpack.c.l.b16 %v1284
        %v2061 = vunpack.c.h.b16 %v1284
        %v2062 = vunpack.c.l.b16 %v1285
        %v2063 = vunpack.c.h.b16 %v1285
        %v2064 = vunpack.c.l.b16 %v1286
        %v2065 = vunpack.c.h.b16 %v1286
        %v2066 = vunpack.c.l.b16 %v1287
        %v2067 = vunpack.c.h.b16 %v1287
        %v2068 = vunpack.c.l.b16 %v1288
        %v2069 = vunpack.c.h.b16 %v1288
        %v2070 = vunpack.c.l.b16 %v1289
        %v2071 = vunpack.c.h.b16 %v1289
        %v2072 = vunpack.c.l.b16 %v1290
        %v2073 = vunpack.c.h.b16 %v1290
        %v2074 = vunpack.c.l.b16 %v1291
        %v2075 = vunpack.c.h.b16 %v1291
        %v2076 = vunpack.c.l.b16 %v1292
        %v2077 = vunpack.c.h.b16 %v1292
        %v2078 = vunpack.c.l.b16 %v1293
        %v2079 = vunpack.c.h.b16 %v1293
        %v2080 = vunpack.c.l.b16 %v1294
        %v2081 = vunpack.c.h.b16 %v1294
        %v2082 = vunpack.c.l.b16 %v1295
        %v2083 = vunpack.c.h.b16 %v1295
        %v2084 = vunpack.c.l.b16 %v1296
        %v2085 = vunpack.c.h.b16 %v1296
        %v2086 = vunpack.c.l.b16 %v1297
        %v2087 = vunpack.c.h.b16 %v1297
        %v2088 = vunpack.c.l.b16 %v1298
        %v2089 = vunpack.c.h.b16 %v1298
        %v2090 = vunpack.c.l.b16 %v1299
        %v2091 = vunpack.c.h.b16 %v1299
        %v2092 = vunpack.c.l.b16 %v1300
        %v2093 = vunpack.c.h.b16 %v1300
        %v2094 = vunpack.c.l.b16 %v1301
        %v2095 = vunpack.c.h.b16 %v1301
        %v2096 = vunpack.c.l.b16 %v1302
        %v2097 = vunpack.c.h.b16 %v1302
        %v2098 = vunpack.c.l.b16 %v1303
        %v2099 = vunpack.c.h.b16 %v1303
        %v2100 = vunpack.c.l.b16 %v1304
        %v2101 = vunpack.c.h.b16 %v1304
        %v2102 = vunpack.c.l.b16 %v1305
        %v2103 = vunpack.c.h.b16 %v1305
        %v2104 = vunpack.c.l.b16 %v1306
        %v2105 = vunpack.c.h.b16 %v1306
        %v2106 = vunpack.c.l.b16 %v1307
        %v2107 = vunpack.c.h.b16 %v1307
        %v2108 = vunpack.c.l.b16 %v1308
        %v2109 = vunpack.c.h.b16 %v1308
        %v2110 = vunpack.c.l.b16 %v1309
        %v2111 = vunpack.c.h.b16 %v1309
        %v2112 = vunpack.c.l.b16 %v1310
        %v2113 = vunpack.c.h.b16 %v1310
        %v2114 = vunpack.c.l.b16 %v1311
        %v2115 = vunpack.c.h.b16 %v1311
        %v2116 = vunpack.c.l.b16 %v1312
        %v2117 = vunpack.c.h.b16 %v1312
        %v2118 = vunpack.c.l.b16 %v1313
        %v2119 = vunpack.c.h.b16 %v1313
        %v2120 = vunpack.c.l.b16 %v1314
        %v2121 = vunpack.c.h.b16 %v1314
        %v2122 = vunpack.c.l.b16 %v1315
        %v2123 = vunpack.c.h.b16 %v1315
        %v2124 = vunpack.c.l.b16 %v1316
        %v2125 = vunpack.c.h.b16 %v1316
        %v2126 = vunpack.c.l.b16 %v1317
        %v2127 = vunpack.c.h.b16 %v1317
        %v2128 = vunpack.c.l.b16 %v1318
        %v2129 = vunpack.c.h.b16 %v1318
        %v2130 = vunpack.c.l.b16 %v1319
        %v2131 = vunpack.c.h.b16 %v1319
        %v2132 = vunpack.c.l.b16 %v1320
        %v2133 = vunpack.c.h.b16 %v1320
        %v2134 = vunpack.c.l.b16 %v1321
        %v2135 = vunpack.c.h.b16 %v1321
        %v2136 = vunpack.c.l.b16 %v1322
        %v2137 = vunpack.c.h.b16 %v1322
        %v2138 = vunpack.c.l.b16 %v1323
        %v2139 = vunpack.c.h.b16 %v1323
        %v2140 = vunpack.c.l.b16 %v1324
        %v2141 = vunpack.c.h.b16 %v1324
        %v2142 = vunpack.c.l.b16 %v1325
        %v2143 = vunpack.c.h.b16 %v1325
        %v2144 = vunpack.c.l.b16 %v1326
        %v2145 = vunpack.c.h.b16 %v1326
        %v2146 = vunpack.c.l.b16 %v1327
        %v2147 = vunpack.c.h.b16 %v1327
        %v2148 = vunpack.c.l.b16 %v1328
        %v2149 = vunpack.c.h.b16 %v1328
        %v2150 = vunpack.c.l.b16 %v1329
        %v2151 = vunpack.c.h.b16 %v1329
        %v2152 = vunpack.c.l.b16 %v1330
        %v2153 = vunpack.c.h.b16 %v1330
        %v2154 = vunpack.c.l.b16 %v1331
        %v2155 = vunpack.c.h.b16 %v1331
        %v2156 = vunpack.c.l.b16 %v1332
        %v2157 = vunpack.c.h.b16 %v1332
        %v2158 = vunpack.c.l.b16 %v1333
        %v2159 = vunpack.c.h.b16 %v1333
        %v2160 = vunpack.c.l.b16 %v1334
        %v2161 = vunpack.c.h.b16 %v1334
        %v2162 = vunpack.c.l.b16 %v1335
        %v2163 = vunpack.c.h.b16 %v1335
        %v2164 = vunpack.c.l.b16 %v1336
        %v2165 = vunpack.c.h.b16 %v1336
        %v2166 = vunpack.c.l.b16 %v1337
        %v2167 = vunpack.c.h.b16 %v1337
        %v2168 = vunpack.c.l.b16 %v1338
        %v2169 = vunpack.c.h.b16 %v1338
        %v2170 = vunpack.c.l.b16 %v1339
        %v2171 = vunpack.c.h.b16 %v1339
        %v2172 = vunpack.c.l.b16 %v1340
        %v2173 = vunpack.c.h.b16 %v1340
        %v2174 = vunpack.c.l.b16 %v1341
        %v2175 = vunpack.c.h.b16 %v1341
        %v2176 = vunpack.c.l.b16 %v1342
        %v2177 = vunpack.c.h.b16 %v1342
        %v2178 = vunpack.c.l.b16 %v1343
        %v2179 = vunpack.c.h.b16 %v1343
        %v2180 = vunpack.c.l.b16 %v1344
        %v2181 = vunpack.c.h.b16 %v1344
        %v2182 = vunpack.c.l.b16 %v1345
        %v2183 = vunpack.c.h.b16 %v1345
        %v2184 = vunpack.c.l.b16 %v1346
        %v2185 = vunpack.c.h.b16 %v1346
        %v2186 = vunpack.c.l.b16 %v1347
        %v2187 = vunpack.c.h.b16 %v1347
        %v2188 = vunpack.c.l.b16 %v1348
        %v2189 = vunpack.c.h.b16 %v1348
        %v2190 = vunpack.c.l.b16 %v1349
        %v2191 = vunpack.c.h.b16 %v1349
        %v2192 = vunpack.c.l.b16 %v1350
        %v2193 = vunpack.c.h.b16 %v1350
        %v2194 = vunpack.c.l.b16 %v1351
        %v2195 = vunpack.c.h.b16 %v1351
        %v2196 = vunpack.c.l.b16 %v1352
        %v2197 = vunpack.c.h.b16 %v1352
        %v2198 = vunpack.c.l.b16 %v1353
        %v2199 = vunpack.c.h.b16 %v1353
        %v2200 = vunpack.c.l.b16 %v1354
        %v2201 = vunpack.c.h.b16 %v1354
        %v2202 = vunpack.c.l.b16 %v1355
        %v2203 = vunpack.c.h.b16 %v1355
        %v2204 = vunpack.c.l.b16 %v1356
        %v2205 = vunpack.c.h.b16 %v1356
        %v2206 = vunpack.c.l.b16 %v1357
        %v2207 = vunpack.c.h.b16 %v1357
        %v2208 = vunpack.c.l.b16 %v1358
        %v2209 = vunpack.c.h.b16 %v1358
        %v2210 = vunpack.c.l.b16 %v1359
        %v2211 = vunpack.c.h.b16 %v1359
        %v2212 = vunpack.c.l.b16 %v1360
        %v2213 = vunpack.c.h.b16 %v1360
        %v2214 = vunpack.c.l.b16 %v1361
        %v2215 = vunpack.c.h.b16 %v1361
        %v2216 = vunpack.c.l.b16 %v1362
        %v2217 = vunpack.c.h.b16 %v1362
        %v2218 = vunpack.c.l.b16 %v1363
        %v2219 = vunpack.c.h.b16 %v1363
        %v2220 = vunpack.c.l.b16 %v1364
        %v2221 = vunpack.c.h.b16 %v1364
        %v2222 = vunpack.c.l.b16 %v1365
        %v2223 = vunpack.c.h.b16 %v1365
        %v2224 = vunpack.c.l.b16 %v1366
        %v2225 = vunpack.c.h.b16 %v1366
        %v2226 = vunpack.c.l.b16 %v1367
        %v2227 = vunpack.c.h.b16 %v1367
        %v2228 = vunpack.c.l.b16 %v1368
        %v2229 = vunpack.c.h.b16 %v1368
        %v2230 = vunpack.c.l.b16 %v1369
        %v2231 = vunpack.c.h.b16 %v1369
        %v2232 = vunpack.c.l.b16 %v1370
        %v2233 = vunpack.c.h.b16 %v1370
        %v2234 = vunpack.c.l.b16 %v1371
        %v2235 = vunpack.c.h.b16 %v1371
        %v2236 = vunpack.c.l.b16 %v1372
        %v2237 = vunpack.c.h.b16 %v1372
        %v2238 = vunpack.c.l.b16 %v1373
        %v2239 = vunpack.c.h.b16 %v1373
        %v2240 = vunpack.c.l.b16 %v1374
        %v2241 = vunpack.c.h.b16 %v1374
        %v2242 = vunpack.c.l.b16 %v1375
        %v2243 = vunpack.c.h.b16 %v1375
        %v2244 = vunpack.c.l.b16 %v1376
        %v2245 = vunpack.c.h.b16 %v1376
        %v2246 = vunpack.c.l.b16 %v1377
        %v2247 = vunpack.c.h.b16 %v1377
        %v2248 = vunpack.c.l.b16 %v1378
        %v2249 = vunpack.c.h.b16 %v1378
        %v2250 = vunpack.c.l.b16 %v1379
        %v2251 = vunpack.c.h.b16 %v1379
        %v2252 = vunpack.c.l.b16 %v1380
        %v2253 = vunpack.c.h.b16 %v1380
        %v2254 = vunpack.c.l.b16 %v1381
        %v2255 = vunpack.c.h.b16 %v1381
        %v2256 = vunpack.c.l.b16 %v1382
        %v2257 = vunpack.c.h.b16 %v1382
        %v2258 = vunpack.c.l.b16 %v1383
        %v2259 = vunpack.c.h.b16 %v1383
        %v2260 = vunpack.c.l.b16 %v1384
        %v2261 = vunpack.c.h.b16 %v1384
        %v2262 = vunpack.c.l.b16 %v1385
        %v2263 = vunpack.c.h.b16 %v1385
        %v2264 = vpack.c.b16 %v1694, %v1688
        %v2265 = vpack.c.b16 %v1695, %v1689
        %v2266 = vpack.c.b16 %v1696, %v1690
        %v2267 = vpack.c.b16 %v1697, %v1691
        %v2268 = vpack.c.b16 %v1698, %v1692
        %v2269 = vpack.c.b16 %v1699, %v1693
        %v2270 = vpack.c.b16 %v1706, %v1700
        %v2271 = vpack.c.b16 %v1707, %v1701
        %v2272 = vpack.c.b16 %v1708, %v1702
        %v2273 = vpack.c.b16 %v1709, %v1703
        %v2274 = vpack.c.b16 %v1710, %v1704
        %v2275 = vpack.c.b16 %v1711, %v1705
        %v2276 = vpack.c.b16 %v1718, %v1712
        %v2277 = vpack.c.b16 %v1719, %v1713
        %v2278 = vpack.c.b16 %v1720, %v1714
        %v2279 = vpack.c.b16 %v1721, %v1715
        %v2280 = vpack.c.b16 %v1722, %v1716
        %v2281 = vpack.c.b16 %v1723, %v1717
        %v2282 = vpack.c.b16 %v1730, %v1724
        %v2283 = vpack.c.b16 %v1731, %v1725
        %v2284 = vpack.c.b16 %v1732, %v1726
        %v2285 = vpack.c.b16 %v1733, %v1727
        %v2286 = vpack.c.b16 %v1734, %v1728
        %v2287 = vpack.c.b16 %v1735, %v1729
        %v2288 = vpack.c.b16 %v1742, %v1736
        %v2289 = vpack.c.b16 %v1743, %v1737
        %v2290 = vpack.c.b16 %v1744, %v1738
        %v2291 = vpack.c.b16 %v1745, %v1739
        %v2292 = vpack.c.b16 %v1746, %v1740
        %v2293 = vpack.c.b16 %v1747, %v1741
        %v2294 = vpack.c.b16 %v1754, %v1748
        %v2295 = vpack.c.b16 %v1755, %v1749
        %v2296 = vpack.c.b16 %v1756, %v1750
        %v2297 = vpack.c.b16 %v1757, %v1751
        %v2298 = vpack.c.b16 %v1758, %v1752
        %v2299 = vpack.c.b16 %v1759, %v1753
        %v2300 = vpack.c.b16 %v1766, %v1760
        %v2301 = vpack.c.b16 %v1767, %v1761
        %v2302 = vpack.c.b16 %v1768, %v1762
        %v2303 = vpack.c.b16 %v1769, %v1763
        %v2304 = vpack.c.b16 %v1770, %v1764
        %v2305 = vpack.c.b16 %v1771, %v1765
        %v2306 = vpack.c.b16 %v1778, %v1772
        %v2307 = vpack.c.b16 %v1779, %v1773
        %v2308 = vpack.c.b16 %v1780, %v1774
        %v2309 = vpack.c.b16 %v1781, %v1775
        %v2310 = vpack.c.b16 %v1782, %v1776
        %v2311 = vpack.c.b16 %v1783, %v1777
        %v2312 = vpack.c.b16 %v1790, %v1784
        %v2313 = vpack.c.b16 %v1791, %v1785
        %v2314 = vpack.c.b16 %v1792, %v1786
        %v2315 = vpack.c.b16 %v1793, %v1787
        %v2316 = vpack.c.b16 %v1794, %v1788
        %v2317 = vpack.c.b16 %v1795, %v1789
        %v2318 = vpack.c.b16 %v1802, %v1796
        %v2319 = vpack.c.b16 %v1803, %v1797
        %v2320 = vpack.c.b16 %v1804, %v1798
        %v2321 = vpack.c.b16 %v1805, %v1799
        %v2322 = vpack.c.b16 %v1806, %v1800
        %v2323 = vpack.c.b16 %v1807, %v1801
        %v2324 = vpack.c.b16 %v1814, %v1808
        %v2325 = vpack.c.b16 %v1815, %v1809
        %v2326 = vpack.c.b16 %v1816, %v1810
        %v2327 = vpack.c.b16 %v1817, %v1811
        %v2328 = vpack.c.b16 %v1818, %v1812
        %v2329 = vpack.c.b16 %v1819, %v1813
        %v2330 = vpack.c.b16 %v1826, %v1820
        %v2331 = vpack.c.b16 %v1827, %v1821
        %v2332 = vpack.c.b16 %v1828, %v1822
        %v2333 = vpack.c.b16 %v1829, %v1823
        %v2334 = vpack.c.b16 %v1830, %v1824
        %v2335 = vpack.c.b16 %v1831, %v1825
        %v2336 = vpack.c.b16 %v1838, %v1832
        %v2337 = vpack.c.b16 %v1839, %v1833
        %v2338 = vpack.c.b16 %v1840, %v1834
        %v2339 = vpack.c.b16 %v1841, %v1835
        %v2340 = vpack.c.b16 %v1842, %v1836
        %v2341 = vpack.c.b16 %v1843, %v1837
        %v2342 = vpack.c.b16 %v1850, %v1844
        %v2343 = vpack.c.b16 %v1851, %v1845
        %v2344 = vpack.c.b16 %v1852, %v1846
        %v2345 = vpack.c.b16 %v1853, %v1847
        %v2346 = vpack.c.b16 %v1854, %v1848
        %v2347 = vpack.c.b16 %v1855, %v1849
        %v2348 = vpack.c.b16 %v1862, %v1856
        %v2349 = vpack.c.b16 %v1863, %v1857
        %v2350 = vpack.c.b16 %v1864, %v1858
        %v2351 = vpack.c.b16 %v1865, %v1859
        %v2352 = vpack.c.b16 %v1866, %v1860
        %v2353 = vpack.c.b16 %v1867, %v1861
        %v2354 = vpack.c.b16 %v1874, %v1868
        %v2355 = vpack.c.b16 %v1875, %v1869
        %v2356 = vpack.c.b16 %v1876, %v1870
        %v2357 = vpack.c.b16 %v1877, %v1871
        %v2358 = vpack.c.b16 %v1878, %v1872
        %v2359 = vpack.c.b16 %v1879, %v1873
        %v2360 = vpack.c.b16 %v1886, %v1880
        %v2361 = vpack.c.b16 %v1887, %v1881
        %v2362 = vpack.c.b16 %v1888, %v1882
        %v2363 = vpack.c.b16 %v1889, %v1883
        %v2364 = vpack.c.b16 %v1890, %v1884
        %v2365 = vpack.c.b16 %v1891, %v1885
        %v2366 = vpack.c.b16 %v1898, %v1892
        %v2367 = vpack.c.b16 %v1899, %v1893
        %v2368 = vpack.c.b16 %v1900, %v1894
        %v2369 = vpack.c.b16 %v1901, %v1895
        %v2370 = vpack.c.b16 %v1902, %v1896
        %v2371 = vpack.c.b16 %v1903, %v1897
        %v2372 = vpack.c.b16 %v1910, %v1904
        %v2373 = vpack.c.b16 %v1911, %v1905
        %v2374 = vpack.c.b16 %v1912, %v1906
        %v2375 = vpack.c.b16 %v1913, %v1907
        %v2376 = vpack.c.b16 %v1914, %v1908
        %v2377 = vpack.c.b16 %v1915, %v1909
        %v2378 = vpack.c.b16 %v1922, %v1916
        %v2379 = vpack.c.b16 %v1923, %v1917
        %v2380 = vpack.c.b16 %v1924, %v1918
        %v2381 = vpack.c.b16 %v1925, %v1919
        %v2382 = vpack.c.b16 %v1926, %v1920
        %v2383 = vpack.c.b16 %v1927, %v1921
        %v2384 = vpack.c.b16 %v1934, %v1928
        %v2385 = vpack.c.b16 %v1935, %v1929
        %v2386 = vpack.c.b16 %v1936, %v1930
        %v2387 = vpack.c.b16 %v1937, %v1931
        %v2388 = vpack.c.b16 %v1938, %v1932
        %v2389 = vpack.c.b16 %v1939, %v1933
        %v2390 = vpack.c.b16 %v1946, %v1940
        %v2391 = vpack.c.b16 %v1947, %v1941
        %v2392 = vpack.c.b16 %v1948, %v1942
        %v2393 = vpack.c.b16 %v1949, %v1943
        %v2394 = vpack.c.b16 %v1950, %v1944
        %v2395 = vpack.c.b16 %v1951, %v1945
        %v2396 = vpack.c.b16 %v1958, %v1952
        %v2397 = vpack.c.b16 %v1959, %v1953
        %v2398 = vpack.c.b16 %v1960, %v1954
        %v2399 = vpack.c.b16 %v1961, %v1955
        %v2400 = vpack.c.b16 %v1962, %v1956
        %v2401 = vpack.c.b16 %v1963, %v1957
        %v2402 = vpack.c.b16 %v1970, %v1964
        %v2403 = vpack.c.b16 %v1971, %v1965
        %v2404 = vpack.c.b16 %v1972, %v1966
        %v2405 = vpack.c.b16 %v1973, %v1967
        %v2406 = vpack.c.b16 %v1974, %v1968
        %v2407 = vpack.c.b16 %v1975, %v1969
        %v2408 = vpack.c.b16 %v1982, %v1976
        %v2409 = vpack.c.b16 %v1983, %v1977
        %v2410 = vpack.c.b16 %v1984, %v1978
        %v2411 = vpack.c.b16 %v1985, %v1979
        %v2412 = vpack.c.b16 %v1986, %v1980
        %v2413 = vpack.c.b16 %v1987, %v1981
        %v2414 = vpack.c.b16 %v1994, %v1988
        %v2415 = vpack.c.b16 %v1995, %v1989
        %v2416 = vpack.c.b16 %v1996, %v1990
        %v2417 = vpack.c.b16 %v1997, %v1991
        %v2418 = vpack.c.b16 %v1998, %v1992
        %v2419 = vpack.c.b16 %v1999, %v1993
        %v2420 = vpack.c.b16 %v2006, %v2000
        %v2421 = vpack.c.b16 %v2007, %v2001
        %v2422 = vpack.c.b16 %v2008, %v2002
        %v2423 = vpack.c.b16 %v2009, %v2003
        %v2424 = vpack.c.b16 %v2010, %v2004
        %v2425 = vpack.c.b16 %v2011, %v2005
        %v2426 = vpack.c.b16 %v2018, %v2012
        %v2427 = vpack.c.b16 %v2019, %v2013
        %v2428 = vpack.c.b16 %v2020, %v2014
        %v2429 = vpack.c.b16 %v2021, %v2015
        %v2430 = vpack.c.b16 %v2022, %v2016
        %v2431 = vpack.c.b16 %v2023, %v2017
        %v2432 = vpack.c.b16 %v2030, %v2024
        %v2433 = vpack.c.b16 %v2031, %v2025
        %v2434 = vpack.c.b16 %v2032, %v2026
        %v2435 = vpack.c.b16 %v2033, %v2027
        %v2436 = vpack.c.b16 %v2034, %v2028
        %v2437 = vpack.c.b16 %v2035, %v2029
        %v2438 = vpack.c.b16 %v2042, %v2036
        %v2439 = vpack.c.b16 %v2043, %v2037
        %v2440 = vpack.c.b16 %v2044, %v2038
        %v2441 = vpack.c.b16 %v2045, %v2039
        %v2442 = vpack.c.b16 %v2046, %v2040
        %v2443 = vpack.c.b16 %v2047, %v2041
        %v2444 = vpack.c.b16 %v2054, %v2048
        %v2445 = vpack.c.b16 %v2055, %v2049
        %v2446 = vpack.c.b16 %v2056, %v2050
        %v2447 = vpack.c.b16 %v2057, %v2051
        %v2448 = vpack.c.b16 %v2058, %v2052
        %v2449 = vpack.c.b16 %v2059, %v2053
        %v2450 = vpack.c.b16 %v2066, %v2060
        %v2451 = vpack.c.b16 %v2067, %v2061
        %v2452 = vpack.c.b16 %v2068, %v2062
        %v2453 = vpack.c.b16 %v2069, %v2063
        %v2454 = vpack.c.b16 %v2070, %v2064
        %v2455 = vpack.c.b16 %v2071, %v2065
        %v2456 = vpack.c.b16 %v2078, %v2072
        %v2457 = vpack.c.b16 %v2079, %v2073
        %v2458 = vpack.c.b16 %v2080, %v2074
        %v2459 = vpack.c.b16 %v2081, %v2075
        %v2460 = vpack.c.b16 %v2082, %v2076
        %v2461 = vpack.c.b16 %v2083, %v2077
        %v2462 = vpack.c.b16 %v2090, %v2084
        %v2463 = vpack.c.b16 %v2091, %v2085
        %v2464 = vpack.c.b16 %v2092, %v2086
        %v2465 = vpack.c.b16 %v2093, %v2087
        %v2466 = vpack.c.b16 %v2094, %v2088
        %v2467 = vpack.c.b16 %v2095, %v2089
        %v2468 = vpack.c.b16 %v2102, %v2096
        %v2469 = vpack.c.b16 %v2103, %v2097
        %v2470 = vpack.c.b16 %v2104, %v2098
        %v2471 = vpack.c.b16 %v2105, %v2099
        %v2472 = vpack.c.b16 %v2106, %v2100
        %v2473 = vpack.c.b16 %v2107, %v2101
        %v2474 = vpack.c.b16 %v2114, %v2108
        %v2475 = vpack.c.b16 %v2115, %v2109
        %v2476 = vpack.c.b16 %v2116, %v2110
        %v2477 = vpack.c.b16 %v2117, %v2111
        %v2478 = vpack.c.b16 %v2118, %v2112
        %v2479 = vpack.c.b16 %v2119, %v2113
        %v2480 = vpack.c.b16 %v2126, %v2120
        %v2481 = vpack.c.b16 %v2127, %v2121
        %v2482 = vpack.c.b16 %v2128, %v2122
        %v2483 = vpack.c.b16 %v2129, %v2123
        %v2484 = vpack.c.b16 %v2130, %v2124
        %v2485 = vpack.c.b16 %v2131, %v2125
        %v2486 = vpack.c.b16 %v2138, %v2132
        %v2487 = vpack.c.b16 %v2139, %v2133
        %v2488 = vpack.c.b16 %v2140, %v2134
        %v2489 = vpack.c.b16 %v2141, %v2135
        %v2490 = vpack.c.b16 %v2142, %v2136
        %v2491 = vpack.c.b16 %v2143, %v2137
        %v2492 = vpack.c.b16 %v2150, %v2144
        %v2493 = vpack.c.b16 %v2151, %v2145
        %v2494 = vpack.c.b16 %v2152, %v2146
        %v2495 = vpack.c.b16 %v2153, %v2147
        %v2496 = vpack.c.b16 %v2154, %v2148
        %v2497 = vpack.c.b16 %v2155, %v2149
        %v2498 = vpack.c.b16 %v2162, %v2156
        %v2499 = vpack.c.b16 %v2163, %v2157
        %v2500 = vpack.c.b16 %v2164, %v2158
        %v2501 = vpack.c.b16 %v2165, %v2159
        %v2502 = vpack.c.b16 %v2166, %v2160
        %v2503 = vpack.c.b16 %v2167, %v2161
        %v2504 = vpack.c.b16 %v2174, %v2168
        %v2505 = vpack.c.b16 %v2175, %v2169
        %v2506 = vpack.c.b16 %v2176, %v2170
        %v2507 = vpack.c.b16 %v2177, %v2171
        %v2508 = vpack.c.b16 %v2178, %v2172
        %v2509 = vpack.c.b16 %v2179, %v2173
        %v2510 = vpack.c.b16 %v2186, %v2180
        %v2511 = vpack.c.b16 %v2187, %v2181
        %v2512 = vpack.c.b16 %v2188, %v2182
        %v2513 = vpack.c.b16 %v2189, %v2183
        %v2514 = vpack.c.b16 %v2190, %v2184
        %v2515 = vpack.c.b16 %v2191, %v2185
        %v2516 = vpack.c.b16 %v2198, %v2192
        %v2517 = vpack.c.b16 %v2199, %v2193
        %v2518 = vpack.c.b16 %v2200, %v2194
        %v2519 = vpack.c.b16 %v2201, %v2195
        %v2520 = vpack.c.b16 %v2202, %v2196
        %v2521 = vpack.c.b16 %v2203, %v2197
        %v2522 = vpack.c.b16 %v2210, %v2204
        %v2523 = vpack.c.b16 %v2211, %v2205
        %v2524 = vpack.c.b16 %v2212, %v2206
        %v2525 = vpack.c.b16 %v2213, %v2207
        %v2526 = vpack.c.b16 %v2214, %v2208
        %v2527 = vpack.c.b16 %v2215, %v2209
        %v2528 = vpack.c.b16 %v2222, %v2216
        %v2529 = vpack.c.b16 %v2223, %v2217
        %v2530 = vpack.c.b16 %v2224, %v2218
        %v2531 = vpack.c.b16 %v2225, %v2219
        %v2532 = vpack.c.b16 %v2226, %v2220
        %v2533 = vpack.c.b16 %v2227, %v2221
        %v2534 = vpack.c.b16 %v2234, %v2228
        %v2535 = vpack.c.b16 %v2235, %v2229
        %v2536 = vpack.c.b16 %v2236, %v2230
        %v2537 = vpack.c.b16 %v2237, %v2231
        %v2538 = vpack.c.b16 %v2238, %v2232
        %v2539 = vpack.c.b16 %v2239, %v2233
        %v2540 = vpack.c.b16 %v2246, %v2240
        %v2541 = vpack.c.b16 %v2247, %v2241
        %v2542 = vpack.c.b16 %v2248, %v2242
        %v2543 = vpack.c.b16 %v2249, %v2243
        %v2544 = vpack.c.b16 %v2250, %v2244
        %v2545 = vpack.c.b16 %v2251, %v2245
        %v2546 = vpack.c.b16 %v2258, %v2252
        %v2547 = vpack.c.b16 %v2259, %v2253
        %v2548 = vpack.c.b16 %v2260, %v2254
        %v2549 = vpack.c.b16 %v2261, %v2255
        %v2550 = vpack.c.b16 %v2262, %v2256
        %v2551 = vpack.c.b16 %v2263, %v2257
        %2840 = vmatpush.bf16.msra.mxu0 %v2306
        %2841 = vmatpush.bf16.msra.mxu0 %v2300
        %2842 = vmatpush.bf16.msra.mxu0 %v2294
        %2843 = vmatpush.bf16.msra.mxu0 %v2288
        %2844 = vmatpush.bf16.msra.mxu0 %v2282
        %2845 = vmatpush.bf16.msra.mxu0 %v2276
        %2846 = vmatpush.bf16.msra.mxu0 %v2270
        %2847 = vmatpush.bf16.msra.mxu0 %v2264
        %2848 = vmatmul.bf16.gmra.mxu0 %v1086
        %v2849 = vpop.f32.mrf.mxu0
        %v2850 = vadd.f32 %v1388, %v2849
        %v2851 = vpop.f32.mrf.mxu0
        %v2852 = vadd.f32 %v1388, %v2851
        %2853 = vmatmul.bf16.gmra.mxu0 %v1092
        %v2854 = vpop.f32.mrf.mxu0
        %v2855 = vadd.f32 %v1388, %v2854
        %v2856 = vpop.f32.mrf.mxu0
        %v2857 = vadd.f32 %v1388, %v2856
        %2858 = vdwg.mxu0
        %2859 = vmatpush.bf16.msra.mxu0 %v2354
        %2860 = vmatpush.bf16.msra.mxu0 %v2348
        %2861 = vmatpush.bf16.msra.mxu0 %v2342
        %2862 = vmatpush.bf16.msra.mxu0 %v2336
        %2863 = vmatpush.bf16.msra.mxu0 %v2330
        %2864 = vmatpush.bf16.msra.mxu0 %v2324
        %2865 = vmatpush.bf16.msra.mxu0 %v2318
        %2866 = vmatpush.bf16.msra.mxu0 %v2312
        %2867 = vmatmul.bf16.gmra.mxu0 %v1087
        %v2868 = vpop.f32.mrf.mxu0
        %v2869 = vadd.f32 %v2850, %v2868
        %v2870 = vpop.f32.mrf.mxu0
        %v2871 = vadd.f32 %v2852, %v2870
        %2872 = vmatmul.bf16.gmra.mxu0 %v1093
        %v2873 = vpop.f32.mrf.mxu0
        %v2874 = vadd.f32 %v2855, %v2873
        %v2875 = vpop.f32.mrf.mxu0
        %v2876 = vadd.f32 %v2857, %v2875
        %2877 = vdwg.mxu0
        %2878 = vmatpush.bf16.msra.mxu0 %v2402
        %2879 = vmatpush.bf16.msra.mxu0 %v2396
        %2880 = vmatpush.bf16.msra.mxu0 %v2390
        %2881 = vmatpush.bf16.msra.mxu0 %v2384
        %2882 = vmatpush.bf16.msra.mxu0 %v2378
        %2883 = vmatpush.bf16.msra.mxu0 %v2372
        %2884 = vmatpush.bf16.msra.mxu0 %v2366
        %2885 = vmatpush.bf16.msra.mxu0 %v2360
        %2886 = vmatmul.bf16.gmra.mxu0 %v1088
        %v2887 = vpop.f32.mrf.mxu0
        %v2888 = vadd.f32 %v2869, %v2887
        %v2889 = vpop.f32.mrf.mxu0
        %v2890 = vadd.f32 %v2871, %v2889
        %2891 = vmatmul.bf16.gmra.mxu0 %v1094
        %v2892 = vpop.f32.mrf.mxu0
        %v2893 = vadd.f32 %v2874, %v2892
        %v2894 = vpop.f32.mrf.mxu0
        %v2895 = vadd.f32 %v2876, %v2894
        %2896 = vdwg.mxu0
        %2897 = vmatpush.bf16.msra.mxu0 %v2450
        %2898 = vmatpush.bf16.msra.mxu0 %v2444
        %2899 = vmatpush.bf16.msra.mxu0 %v2438
        %2900 = vmatpush.bf16.msra.mxu0 %v2432
        %2901 = vmatpush.bf16.msra.mxu0 %v2426
        %2902 = vmatpush.bf16.msra.mxu0 %v2420
        %2903 = vmatpush.bf16.msra.mxu0 %v2414
        %2904 = vmatpush.bf16.msra.mxu0 %v2408
        %2905 = vmatmul.bf16.gmra.mxu0 %v1089
        %v2906 = vpop.f32.mrf.mxu0
        %v2907 = vadd.f32 %v2888, %v2906
        %v2908 = vpop.f32.mrf.mxu0
        %v2909 = vadd.f32 %v2890, %v2908
        %2910 = vmatmul.bf16.gmra.mxu0 %v1095
        %v2911 = vpop.f32.mrf.mxu0
        %v2912 = vadd.f32 %v2893, %v2911
        %v2913 = vpop.f32.mrf.mxu0
        %v2914 = vadd.f32 %v2895, %v2913
        %2915 = vdwg.mxu0
        %2916 = vmatpush.bf16.msra.mxu0 %v2498
        %2917 = vmatpush.bf16.msra.mxu0 %v2492
        %2918 = vmatpush.bf16.msra.mxu0 %v2486
        %2919 = vmatpush.bf16.msra.mxu0 %v2480
        %2920 = vmatpush.bf16.msra.mxu0 %v2474
        %2921 = vmatpush.bf16.msra.mxu0 %v2468
        %2922 = vmatpush.bf16.msra.mxu0 %v2462
        %2923 = vmatpush.bf16.msra.mxu0 %v2456
        %2924 = vmatmul.bf16.gmra.mxu0 %v1090
        %v2925 = vpop.f32.mrf.mxu0
        %v2926 = vadd.f32 %v2907, %v2925
        %v2927 = vpop.f32.mrf.mxu0
        %v2928 = vadd.f32 %v2909, %v2927
        %2929 = vmatmul.bf16.gmra.mxu0 %v1096
        %v2930 = vpop.f32.mrf.mxu0
        %v2931 = vadd.f32 %v2912, %v2930
        %v2932 = vpop.f32.mrf.mxu0
        %v2933 = vadd.f32 %v2914, %v2932
        %2934 = vdwg.mxu0
        %2935 = vmatpush.bf16.msra.mxu0 %v2546
        %2936 = vmatpush.bf16.msra.mxu0 %v2540
        %2937 = vmatpush.bf16.msra.mxu0 %v2534
        %2938 = vmatpush.bf16.msra.mxu0 %v2528
        %2939 = vmatpush.bf16.msra.mxu0 %v2522
        %2940 = vmatpush.bf16.msra.mxu0 %v2516
        %2941 = vmatpush.bf16.msra.mxu0 %v2510
        %2942 = vmatpush.bf16.msra.mxu0 %v2504
        %2943 = vmatmul.bf16.gmra.mxu0 %v1091
        %v2944 = vpop.f32.mrf.mxu0
        %v2945 = vadd.f32 %v2926, %v2944
        %v2946 = vpop.f32.mrf.mxu0
        %v2947 = vadd.f32 %v2928, %v2946
        %2948 = vmatmul.bf16.gmra.mxu0 %v1097
        %v2949 = vpop.f32.mrf.mxu0
        %v2950 = vadd.f32 %v2931, %v2949
        %v2951 = vpop.f32.mrf.mxu0
        %v2952 = vadd.f32 %v2933, %v2951
        %2953 = vdwg.mxu0
        %2954 = vmatpush.bf16.msra.mxu0 %v2307
        %2955 = vmatpush.bf16.msra.mxu0 %v2301
        %2956 = vmatpush.bf16.msra.mxu0 %v2295
        %2957 = vmatpush.bf16.msra.mxu0 %v2289
        %2958 = vmatpush.bf16.msra.mxu0 %v2283
        %2959 = vmatpush.bf16.msra.mxu0 %v2277
        %2960 = vmatpush.bf16.msra.mxu0 %v2271
        %2961 = vmatpush.bf16.msra.mxu0 %v2265
        %2962 = vmatmul.bf16.gmra.mxu0 %v1086
        %v2963 = vpop.f32.mrf.mxu0
        %v2964 = vadd.f32 %v1389, %v2963
        %v2965 = vpop.f32.mrf.mxu0
        %v2966 = vadd.f32 %v1389, %v2965
        %2967 = vmatmul.bf16.gmra.mxu0 %v1092
        %v2968 = vpop.f32.mrf.mxu0
        %v2969 = vadd.f32 %v1389, %v2968
        %v2970 = vpop.f32.mrf.mxu0
        %v2971 = vadd.f32 %v1389, %v2970
        %2972 = vdwg.mxu0
        %2973 = vmatpush.bf16.msra.mxu0 %v2355
        %2974 = vmatpush.bf16.msra.mxu0 %v2349
        %2975 = vmatpush.bf16.msra.mxu0 %v2343
        %2976 = vmatpush.bf16.msra.mxu0 %v2337
        %2977 = vmatpush.bf16.msra.mxu0 %v2331
        %2978 = vmatpush.bf16.msra.mxu0 %v2325
        %2979 = vmatpush.bf16.msra.mxu0 %v2319
        %2980 = vmatpush.bf16.msra.mxu0 %v2313
        %2981 = vmatmul.bf16.gmra.mxu0 %v1087
        %v2982 = vpop.f32.mrf.mxu0
        %v2983 = vadd.f32 %v2964, %v2982
        %v2984 = vpop.f32.mrf.mxu0
        %v2985 = vadd.f32 %v2966, %v2984
        %2986 = vmatmul.bf16.gmra.mxu0 %v1093
        %v2987 = vpop.f32.mrf.mxu0
        %v2988 = vadd.f32 %v2969, %v2987
        %v2989 = vpop.f32.mrf.mxu0
        %v2990 = vadd.f32 %v2971, %v2989
        %2991 = vdwg.mxu0
        %2992 = vmatpush.bf16.msra.mxu0 %v2403
        %2993 = vmatpush.bf16.msra.mxu0 %v2397
        %2994 = vmatpush.bf16.msra.mxu0 %v2391
        %2995 = vmatpush.bf16.msra.mxu0 %v2385
        %2996 = vmatpush.bf16.msra.mxu0 %v2379
        %2997 = vmatpush.bf16.msra.mxu0 %v2373
        %2998 = vmatpush.bf16.msra.mxu0 %v2367
        %2999 = vmatpush.bf16.msra.mxu0 %v2361
        %3000 = vmatmul.bf16.gmra.mxu0 %v1088
        %v3001 = vpop.f32.mrf.mxu0
        %v3002 = vadd.f32 %v2983, %v3001
        %v3003 = vpop.f32.mrf.mxu0
        %v3004 = vadd.f32 %v2985, %v3003
        %3005 = vmatmul.bf16.gmra.mxu0 %v1094
        %v3006 = vpop.f32.mrf.mxu0
        %v3007 = vadd.f32 %v2988, %v3006
        %v3008 = vpop.f32.mrf.mxu0
        %v3009 = vadd.f32 %v2990, %v3008
        %3010 = vdwg.mxu0
        %3011 = vmatpush.bf16.msra.mxu0 %v2451
        %3012 = vmatpush.bf16.msra.mxu0 %v2445
        %3013 = vmatpush.bf16.msra.mxu0 %v2439
        %3014 = vmatpush.bf16.msra.mxu0 %v2433
        %3015 = vmatpush.bf16.msra.mxu0 %v2427
        %3016 = vmatpush.bf16.msra.mxu0 %v2421
        %3017 = vmatpush.bf16.msra.mxu0 %v2415
        %3018 = vmatpush.bf16.msra.mxu0 %v2409
        %3019 = vmatmul.bf16.gmra.mxu0 %v1089
        %v3020 = vpop.f32.mrf.mxu0
        %v3021 = vadd.f32 %v3002, %v3020
        %v3022 = vpop.f32.mrf.mxu0
        %v3023 = vadd.f32 %v3004, %v3022
        %3024 = vmatmul.bf16.gmra.mxu0 %v1095
        %v3025 = vpop.f32.mrf.mxu0
        %v3026 = vadd.f32 %v3007, %v3025
        %v3027 = vpop.f32.mrf.mxu0
        %v3028 = vadd.f32 %v3009, %v3027
        %3029 = vdwg.mxu0
        %3030 = vmatpush.bf16.msra.mxu0 %v2499
        %3031 = vmatpush.bf16.msra.mxu0 %v2493
        %3032 = vmatpush.bf16.msra.mxu0 %v2487
        %3033 = vmatpush.bf16.msra.mxu0 %v2481
        %3034 = vmatpush.bf16.msra.mxu0 %v2475
        %3035 = vmatpush.bf16.msra.mxu0 %v2469
        %3036 = vmatpush.bf16.msra.mxu0 %v2463
        %3037 = vmatpush.bf16.msra.mxu0 %v2457
        %3038 = vmatmul.bf16.gmra.mxu0 %v1090
        %v3039 = vpop.f32.mrf.mxu0
        %v3040 = vadd.f32 %v3021, %v3039
        %v3041 = vpop.f32.mrf.mxu0
        %v3042 = vadd.f32 %v3023, %v3041
        %3043 = vmatmul.bf16.gmra.mxu0 %v1096
        %v3044 = vpop.f32.mrf.mxu0
        %v3045 = vadd.f32 %v3026, %v3044
        %v3046 = vpop.f32.mrf.mxu0
        %v3047 = vadd.f32 %v3028, %v3046
        %3048 = vdwg.mxu0
        %3049 = vmatpush.bf16.msra.mxu0 %v2547
        %3050 = vmatpush.bf16.msra.mxu0 %v2541
        %3051 = vmatpush.bf16.msra.mxu0 %v2535
        %3052 = vmatpush.bf16.msra.mxu0 %v2529
        %3053 = vmatpush.bf16.msra.mxu0 %v2523
        %3054 = vmatpush.bf16.msra.mxu0 %v2517
        %3055 = vmatpush.bf16.msra.mxu0 %v2511
        %3056 = vmatpush.bf16.msra.mxu0 %v2505
        %3057 = vmatmul.bf16.gmra.mxu0 %v1091
        %v3058 = vpop.f32.mrf.mxu0
        %v3059 = vadd.f32 %v3040, %v3058
        %v3060 = vpop.f32.mrf.mxu0
        %v3061 = vadd.f32 %v3042, %v3060
        %3062 = vmatmul.bf16.gmra.mxu0 %v1097
        %v3063 = vpop.f32.mrf.mxu0
        %v3064 = vadd.f32 %v3045, %v3063
        %v3065 = vpop.f32.mrf.mxu0
        %v3066 = vadd.f32 %v3047, %v3065
        %3067 = vdwg.mxu0
        %3068 = vmatpush.bf16.msra.mxu0 %v2308
        %3069 = vmatpush.bf16.msra.mxu0 %v2302
        %3070 = vmatpush.bf16.msra.mxu0 %v2296
        %3071 = vmatpush.bf16.msra.mxu0 %v2290
        %3072 = vmatpush.bf16.msra.mxu0 %v2284
        %3073 = vmatpush.bf16.msra.mxu0 %v2278
        %3074 = vmatpush.bf16.msra.mxu0 %v2272
        %3075 = vmatpush.bf16.msra.mxu0 %v2266
        %3076 = vmatmul.bf16.gmra.mxu0 %v1086
        %v3077 = vpop.f32.mrf.mxu0
        %v3078 = vadd.f32 %v1390, %v3077
        %v3079 = vpop.f32.mrf.mxu0
        %v3080 = vadd.f32 %v1390, %v3079
        %3081 = vmatmul.bf16.gmra.mxu0 %v1092
        %v3082 = vpop.f32.mrf.mxu0
        %v3083 = vadd.f32 %v1390, %v3082
        %v3084 = vpop.f32.mrf.mxu0
        %v3085 = vadd.f32 %v1390, %v3084
        %3086 = vdwg.mxu0
        %3087 = vmatpush.bf16.msra.mxu0 %v2356
        %3088 = vmatpush.bf16.msra.mxu0 %v2350
        %3089 = vmatpush.bf16.msra.mxu0 %v2344
        %3090 = vmatpush.bf16.msra.mxu0 %v2338
        %3091 = vmatpush.bf16.msra.mxu0 %v2332
        %3092 = vmatpush.bf16.msra.mxu0 %v2326
        %3093 = vmatpush.bf16.msra.mxu0 %v2320
        %3094 = vmatpush.bf16.msra.mxu0 %v2314
        %3095 = vmatmul.bf16.gmra.mxu0 %v1087
        %v3096 = vpop.f32.mrf.mxu0
        %v3097 = vadd.f32 %v3078, %v3096
        %v3098 = vpop.f32.mrf.mxu0
        %v3099 = vadd.f32 %v3080, %v3098
        %3100 = vmatmul.bf16.gmra.mxu0 %v1093
        %v3101 = vpop.f32.mrf.mxu0
        %v3102 = vadd.f32 %v3083, %v3101
        %v3103 = vpop.f32.mrf.mxu0
        %v3104 = vadd.f32 %v3085, %v3103
        %3105 = vdwg.mxu0
        %3106 = vmatpush.bf16.msra.mxu0 %v2404
        %3107 = vmatpush.bf16.msra.mxu0 %v2398
        %3108 = vmatpush.bf16.msra.mxu0 %v2392
        %3109 = vmatpush.bf16.msra.mxu0 %v2386
        %3110 = vmatpush.bf16.msra.mxu0 %v2380
        %3111 = vmatpush.bf16.msra.mxu0 %v2374
        %3112 = vmatpush.bf16.msra.mxu0 %v2368
        %3113 = vmatpush.bf16.msra.mxu0 %v2362
        %3114 = vmatmul.bf16.gmra.mxu0 %v1088
        %v3115 = vpop.f32.mrf.mxu0
        %v3116 = vadd.f32 %v3097, %v3115
        %v3117 = vpop.f32.mrf.mxu0
        %v3118 = vadd.f32 %v3099, %v3117
        %3119 = vmatmul.bf16.gmra.mxu0 %v1094
        %v3120 = vpop.f32.mrf.mxu0
        %v3121 = vadd.f32 %v3102, %v3120
        %v3122 = vpop.f32.mrf.mxu0
        %v3123 = vadd.f32 %v3104, %v3122
        %3124 = vdwg.mxu0
        %3125 = vmatpush.bf16.msra.mxu0 %v2452
        %3126 = vmatpush.bf16.msra.mxu0 %v2446
        %3127 = vmatpush.bf16.msra.mxu0 %v2440
        %3128 = vmatpush.bf16.msra.mxu0 %v2434
        %3129 = vmatpush.bf16.msra.mxu0 %v2428
        %3130 = vmatpush.bf16.msra.mxu0 %v2422
        %3131 = vmatpush.bf16.msra.mxu0 %v2416
        %3132 = vmatpush.bf16.msra.mxu0 %v2410
        %3133 = vmatmul.bf16.gmra.mxu0 %v1089
        %v3134 = vpop.f32.mrf.mxu0
        %v3135 = vadd.f32 %v3116, %v3134
        %v3136 = vpop.f32.mrf.mxu0
        %v3137 = vadd.f32 %v3118, %v3136
        %3138 = vmatmul.bf16.gmra.mxu0 %v1095
        %v3139 = vpop.f32.mrf.mxu0
        %v3140 = vadd.f32 %v3121, %v3139
        %v3141 = vpop.f32.mrf.mxu0
        %v3142 = vadd.f32 %v3123, %v3141
        %3143 = vdwg.mxu0
        %3144 = vmatpush.bf16.msra.mxu0 %v2500
        %3145 = vmatpush.bf16.msra.mxu0 %v2494
        %3146 = vmatpush.bf16.msra.mxu0 %v2488
        %3147 = vmatpush.bf16.msra.mxu0 %v2482
        %3148 = vmatpush.bf16.msra.mxu0 %v2476
        %3149 = vmatpush.bf16.msra.mxu0 %v2470
        %3150 = vmatpush.bf16.msra.mxu0 %v2464
        %3151 = vmatpush.bf16.msra.mxu0 %v2458
        %3152 = vmatmul.bf16.gmra.mxu0 %v1090
        %v3153 = vpop.f32.mrf.mxu0
        %v3154 = vadd.f32 %v3135, %v3153
        %v3155 = vpop.f32.mrf.mxu0
        %v3156 = vadd.f32 %v3137, %v3155
        %3157 = vmatmul.bf16.gmra.mxu0 %v1096
        %v3158 = vpop.f32.mrf.mxu0
        %v3159 = vadd.f32 %v3140, %v3158
        %v3160 = vpop.f32.mrf.mxu0
        %v3161 = vadd.f32 %v3142, %v3160
        %3162 = vdwg.mxu0
        %3163 = vmatpush.bf16.msra.mxu0 %v2548
        %3164 = vmatpush.bf16.msra.mxu0 %v2542
        %3165 = vmatpush.bf16.msra.mxu0 %v2536
        %3166 = vmatpush.bf16.msra.mxu0 %v2530
        %3167 = vmatpush.bf16.msra.mxu0 %v2524
        %3168 = vmatpush.bf16.msra.mxu0 %v2518
        %3169 = vmatpush.bf16.msra.mxu0 %v2512
        %3170 = vmatpush.bf16.msra.mxu0 %v2506
        %3171 = vmatmul.bf16.gmra.mxu0 %v1091
        %v3172 = vpop.f32.mrf.mxu0
        %v3173 = vadd.f32 %v3154, %v3172
        %v3174 = vpop.f32.mrf.mxu0
        %v3175 = vadd.f32 %v3156, %v3174
        %3176 = vmatmul.bf16.gmra.mxu0 %v1097
        %v3177 = vpop.f32.mrf.mxu0
        %v3178 = vadd.f32 %v3159, %v3177
        %v3179 = vpop.f32.mrf.mxu0
        %v3180 = vadd.f32 %v3161, %v3179
        %3181 = vdwg.mxu0
        %3182 = vmatpush.bf16.msra.mxu0 %v2309
        %3183 = vmatpush.bf16.msra.mxu0 %v2303
        %3184 = vmatpush.bf16.msra.mxu0 %v2297
        %3185 = vmatpush.bf16.msra.mxu0 %v2291
        %3186 = vmatpush.bf16.msra.mxu0 %v2285
        %3187 = vmatpush.bf16.msra.mxu0 %v2279
        %3188 = vmatpush.bf16.msra.mxu0 %v2273
        %3189 = vmatpush.bf16.msra.mxu0 %v2267
        %3190 = vmatmul.bf16.gmra.mxu0 %v1086
        %v3191 = vpop.f32.mrf.mxu0
        %v3192 = vadd.f32 %v1391, %v3191
        %v3193 = vpop.f32.mrf.mxu0
        %v3194 = vadd.f32 %v1391, %v3193
        %3195 = vmatmul.bf16.gmra.mxu0 %v1092
        %v3196 = vpop.f32.mrf.mxu0
        %v3197 = vadd.f32 %v1391, %v3196
        %v3198 = vpop.f32.mrf.mxu0
        %v3199 = vadd.f32 %v1391, %v3198
        %3200 = vdwg.mxu0
        %3201 = vmatpush.bf16.msra.mxu0 %v2357
        %3202 = vmatpush.bf16.msra.mxu0 %v2351
        %3203 = vmatpush.bf16.msra.mxu0 %v2345
        %3204 = vmatpush.bf16.msra.mxu0 %v2339
        %3205 = vmatpush.bf16.msra.mxu0 %v2333
        %3206 = vmatpush.bf16.msra.mxu0 %v2327
        %3207 = vmatpush.bf16.msra.mxu0 %v2321
        %3208 = vmatpush.bf16.msra.mxu0 %v2315
        %3209 = vmatmul.bf16.gmra.mxu0 %v1087
        %v3210 = vpop.f32.mrf.mxu0
        %v3211 = vadd.f32 %v3192, %v3210
        %v3212 = vpop.f32.mrf.mxu0
        %v3213 = vadd.f32 %v3194, %v3212
        %3214 = vmatmul.bf16.gmra.mxu0 %v1093
        %v3215 = vpop.f32.mrf.mxu0
        %v3216 = vadd.f32 %v3197, %v3215
        %v3217 = vpop.f32.mrf.mxu0
        %v3218 = vadd.f32 %v3199, %v3217
        %3219 = vdwg.mxu0
        %3220 = vmatpush.bf16.msra.mxu0 %v2405
        %3221 = vmatpush.bf16.msra.mxu0 %v2399
        %3222 = vmatpush.bf16.msra.mxu0 %v2393
        %3223 = vmatpush.bf16.msra.mxu0 %v2387
        %3224 = vmatpush.bf16.msra.mxu0 %v2381
        %3225 = vmatpush.bf16.msra.mxu0 %v2375
        %3226 = vmatpush.bf16.msra.mxu0 %v2369
        %3227 = vmatpush.bf16.msra.mxu0 %v2363
        %3228 = vmatmul.bf16.gmra.mxu0 %v1088
        %v3229 = vpop.f32.mrf.mxu0
        %v3230 = vadd.f32 %v3211, %v3229
        %v3231 = vpop.f32.mrf.mxu0
        %v3232 = vadd.f32 %v3213, %v3231
        %3233 = vmatmul.bf16.gmra.mxu0 %v1094
        %v3234 = vpop.f32.mrf.mxu0
        %v3235 = vadd.f32 %v3216, %v3234
        %v3236 = vpop.f32.mrf.mxu0
        %v3237 = vadd.f32 %v3218, %v3236
        %3238 = vdwg.mxu0
        %3239 = vmatpush.bf16.msra.mxu0 %v2453
        %3240 = vmatpush.bf16.msra.mxu0 %v2447
        %3241 = vmatpush.bf16.msra.mxu0 %v2441
        %3242 = vmatpush.bf16.msra.mxu0 %v2435
        %3243 = vmatpush.bf16.msra.mxu0 %v2429
        %3244 = vmatpush.bf16.msra.mxu0 %v2423
        %3245 = vmatpush.bf16.msra.mxu0 %v2417
        %3246 = vmatpush.bf16.msra.mxu0 %v2411
        %3247 = vmatmul.bf16.gmra.mxu0 %v1089
        %v3248 = vpop.f32.mrf.mxu0
        %v3249 = vadd.f32 %v3230, %v3248
        %v3250 = vpop.f32.mrf.mxu0
        %v3251 = vadd.f32 %v3232, %v3250
        %3252 = vmatmul.bf16.gmra.mxu0 %v1095
        %v3253 = vpop.f32.mrf.mxu0
        %v3254 = vadd.f32 %v3235, %v3253
        %v3255 = vpop.f32.mrf.mxu0
        %v3256 = vadd.f32 %v3237, %v3255
        %3257 = vdwg.mxu0
        %3258 = vmatpush.bf16.msra.mxu0 %v2501
        %3259 = vmatpush.bf16.msra.mxu0 %v2495
        %3260 = vmatpush.bf16.msra.mxu0 %v2489
        %3261 = vmatpush.bf16.msra.mxu0 %v2483
        %3262 = vmatpush.bf16.msra.mxu0 %v2477
        %3263 = vmatpush.bf16.msra.mxu0 %v2471
        %3264 = vmatpush.bf16.msra.mxu0 %v2465
        %3265 = vmatpush.bf16.msra.mxu0 %v2459
        %3266 = vmatmul.bf16.gmra.mxu0 %v1090
        %v3267 = vpop.f32.mrf.mxu0
        %v3268 = vadd.f32 %v3249, %v3267
        %v3269 = vpop.f32.mrf.mxu0
        %v3270 = vadd.f32 %v3251, %v3269
        %3271 = vmatmul.bf16.gmra.mxu0 %v1096
        %v3272 = vpop.f32.mrf.mxu0
        %v3273 = vadd.f32 %v3254, %v3272
        %v3274 = vpop.f32.mrf.mxu0
        %v3275 = vadd.f32 %v3256, %v3274
        %3276 = vdwg.mxu0
        %3277 = vmatpush.bf16.msra.mxu0 %v2549
        %3278 = vmatpush.bf16.msra.mxu0 %v2543
        %3279 = vmatpush.bf16.msra.mxu0 %v2537
        %3280 = vmatpush.bf16.msra.mxu0 %v2531
        %3281 = vmatpush.bf16.msra.mxu0 %v2525
        %3282 = vmatpush.bf16.msra.mxu0 %v2519
        %3283 = vmatpush.bf16.msra.mxu0 %v2513
        %3284 = vmatpush.bf16.msra.mxu0 %v2507
        %3285 = vmatmul.bf16.gmra.mxu0 %v1091
        %v3286 = vpop.f32.mrf.mxu0
        %v3287 = vadd.f32 %v3268, %v3286
        %v3288 = vpop.f32.mrf.mxu0
        %v3289 = vadd.f32 %v3270, %v3288
        %3290 = vmatmul.bf16.gmra.mxu0 %v1097
        %v3291 = vpop.f32.mrf.mxu0
        %v3292 = vadd.f32 %v3273, %v3291
        %v3293 = vpop.f32.mrf.mxu0
        %v3294 = vadd.f32 %v3275, %v3293
        %3295 = vdwg.mxu0
        %3296 = vmatpush.bf16.msra.mxu0 %v2310
        %3297 = vmatpush.bf16.msra.mxu0 %v2304
        %3298 = vmatpush.bf16.msra.mxu0 %v2298
        %3299 = vmatpush.bf16.msra.mxu0 %v2292
        %3300 = vmatpush.bf16.msra.mxu0 %v2286
        %3301 = vmatpush.bf16.msra.mxu0 %v2280
        %3302 = vmatpush.bf16.msra.mxu0 %v2274
        %3303 = vmatpush.bf16.msra.mxu0 %v2268
        %3304 = vmatmul.bf16.gmra.mxu0 %v1086
        %v3305 = vpop.f32.mrf.mxu0
        %v3306 = vadd.f32 %v1392, %v3305
        %v3307 = vpop.f32.mrf.mxu0
        %v3308 = vadd.f32 %v1392, %v3307
        %3309 = vmatmul.bf16.gmra.mxu0 %v1092
        %v3310 = vpop.f32.mrf.mxu0
        %v3311 = vadd.f32 %v1392, %v3310
        %v3312 = vpop.f32.mrf.mxu0
        %v3313 = vadd.f32 %v1392, %v3312
        %3314 = vdwg.mxu0
        %3315 = vmatpush.bf16.msra.mxu0 %v2358
        %3316 = vmatpush.bf16.msra.mxu0 %v2352
        %3317 = vmatpush.bf16.msra.mxu0 %v2346
        %3318 = vmatpush.bf16.msra.mxu0 %v2340
        %3319 = vmatpush.bf16.msra.mxu0 %v2334
        %3320 = vmatpush.bf16.msra.mxu0 %v2328
        %3321 = vmatpush.bf16.msra.mxu0 %v2322
        %3322 = vmatpush.bf16.msra.mxu0 %v2316
        %3323 = vmatmul.bf16.gmra.mxu0 %v1087
        %v3324 = vpop.f32.mrf.mxu0
        %v3325 = vadd.f32 %v3306, %v3324
        %v3326 = vpop.f32.mrf.mxu0
        %v3327 = vadd.f32 %v3308, %v3326
        %3328 = vmatmul.bf16.gmra.mxu0 %v1093
        %v3329 = vpop.f32.mrf.mxu0
        %v3330 = vadd.f32 %v3311, %v3329
        %v3331 = vpop.f32.mrf.mxu0
        %v3332 = vadd.f32 %v3313, %v3331
        %3333 = vdwg.mxu0
        %3334 = vmatpush.bf16.msra.mxu0 %v2406
        %3335 = vmatpush.bf16.msra.mxu0 %v2400
        %3336 = vmatpush.bf16.msra.mxu0 %v2394
        %3337 = vmatpush.bf16.msra.mxu0 %v2388
        %3338 = vmatpush.bf16.msra.mxu0 %v2382
        %3339 = vmatpush.bf16.msra.mxu0 %v2376
        %3340 = vmatpush.bf16.msra.mxu0 %v2370
        %3341 = vmatpush.bf16.msra.mxu0 %v2364
        %3342 = vmatmul.bf16.gmra.mxu0 %v1088
        %v3343 = vpop.f32.mrf.mxu0
        %v3344 = vadd.f32 %v3325, %v3343
        %v3345 = vpop.f32.mrf.mxu0
        %v3346 = vadd.f32 %v3327, %v3345
        %3347 = vmatmul.bf16.gmra.mxu0 %v1094
        %v3348 = vpop.f32.mrf.mxu0
        %v3349 = vadd.f32 %v3330, %v3348
        %v3350 = vpop.f32.mrf.mxu0
        %v3351 = vadd.f32 %v3332, %v3350
        %3352 = vdwg.mxu0
        %3353 = vmatpush.bf16.msra.mxu0 %v2454
        %3354 = vmatpush.bf16.msra.mxu0 %v2448
        %3355 = vmatpush.bf16.msra.mxu0 %v2442
        %3356 = vmatpush.bf16.msra.mxu0 %v2436
        %3357 = vmatpush.bf16.msra.mxu0 %v2430
        %3358 = vmatpush.bf16.msra.mxu0 %v2424
        %3359 = vmatpush.bf16.msra.mxu0 %v2418
        %3360 = vmatpush.bf16.msra.mxu0 %v2412
        %3361 = vmatmul.bf16.gmra.mxu0 %v1089
        %v3362 = vpop.f32.mrf.mxu0
        %v3363 = vadd.f32 %v3344, %v3362
        %v3364 = vpop.f32.mrf.mxu0
        %v3365 = vadd.f32 %v3346, %v3364
        %3366 = vmatmul.bf16.gmra.mxu0 %v1095
        %v3367 = vpop.f32.mrf.mxu0
        %v3368 = vadd.f32 %v3349, %v3367
        %v3369 = vpop.f32.mrf.mxu0
        %v3370 = vadd.f32 %v3351, %v3369
        %3371 = vdwg.mxu0
        %3372 = vmatpush.bf16.msra.mxu0 %v2502
        %3373 = vmatpush.bf16.msra.mxu0 %v2496
        %3374 = vmatpush.bf16.msra.mxu0 %v2490
        %3375 = vmatpush.bf16.msra.mxu0 %v2484
        %3376 = vmatpush.bf16.msra.mxu0 %v2478
        %3377 = vmatpush.bf16.msra.mxu0 %v2472
        %3378 = vmatpush.bf16.msra.mxu0 %v2466
        %3379 = vmatpush.bf16.msra.mxu0 %v2460
        %3380 = vmatmul.bf16.gmra.mxu0 %v1090
        %v3381 = vpop.f32.mrf.mxu0
        %v3382 = vadd.f32 %v3363, %v3381
        %v3383 = vpop.f32.mrf.mxu0
        %v3384 = vadd.f32 %v3365, %v3383
        %3385 = vmatmul.bf16.gmra.mxu0 %v1096
        %v3386 = vpop.f32.mrf.mxu0
        %v3387 = vadd.f32 %v3368, %v3386
        %v3388 = vpop.f32.mrf.mxu0
        %v3389 = vadd.f32 %v3370, %v3388
        %3390 = vdwg.mxu0
        %3391 = vmatpush.bf16.msra.mxu0 %v2550
        %3392 = vmatpush.bf16.msra.mxu0 %v2544
        %3393 = vmatpush.bf16.msra.mxu0 %v2538
        %3394 = vmatpush.bf16.msra.mxu0 %v2532
        %3395 = vmatpush.bf16.msra.mxu0 %v2526
        %3396 = vmatpush.bf16.msra.mxu0 %v2520
        %3397 = vmatpush.bf16.msra.mxu0 %v2514
        %3398 = vmatpush.bf16.msra.mxu0 %v2508
        %3399 = vmatmul.bf16.gmra.mxu0 %v1091
        %v3400 = vpop.f32.mrf.mxu0
        %v3401 = vadd.f32 %v3382, %v3400
        %v3402 = vpop.f32.mrf.mxu0
        %v3403 = vadd.f32 %v3384, %v3402
        %3404 = vmatmul.bf16.gmra.mxu0 %v1097
        %v3405 = vpop.f32.mrf.mxu0
        %v3406 = vadd.f32 %v3387, %v3405
        %v3407 = vpop.f32.mrf.mxu0
        %v3408 = vadd.f32 %v3389, %v3407
        %3409 = vdwg.mxu0
        %3410 = vmatpush.bf16.msra.mxu0 %v2311
        %3411 = vmatpush.bf16.msra.mxu0 %v2305
        %3412 = vmatpush.bf16.msra.mxu0 %v2299
        %3413 = vmatpush.bf16.msra.mxu0 %v2293
        %3414 = vmatpush.bf16.msra.mxu0 %v2287
        %3415 = vmatpush.bf16.msra.mxu0 %v2281
        %3416 = vmatpush.bf16.msra.mxu0 %v2275
        %3417 = vmatpush.bf16.msra.mxu0 %v2269
        %3418 = vmatmul.bf16.gmra.mxu0 %v1086
        %v3419 = vpop.f32.mrf.mxu0
        %v3420 = vadd.f32 %v1393, %v3419
        %v3421 = vpop.f32.mrf.mxu0
        %v3422 = vadd.f32 %v1393, %v3421
        %3423 = vmatmul.bf16.gmra.mxu0 %v1092
        %v3424 = vpop.f32.mrf.mxu0
        %v3425 = vadd.f32 %v1393, %v3424
        %v3426 = vpop.f32.mrf.mxu0
        %v3427 = vadd.f32 %v1393, %v3426
        %3428 = vdwg.mxu0
        %3429 = vmatpush.bf16.msra.mxu0 %v2359
        %3430 = vmatpush.bf16.msra.mxu0 %v2353
        %3431 = vmatpush.bf16.msra.mxu0 %v2347
        %3432 = vmatpush.bf16.msra.mxu0 %v2341
        %3433 = vmatpush.bf16.msra.mxu0 %v2335
        %3434 = vmatpush.bf16.msra.mxu0 %v2329
        %3435 = vmatpush.bf16.msra.mxu0 %v2323
        %3436 = vmatpush.bf16.msra.mxu0 %v2317
        %3437 = vmatmul.bf16.gmra.mxu0 %v1087
        %v3438 = vpop.f32.mrf.mxu0
        %v3439 = vadd.f32 %v3420, %v3438
        %v3440 = vpop.f32.mrf.mxu0
        %v3441 = vadd.f32 %v3422, %v3440
        %3442 = vmatmul.bf16.gmra.mxu0 %v1093
        %v3443 = vpop.f32.mrf.mxu0
        %v3444 = vadd.f32 %v3425, %v3443
        %v3445 = vpop.f32.mrf.mxu0
        %v3446 = vadd.f32 %v3427, %v3445
        %3447 = vdwg.mxu0
        %3448 = vmatpush.bf16.msra.mxu0 %v2407
        %3449 = vmatpush.bf16.msra.mxu0 %v2401
        %3450 = vmatpush.bf16.msra.mxu0 %v2395
        %3451 = vmatpush.bf16.msra.mxu0 %v2389
        %3452 = vmatpush.bf16.msra.mxu0 %v2383
        %3453 = vmatpush.bf16.msra.mxu0 %v2377
        %3454 = vmatpush.bf16.msra.mxu0 %v2371
        %3455 = vmatpush.bf16.msra.mxu0 %v2365
        %3456 = vmatmul.bf16.gmra.mxu0 %v1088
        %v3457 = vpop.f32.mrf.mxu0
        %v3458 = vadd.f32 %v3439, %v3457
        %v3459 = vpop.f32.mrf.mxu0
        %v3460 = vadd.f32 %v3441, %v3459
        %3461 = vmatmul.bf16.gmra.mxu0 %v1094
        %v3462 = vpop.f32.mrf.mxu0
        %v3463 = vadd.f32 %v3444, %v3462
        %v3464 = vpop.f32.mrf.mxu0
        %v3465 = vadd.f32 %v3446, %v3464
        %3466 = vdwg.mxu0
        %3467 = vmatpush.bf16.msra.mxu0 %v2455
        %3468 = vmatpush.bf16.msra.mxu0 %v2449
        %3469 = vmatpush.bf16.msra.mxu0 %v2443
        %3470 = vmatpush.bf16.msra.mxu0 %v2437
        %3471 = vmatpush.bf16.msra.mxu0 %v2431
        %3472 = vmatpush.bf16.msra.mxu0 %v2425
        %3473 = vmatpush.bf16.msra.mxu0 %v2419
        %3474 = vmatpush.bf16.msra.mxu0 %v2413
        %3475 = vmatmul.bf16.gmra.mxu0 %v1089
        %v3476 = vpop.f32.mrf.mxu0
        %v3477 = vadd.f32 %v3458, %v3476
        %v3478 = vpop.f32.mrf.mxu0
        %v3479 = vadd.f32 %v3460, %v3478
        %3480 = vmatmul.bf16.gmra.mxu0 %v1095
        %v3481 = vpop.f32.mrf.mxu0
        %v3482 = vadd.f32 %v3463, %v3481
        %v3483 = vpop.f32.mrf.mxu0
        %v3484 = vadd.f32 %v3465, %v3483
        %3485 = vdwg.mxu0
        %3486 = vmatpush.bf16.msra.mxu0 %v2503
        %3487 = vmatpush.bf16.msra.mxu0 %v2497
        %3488 = vmatpush.bf16.msra.mxu0 %v2491
        %3489 = vmatpush.bf16.msra.mxu0 %v2485
        %3490 = vmatpush.bf16.msra.mxu0 %v2479
        %3491 = vmatpush.bf16.msra.mxu0 %v2473
        %3492 = vmatpush.bf16.msra.mxu0 %v2467
        %3493 = vmatpush.bf16.msra.mxu0 %v2461
        %3494 = vmatmul.bf16.gmra.mxu0 %v1090
        %v3495 = vpop.f32.mrf.mxu0
        %v3496 = vadd.f32 %v3477, %v3495
        %v3497 = vpop.f32.mrf.mxu0
        %v3498 = vadd.f32 %v3479, %v3497
        %3499 = vmatmul.bf16.gmra.mxu0 %v1096
        %v3500 = vpop.f32.mrf.mxu0
        %v3501 = vadd.f32 %v3482, %v3500
        %v3502 = vpop.f32.mrf.mxu0
        %v3503 = vadd.f32 %v3484, %v3502
        %3504 = vdwg.mxu0
        %3505 = vmatpush.bf16.msra.mxu0 %v2551
        %3506 = vmatpush.bf16.msra.mxu0 %v2545
        %3507 = vmatpush.bf16.msra.mxu0 %v2539
        %3508 = vmatpush.bf16.msra.mxu0 %v2533
        %3509 = vmatpush.bf16.msra.mxu0 %v2527
        %3510 = vmatpush.bf16.msra.mxu0 %v2521
        %3511 = vmatpush.bf16.msra.mxu0 %v2515
        %3512 = vmatpush.bf16.msra.mxu0 %v2509
        %3513 = vmatmul.bf16.gmra.mxu0 %v1091
        %v3514 = vpop.f32.mrf.mxu0
        %v3515 = vadd.f32 %v3496, %v3514
        %v3516 = vpop.f32.mrf.mxu0
        %v3517 = vadd.f32 %v3498, %v3516
        %3518 = vmatmul.bf16.gmra.mxu0 %v1097
        %v3519 = vpop.f32.mrf.mxu0
        %v3520 = vadd.f32 %v3501, %v3519
        %v3521 = vpop.f32.mrf.mxu0
        %v3522 = vadd.f32 %v3503, %v3521
        %3523 = vdwg.mxu0
        %v3524 = vmax.f32 %v2945, 0.0
        %v3525 = vmax.f32 %v3059, 0.0
        %v3526 = vmax.f32 %v3173, 0.0
        %v3527 = vmax.f32 %v3287, 0.0
        %v3528 = vmax.f32 %v3401, 0.0
        %v3529 = vmax.f32 %v3515, 0.0
        %v3530 = vmax.f32 %v2947, 0.0
        %v3531 = vmax.f32 %v3061, 0.0
        %v3532 = vmax.f32 %v3175, 0.0
        %v3533 = vmax.f32 %v3289, 0.0
        %v3534 = vmax.f32 %v3403, 0.0
        %v3535 = vmax.f32 %v3517, 0.0
        %v3536 = vmax.f32 %v2950, 0.0
        %v3537 = vmax.f32 %v3064, 0.0
        %v3538 = vmax.f32 %v3178, 0.0
        %v3539 = vmax.f32 %v3292, 0.0
        %v3540 = vmax.f32 %v3406, 0.0
        %v3541 = vmax.f32 %v3520, 0.0
        %v3542 = vmax.f32 %v2952, 0.0
        %v3543 = vmax.f32 %v3066, 0.0
        %v3544 = vmax.f32 %v3180, 0.0
        %v3545 = vmax.f32 %v3294, 0.0
        %v3546 = vmax.f32 %v3408, 0.0
        %v3547 = vmax.f32 %v3522, 0.0
        %v3548 = vld [vmem:[#allocation11] sm:$0xff]
        %v3549 = vld [vmem:[#allocation11 + $0x8] sm:$0xf]
        %v3550 = vld [vmem:[#allocation12] sm:$0x1]
        %v3553 = vperm.slane %v3548, 0
        %v3554 = vperm.slane %v3548, 2
        %v3555 = vperm.slane %v3548, 4
        %v3556 = vperm.slane %v3548, 6
        %v3557 = vperm.slane %v3549, 0
        %v3558 = vperm.slane %v3549, 2
        %v3565 = vperm.slane %v3553, 0
        %v3566 = vperm.slane %v3554, 0
        %v3567 = vperm.slane %v3555, 0
        %v3568 = vperm.slane %v3556, 0
        %v3569 = vperm.slane %v3557, 0
        %v3570 = vperm.slane %v3558, 0
        %v3571 = vmul.f32 %v3524, %v3565
        %v3572 = vmul.f32 %v3525, %v3566
        %v3573 = vmul.f32 %v3526, %v3567
        %v3574 = vmul.f32 %v3527, %v3568
        %v3575 = vmul.f32 %v3528, %v3569
        %v3576 = vmul.f32 %v3529, %v3570
        %v3577 = vmul.f32 %v3530, %v3565
        %v3578 = vmul.f32 %v3531, %v3566
        %v3579 = vmul.f32 %v3532, %v3567
        %v3580 = vmul.f32 %v3533, %v3568
        %v3581 = vmul.f32 %v3534, %v3569
        %v3582 = vmul.f32 %v3535, %v3570
        %v3583 = vmul.f32 %v3536, %v3565
        %v3584 = vmul.f32 %v3537, %v3566
        %v3585 = vmul.f32 %v3538, %v3567
        %v3586 = vmul.f32 %v3539, %v3568
        %v3587 = vmul.f32 %v3540, %v3569
        %v3588 = vmul.f32 %v3541, %v3570
        %v3589 = vmul.f32 %v3542, %v3565
        %v3590 = vmul.f32 %v3543, %v3566
        %v3591 = vmul.f32 %v3544, %v3567
        %v3592 = vmul.f32 %v3545, %v3568
        %v3593 = vmul.f32 %v3546, %v3569
        %v3594 = vmul.f32 %v3547, %v3570
        %v3595 = vadd.f32 %v3571, %v3572
        %v3596 = vadd.f32 %v3595, %v3573
        %v3597 = vadd.f32 %v3596, %v3574
        %v3598 = vadd.f32 %v3597, %v3575
        %v3599 = vadd.f32 %v3598, %v3576
        %3600 = vadd.xlane.f32.xlu0 %v3599
        %v3601 = vpop.xlane.xlu0 %3600
        %v3602 = vadd.f32 %v3577, %v3578
        %v3603 = vadd.f32 %v3602, %v3579
        %v3604 = vadd.f32 %v3603, %v3580
        %v3605 = vadd.f32 %v3604, %v3581
        %v3606 = vadd.f32 %v3605, %v3582
        %3607 = vadd.xlane.f32.xlu0 %v3606
        %v3608 = vpop.xlane.xlu0 %3607
        %v3609 = vadd.f32 %v3583, %v3584
        %v3610 = vadd.f32 %v3609, %v3585
        %v3611 = vadd.f32 %v3610, %v3586
        %v3612 = vadd.f32 %v3611, %v3587
        %v3613 = vadd.f32 %v3612, %v3588
        %3614 = vadd.xlane.f32.xlu0 %v3613
        %v3615 = vpop.xlane.xlu0 %3614
        %v3616 = vadd.f32 %v3589, %v3590
        %v3617 = vadd.f32 %v3616, %v3591
        %v3618 = vadd.f32 %v3617, %v3592
        %v3619 = vadd.f32 %v3618, %v3593
        %v3620 = vadd.f32 %v3619, %v3594
        %3621 = vadd.xlane.f32.xlu0 %v3620
        %v3622 = vpop.xlane.xlu0 %3621
        %v3623 = vperm.slane %v3548, 1
        %v3624 = vperm.slane %v3548, 3
        %v3625 = vperm.slane %v3548, 5
        %v3626 = vperm.slane %v3548, 7
        %v3627 = vperm.slane %v3549, 1
        %v3628 = vperm.slane %v3549, 3
        %v3635 = vperm.slane %v3623, 1
        %v3636 = vperm.slane %v3624, 1
        %v3637 = vperm.slane %v3625, 1
        %v3638 = vperm.slane %v3626, 1
        %v3639 = vperm.slane %v3627, 1
        %v3640 = vperm.slane %v3628, 1
        %v3641 = vmul.f32 %v3524, %v3635
        %v3642 = vmul.f32 %v3525, %v3636
        %v3643 = vmul.f32 %v3526, %v3637
        %v3644 = vmul.f32 %v3527, %v3638
        %v3645 = vmul.f32 %v3528, %v3639
        %v3646 = vmul.f32 %v3529, %v3640
        %v3647 = vmul.f32 %v3530, %v3635
        %v3648 = vmul.f32 %v3531, %v3636
        %v3649 = vmul.f32 %v3532, %v3637
        %v3650 = vmul.f32 %v3533, %v3638
        %v3651 = vmul.f32 %v3534, %v3639
        %v3652 = vmul.f32 %v3535, %v3640
        %v3653 = vmul.f32 %v3536, %v3635
        %v3654 = vmul.f32 %v3537, %v3636
        %v3655 = vmul.f32 %v3538, %v3637
        %v3656 = vmul.f32 %v3539, %v3638
        %v3657 = vmul.f32 %v3540, %v3639
        %v3658 = vmul.f32 %v3541, %v3640
        %v3659 = vmul.f32 %v3542, %v3635
        %v3660 = vmul.f32 %v3543, %v3636
        %v3661 = vmul.f32 %v3544, %v3637
        %v3662 = vmul.f32 %v3545, %v3638
        %v3663 = vmul.f32 %v3546, %v3639
        %v3664 = vmul.f32 %v3547, %v3640
        %v3665 = vadd.f32 %v3641, %v3642
        %v3666 = vadd.f32 %v3665, %v3643
        %v3667 = vadd.f32 %v3666, %v3644
        %v3668 = vadd.f32 %v3667, %v3645
        %v3669 = vadd.f32 %v3668, %v3646
        %3670 = vadd.xlane.f32.xlu0 %v3669
        %v3671 = vpop.xlane.xlu0 %3670
        %v3672 = vadd.f32 %v3647, %v3648
        %v3673 = vadd.f32 %v3672, %v3649
        %v3674 = vadd.f32 %v3673, %v3650
        %v3675 = vadd.f32 %v3674, %v3651
        %v3676 = vadd.f32 %v3675, %v3652
        %3677 = vadd.xlane.f32.xlu0 %v3676
        %v3678 = vpop.xlane.xlu0 %3677
        %v3679 = vadd.f32 %v3653, %v3654
        %v3680 = vadd.f32 %v3679, %v3655
        %v3681 = vadd.f32 %v3680, %v3656
        %v3682 = vadd.f32 %v3681, %v3657
        %v3683 = vadd.f32 %v3682, %v3658
        %3684 = vadd.xlane.f32.xlu0 %v3683
        %v3685 = vpop.xlane.xlu0 %3684
        %v3686 = vadd.f32 %v3659, %v3660
        %v3687 = vadd.f32 %v3686, %v3661
        %v3688 = vadd.f32 %v3687, %v3662
        %v3689 = vadd.f32 %v3688, %v3663
        %v3690 = vadd.f32 %v3689, %v3664
        %3691 = vadd.xlane.f32.xlu0 %v3690
        %v3692 = vpop.xlane.xlu0 %3691
        %vm3693 = vcmask 7168
        %v3694 = vsel %vm3693, %v3601, %v3671
        %v3695 = vsel %vm3693, %v3608, %v3678
        %v3696 = vsel %vm3693, %v3615, %v3685
        %v3697 = vsel %vm3693, %v3622, %v3692
        %v3699 = vperm.slane %v3550, 0
        %v3701 = vadd.f32 %v3694, %v3699
        %v3702 = vadd.f32 %v3695, %v3699
        %v3703 = vadd.f32 %v3696, %v3699
        %v3704 = vadd.f32 %v3697, %v3699
        %v3705 = vld [vmem:[#allocation14] sm:$0xff]
        %v3706 = vld [vmem:[#allocation14 + $0x8] sm:$0xf]
        %v3707 = vld [vmem:[#allocation15] sm:$0x1]
        %v3710 = vperm.slane %v3705, 0
        %v3711 = vperm.slane %v3705, 2
        %v3712 = vperm.slane %v3705, 4
        %v3713 = vperm.slane %v3705, 6
        %v3714 = vperm.slane %v3706, 0
        %v3715 = vperm.slane %v3706, 2
        %v3722 = vperm.slane %v3710, 0
        %v3723 = vperm.slane %v3711, 0
        %v3724 = vperm.slane %v3712, 0
        %v3725 = vperm.slane %v3713, 0
        %v3726 = vperm.slane %v3714, 0
        %v3727 = vperm.slane %v3715, 0
        %v3728 = vmul.f32 %v3524, %v3722
        %v3729 = vmul.f32 %v3525, %v3723
        %v3730 = vmul.f32 %v3526, %v3724
        %v3731 = vmul.f32 %v3527, %v3725
        %v3732 = vmul.f32 %v3528, %v3726
        %v3733 = vmul.f32 %v3529, %v3727
        %v3734 = vmul.f32 %v3530, %v3722
        %v3735 = vmul.f32 %v3531, %v3723
        %v3736 = vmul.f32 %v3532, %v3724
        %v3737 = vmul.f32 %v3533, %v3725
        %v3738 = vmul.f32 %v3534, %v3726
        %v3739 = vmul.f32 %v3535, %v3727
        %v3740 = vmul.f32 %v3536, %v3722
        %v3741 = vmul.f32 %v3537, %v3723
        %v3742 = vmul.f32 %v3538, %v3724
        %v3743 = vmul.f32 %v3539, %v3725
        %v3744 = vmul.f32 %v3540, %v3726
        %v3745 = vmul.f32 %v3541, %v3727
        %v3746 = vmul.f32 %v3542, %v3722
        %v3747 = vmul.f32 %v3543, %v3723
        %v3748 = vmul.f32 %v3544, %v3724
        %v3749 = vmul.f32 %v3545, %v3725
        %v3750 = vmul.f32 %v3546, %v3726
        %v3751 = vmul.f32 %v3547, %v3727
        %v3752 = vadd.f32 %v3728, %v3729
        %v3753 = vadd.f32 %v3752, %v3730
        %v3754 = vadd.f32 %v3753, %v3731
        %v3755 = vadd.f32 %v3754, %v3732
        %v3756 = vadd.f32 %v3755, %v3733
        %3757 = vadd.xlane.f32.xlu0 %v3756
        %v3758 = vpop.xlane.xlu0 %3757
        %v3759 = vadd.f32 %v3734, %v3735
        %v3760 = vadd.f32 %v3759, %v3736
        %v3761 = vadd.f32 %v3760, %v3737
        %v3762 = vadd.f32 %v3761, %v3738
        %v3763 = vadd.f32 %v3762, %v3739
        %3764 = vadd.xlane.f32.xlu0 %v3763
        %v3765 = vpop.xlane.xlu0 %3764
        %v3766 = vadd.f32 %v3740, %v3741
        %v3767 = vadd.f32 %v3766, %v3742
        %v3768 = vadd.f32 %v3767, %v3743
        %v3769 = vadd.f32 %v3768, %v3744
        %v3770 = vadd.f32 %v3769, %v3745
        %3771 = vadd.xlane.f32.xlu0 %v3770
        %v3772 = vpop.xlane.xlu0 %3771
        %v3773 = vadd.f32 %v3746, %v3747
        %v3774 = vadd.f32 %v3773, %v3748
        %v3775 = vadd.f32 %v3774, %v3749
        %v3776 = vadd.f32 %v3775, %v3750
        %v3777 = vadd.f32 %v3776, %v3751
        %3778 = vadd.xlane.f32.xlu0 %v3777
        %v3779 = vpop.xlane.xlu0 %3778
        %v3780 = vperm.slane %v3705, 1
        %v3781 = vperm.slane %v3705, 3
        %v3782 = vperm.slane %v3705, 5
        %v3783 = vperm.slane %v3705, 7
        %v3784 = vperm.slane %v3706, 1
        %v3785 = vperm.slane %v3706, 3
        %v3792 = vperm.slane %v3780, 1
        %v3793 = vperm.slane %v3781, 1
        %v3794 = vperm.slane %v3782, 1
        %v3795 = vperm.slane %v3783, 1
        %v3796 = vperm.slane %v3784, 1
        %v3797 = vperm.slane %v3785, 1
        %v3798 = vmul.f32 %v3524, %v3792
        %v3799 = vmul.f32 %v3525, %v3793
        %v3800 = vmul.f32 %v3526, %v3794
        %v3801 = vmul.f32 %v3527, %v3795
        %v3802 = vmul.f32 %v3528, %v3796
        %v3803 = vmul.f32 %v3529, %v3797
        %v3804 = vmul.f32 %v3530, %v3792
        %v3805 = vmul.f32 %v3531, %v3793
        %v3806 = vmul.f32 %v3532, %v3794
        %v3807 = vmul.f32 %v3533, %v3795
        %v3808 = vmul.f32 %v3534, %v3796
        %v3809 = vmul.f32 %v3535, %v3797
        %v3810 = vmul.f32 %v3536, %v3792
        %v3811 = vmul.f32 %v3537, %v3793
        %v3812 = vmul.f32 %v3538, %v3794
        %v3813 = vmul.f32 %v3539, %v3795
        %v3814 = vmul.f32 %v3540, %v3796
        %v3815 = vmul.f32 %v3541, %v3797
        %v3816 = vmul.f32 %v3542, %v3792
        %v3817 = vmul.f32 %v3543, %v3793
        %v3818 = vmul.f32 %v3544, %v3794
        %v3819 = vmul.f32 %v3545, %v3795
        %v3820 = vmul.f32 %v3546, %v3796
        %v3821 = vmul.f32 %v3547, %v3797
        %v3822 = vadd.f32 %v3798, %v3799
        %v3823 = vadd.f32 %v3822, %v3800
        %v3824 = vadd.f32 %v3823, %v3801
        %v3825 = vadd.f32 %v3824, %v3802
        %v3826 = vadd.f32 %v3825, %v3803
        %3827 = vadd.xlane.f32.xlu0 %v3826
        %v3828 = vpop.xlane.xlu0 %3827
        %v3829 = vadd.f32 %v3804, %v3805
        %v3830 = vadd.f32 %v3829, %v3806
        %v3831 = vadd.f32 %v3830, %v3807
        %v3832 = vadd.f32 %v3831, %v3808
        %v3833 = vadd.f32 %v3832, %v3809
        %3834 = vadd.xlane.f32.xlu0 %v3833
        %v3835 = vpop.xlane.xlu0 %3834
        %v3836 = vadd.f32 %v3810, %v3811
        %v3837 = vadd.f32 %v3836, %v3812
        %v3838 = vadd.f32 %v3837, %v3813
        %v3839 = vadd.f32 %v3838, %v3814
        %v3840 = vadd.f32 %v3839, %v3815
        %3841 = vadd.xlane.f32.xlu0 %v3840
        %v3842 = vpop.xlane.xlu0 %3841
        %v3843 = vadd.f32 %v3816, %v3817
        %v3844 = vadd.f32 %v3843, %v3818
        %v3845 = vadd.f32 %v3844, %v3819
        %v3846 = vadd.f32 %v3845, %v3820
        %v3847 = vadd.f32 %v3846, %v3821
        %3848 = vadd.xlane.f32.xlu0 %v3847
        %v3849 = vpop.xlane.xlu0 %3848
        %v3850 = vsel %vm3693, %v3758, %v3828
        %v3851 = vsel %vm3693, %v3765, %v3835
        %v3852 = vsel %vm3693, %v3772, %v3842
        %v3853 = vsel %vm3693, %v3779, %v3849
        %v3855 = vperm.slane %v3707, 0
        %v3857 = vadd.f32 %v3850, %v3855
        %v3858 = vadd.f32 %v3851, %v3855
        %v3859 = vadd.f32 %v3852, %v3855
        %v3860 = vadd.f32 %v3853, %v3855
        %v3861 = vmax.f32 %v3857, -4.0
        %v3862 = vmax.f32 %v3858, -4.0
        %v3863 = vmax.f32 %v3859, -4.0
        %v3864 = vmax.f32 %v3860, -4.0
        %v3865 = vmin.f32 %v3861, 15.0
        %v3866 = vmin.f32 %v3862, 15.0
        %v3867 = vmin.f32 %v3863, 15.0
        %v3868 = vmin.f32 %v3864, 15.0
        %v3869 = vmul.f32 %v3865, 1.442695
        %v3870 = vpow.pop %v3869
        %v3871 = vmul.f32 %v3866, 1.442695
        %v3872 = vpow.pop %v3871
        %v3873 = vmul.f32 %v3867, 1.442695
        %v3874 = vpow.pop %v3873
        %v3875 = vmul.f32 %v3868, 1.442695
        %v3876 = vpow.pop %v3875
        %v3877 = vmul.f32 %v3870, %v827
        %v3878 = vmul.f32 %v3872, %v828
        %v3879 = vmul.f32 %v3874, %v829
        %v3880 = vmul.f32 %v3876, %v830
        %v3881 = vadd.f32 %v3701, %v3877
        %v3882 = vadd.f32 %v3702, %v3878
        %v3883 = vadd.f32 %v3703, %v3879
        %v3884 = vadd.f32 %v3704, %v3880
        %vm3885 = vcmask 64512
        %3886 = vst.msk [vmem:[#allocation2] sm:$0xff] %vm3885, 0.0
        %3887 = vst.msk [vmem:[#allocation2 + $0x8] sm:$0xff] %vm3885, 0.0
        %3888 = vst.msk [vmem:[#allocation2 + $0x10] sm:$0xff] %vm3885, 0.0
        %3889 = vst.msk [vmem:[#allocation2 + $0x18] sm:$0xff] %vm3885, 0.0
        %vm3890 = vcmask 23552
        %3891 = vst.msk [vmem:[#allocation2] sm:$0xff] %vm3890, %v823
        %3892 = vst.msk [vmem:[#allocation2 + $0x8] sm:$0xff] %vm3890, %v824
        %3893 = vst.msk [vmem:[#allocation2 + $0x10] sm:$0xff] %vm3890, %v825
        %3894 = vst.msk [vmem:[#allocation2 + $0x18] sm:$0xff] %vm3890, %v826
        %3899 = vrot.lane.b32.xlu0 %v3881, 3
        %v3900 = vpop.permute.xlu0 %3899
        %3901 = vrot.lane.b32.xlu0 %v3882, 3
        %v3902 = vpop.permute.xlu0 %3901
        %3903 = vrot.lane.b32.xlu0 %v3883, 3
        %v3904 = vpop.permute.xlu0 %3903
        %3905 = vrot.lane.b32.xlu0 %v3884, 3
        %v3906 = vpop.permute.xlu0 %3905
        %vm3911 = vcmask 39960
        %3912 = vst.msk [vmem:[#allocation2] sm:$0xff] %vm3911, %v3900
        %3913 = vst.msk [vmem:[#allocation2 + $0x8] sm:$0xff] %vm3911, %v3902
        %3914 = vst.msk [vmem:[#allocation2 + $0x10] sm:$0xff] %vm3911, %v3904
        %3915 = vst.msk [vmem:[#allocation2 + $0x18] sm:$0xff] %vm3911, %v3906
        %v3916 = vld [vmem:[#allocation2] sm:$0xff]
        %v3917 = vld [vmem:[#allocation2 + $0x8] sm:$0xff]
        %v3918 = vld [vmem:[#allocation2 + $0x10] sm:$0xff]
        %v3919 = vld [vmem:[#allocation2 + $0x18] sm:$0xff]
        %v3920 = vld [vmem:[#allocation17] sm:$0xff]
        %v3921 = vld [vmem:[#allocation17 + $0x8] sm:$0xff]
        %v3922 = vld [vmem:[#allocation17 + $0x10] sm:$0xff]
        %v3923 = vld [vmem:[#allocation17 + $0x18] sm:$0xff]
        %v3924 = vld [vmem:[#allocation17 + $0x20] sm:$0xff]
        %v3925 = vld [vmem:[#allocation17 + $0x28] sm:$0xff]
        %v3926 = vld [vmem:[#allocation18] sm:$0x3f]
        %v3928 = vperm.slane %v3926, 0
        %v3929 = vperm.slane %v3926, 1
        %v3930 = vperm.slane %v3926, 2
        %v3931 = vperm.slane %v3926, 3
        %v3932 = vperm.slane %v3926, 4
        %v3933 = vperm.slane %v3926, 5
        %v3941 = vsel %vm3885, %v3916, 0
        %v3944 = vsel %vm3885, %v3917, 0
        %v3947 = vsel %vm3885, %v3918, 0
        %v3950 = vsel %vm3885, %v3919, 0
        %3952 = vmatpush.msra.mxu0 0.0
        %3953 = vmatpush.msra.mxu0 0.0
        %3954 = vmatpush.msra.mxu0 0.0
        %3955 = vmatpush.msra.mxu0 0.0
        %3956 = vmatpush.msra.mxu0 0.0
        %3957 = vmatpush.msra.mxu0 0.0
        %3958 = vmatpush.msra.mxu0 0.0
        %3959 = vmatpush.msra.mxu0 0.0
        %3960 = vmatpush.msra.mxu0 0.0
        %3961 = vmatpush.msra.mxu0 0.0
        %3962 = vmatpush.msra.mxu0 0.0
        %3963 = vmatpush.msra.mxu0 0.0
        %3964 = vmatpush.msra.mxu0 0.0
        %3965 = vmatpush.msra.mxu0 0.0
        %3966 = vmatpush.msra.mxu0 0.0
        %3967 = vmatpush.msra.mxu0 %v3920
        %3968 = vmatmul.f32.gmra.mxu0 %v3941
        %v3969 = vpop.f32.mrf.mxu0
        %v3970 = vadd.f32 %v3928, %v3969
        %3971 = vmatmul.f32.gmra.mxu0 %v3944
        %v3972 = vpop.f32.mrf.mxu0
        %v3973 = vadd.f32 %v3928, %v3972
        %3974 = vmatmul.f32.gmra.mxu0 %v3947
        %v3975 = vpop.f32.mrf.mxu0
        %v3976 = vadd.f32 %v3928, %v3975
        %3977 = vmatmul.f32.gmra.mxu0 %v3950
        %v3978 = vpop.f32.mrf.mxu0
        %v3979 = vadd.f32 %v3928, %v3978
        %3980 = vdwg.mxu0
        %3981 = vmatpush.msra.mxu0 0.0
        %3982 = vmatpush.msra.mxu0 0.0
        %3983 = vmatpush.msra.mxu0 0.0
        %3984 = vmatpush.msra.mxu0 0.0
        %3985 = vmatpush.msra.mxu0 0.0
        %3986 = vmatpush.msra.mxu0 0.0
        %3987 = vmatpush.msra.mxu0 0.0
        %3988 = vmatpush.msra.mxu0 0.0
        %3989 = vmatpush.msra.mxu0 0.0
        %3990 = vmatpush.msra.mxu0 0.0
        %3991 = vmatpush.msra.mxu0 0.0
        %3992 = vmatpush.msra.mxu0 0.0
        %3993 = vmatpush.msra.mxu0 0.0
        %3994 = vmatpush.msra.mxu0 0.0
        %3995 = vmatpush.msra.mxu0 0.0
        %3996 = vmatpush.msra.mxu0 %v3921
        %3997 = vmatmul.f32.gmra.mxu0 %v3941
        %v3998 = vpop.f32.mrf.mxu0
        %v3999 = vadd.f32 %v3929, %v3998
        %4000 = vmatmul.f32.gmra.mxu0 %v3944
        %v4001 = vpop.f32.mrf.mxu0
        %v4002 = vadd.f32 %v3929, %v4001
        %4003 = vmatmul.f32.gmra.mxu0 %v3947
        %v4004 = vpop.f32.mrf.mxu0
        %v4005 = vadd.f32 %v3929, %v4004
        %4006 = vmatmul.f32.gmra.mxu0 %v3950
        %v4007 = vpop.f32.mrf.mxu0
        %v4008 = vadd.f32 %v3929, %v4007
        %4009 = vdwg.mxu0
        %4010 = vmatpush.msra.mxu0 0.0
        %4011 = vmatpush.msra.mxu0 0.0
        %4012 = vmatpush.msra.mxu0 0.0
        %4013 = vmatpush.msra.mxu0 0.0
        %4014 = vmatpush.msra.mxu0 0.0
        %4015 = vmatpush.msra.mxu0 0.0
        %4016 = vmatpush.msra.mxu0 0.0
        %4017 = vmatpush.msra.mxu0 0.0
        %4018 = vmatpush.msra.mxu0 0.0
        %4019 = vmatpush.msra.mxu0 0.0
        %4020 = vmatpush.msra.mxu0 0.0
        %4021 = vmatpush.msra.mxu0 0.0
        %4022 = vmatpush.msra.mxu0 0.0
        %4023 = vmatpush.msra.mxu0 0.0
        %4024 = vmatpush.msra.mxu0 0.0
        %4025 = vmatpush.msra.mxu0 %v3922
        %4026 = vmatmul.f32.gmra.mxu0 %v3941
        %v4027 = vpop.f32.mrf.mxu0
        %v4028 = vadd.f32 %v3930, %v4027
        %4029 = vmatmul.f32.gmra.mxu0 %v3944
        %v4030 = vpop.f32.mrf.mxu0
        %v4031 = vadd.f32 %v3930, %v4030
        %4032 = vmatmul.f32.gmra.mxu0 %v3947
        %v4033 = vpop.f32.mrf.mxu0
        %v4034 = vadd.f32 %v3930, %v4033
        %4035 = vmatmul.f32.gmra.mxu0 %v3950
        %v4036 = vpop.f32.mrf.mxu0
        %v4037 = vadd.f32 %v3930, %v4036
        %4038 = vdwg.mxu0
        %4039 = vmatpush.msra.mxu0 0.0
        %4040 = vmatpush.msra.mxu0 0.0
        %4041 = vmatpush.msra.mxu0 0.0
        %4042 = vmatpush.msra.mxu0 0.0
        %4043 = vmatpush.msra.mxu0 0.0
        %4044 = vmatpush.msra.mxu0 0.0
        %4045 = vmatpush.msra.mxu0 0.0
        %4046 = vmatpush.msra.mxu0 0.0
        %4047 = vmatpush.msra.mxu0 0.0
        %4048 = vmatpush.msra.mxu0 0.0
        %4049 = vmatpush.msra.mxu0 0.0
        %4050 = vmatpush.msra.mxu0 0.0
        %4051 = vmatpush.msra.mxu0 0.0
        %4052 = vmatpush.msra.mxu0 0.0
        %4053 = vmatpush.msra.mxu0 0.0
        %4054 = vmatpush.msra.mxu0 %v3923
        %4055 = vmatmul.f32.gmra.mxu0 %v3941
        %v4056 = vpop.f32.mrf.mxu0
        %v4057 = vadd.f32 %v3931, %v4056
        %4058 = vmatmul.f32.gmra.mxu0 %v3944
        %v4059 = vpop.f32.mrf.mxu0
        %v4060 = vadd.f32 %v3931, %v4059
        %4061 = vmatmul.f32.gmra.mxu0 %v3947
        %v4062 = vpop.f32.mrf.mxu0
        %v4063 = vadd.f32 %v3931, %v4062
        %4064 = vmatmul.f32.gmra.mxu0 %v3950
        %v4065 = vpop.f32.mrf.mxu0
        %v4066 = vadd.f32 %v3931, %v4065
        %4067 = vdwg.mxu0
        %4068 = vmatpush.msra.mxu0 0.0
        %4069 = vmatpush.msra.mxu0 0.0
        %4070 = vmatpush.msra.mxu0 0.0
        %4071 = vmatpush.msra.mxu0 0.0
        %4072 = vmatpush.msra.mxu0 0.0
        %4073 = vmatpush.msra.mxu0 0.0
        %4074 = vmatpush.msra.mxu0 0.0
        %4075 = vmatpush.msra.mxu0 0.0
        %4076 = vmatpush.msra.mxu0 0.0
        %4077 = vmatpush.msra.mxu0 0.0
        %4078 = vmatpush.msra.mxu0 0.0
        %4079 = vmatpush.msra.mxu0 0.0
        %4080 = vmatpush.msra.mxu0 0.0
        %4081 = vmatpush.msra.mxu0 0.0
        %4082 = vmatpush.msra.mxu0 0.0
        %4083 = vmatpush.msra.mxu0 %v3924
        %4084 = vmatmul.f32.gmra.mxu0 %v3941
        %v4085 = vpop.f32.mrf.mxu0
        %v4086 = vadd.f32 %v3932, %v4085
        %4087 = vmatmul.f32.gmra.mxu0 %v3944
        %v4088 = vpop.f32.mrf.mxu0
        %v4089 = vadd.f32 %v3932, %v4088
        %4090 = vmatmul.f32.gmra.mxu0 %v3947
        %v4091 = vpop.f32.mrf.mxu0
        %v4092 = vadd.f32 %v3932, %v4091
        %4093 = vmatmul.f32.gmra.mxu0 %v3950
        %v4094 = vpop.f32.mrf.mxu0
        %v4095 = vadd.f32 %v3932, %v4094
        %4096 = vdwg.mxu0
        %4097 = vmatpush.msra.mxu0 0.0
        %4098 = vmatpush.msra.mxu0 0.0
        %4099 = vmatpush.msra.mxu0 0.0
        %4100 = vmatpush.msra.mxu0 0.0
        %4101 = vmatpush.msra.mxu0 0.0
        %4102 = vmatpush.msra.mxu0 0.0
        %4103 = vmatpush.msra.mxu0 0.0
        %4104 = vmatpush.msra.mxu0 0.0
        %4105 = vmatpush.msra.mxu0 0.0
        %4106 = vmatpush.msra.mxu0 0.0
        %4107 = vmatpush.msra.mxu0 0.0
        %4108 = vmatpush.msra.mxu0 0.0
        %4109 = vmatpush.msra.mxu0 0.0
        %4110 = vmatpush.msra.mxu0 0.0
        %4111 = vmatpush.msra.mxu0 0.0
        %4112 = vmatpush.msra.mxu0 %v3925
        %4113 = vmatmul.f32.gmra.mxu0 %v3941
        %v4114 = vpop.f32.mrf.mxu0
        %v4115 = vadd.f32 %v3933, %v4114
        %4116 = vmatmul.f32.gmra.mxu0 %v3944
        %v4117 = vpop.f32.mrf.mxu0
        %v4118 = vadd.f32 %v3933, %v4117
        %4119 = vmatmul.f32.gmra.mxu0 %v3947
        %v4120 = vpop.f32.mrf.mxu0
        %v4121 = vadd.f32 %v3933, %v4120
        %4122 = vmatmul.f32.gmra.mxu0 %v3950
        %v4123 = vpop.f32.mrf.mxu0
        %v4124 = vadd.f32 %v3933, %v4123
        %4125 = vdwg.mxu0
        %v4126 = vmax.f32 %v3970, 0.0
        %v4127 = vmax.f32 %v3999, 0.0
        %v4128 = vmax.f32 %v4028, 0.0
        %v4129 = vmax.f32 %v4057, 0.0
        %v4130 = vmax.f32 %v4086, 0.0
        %v4131 = vmax.f32 %v4115, 0.0
        %v4132 = vmax.f32 %v3973, 0.0
        %v4133 = vmax.f32 %v4002, 0.0
        %v4134 = vmax.f32 %v4031, 0.0
        %v4135 = vmax.f32 %v4060, 0.0
        %v4136 = vmax.f32 %v4089, 0.0
        %v4137 = vmax.f32 %v4118, 0.0
        %v4138 = vmax.f32 %v3976, 0.0
        %v4139 = vmax.f32 %v4005, 0.0
        %v4140 = vmax.f32 %v4034, 0.0
        %v4141 = vmax.f32 %v4063, 0.0
        %v4142 = vmax.f32 %v4092, 0.0
        %v4143 = vmax.f32 %v4121, 0.0
        %v4144 = vmax.f32 %v3979, 0.0
        %v4145 = vmax.f32 %v4008, 0.0
        %v4146 = vmax.f32 %v4037, 0.0
        %v4147 = vmax.f32 %v4066, 0.0
        %v4148 = vmax.f32 %v4095, 0.0
        %v4149 = vmax.f32 %v4124, 0.0
        %v4150 = vpack.c.bf16 %v4132, %v4126
        %v4151 = vpack.c.bf16 %v4133, %v4127
        %v4152 = vpack.c.bf16 %v4134, %v4128
        %v4153 = vpack.c.bf16 %v4135, %v4129
        %v4154 = vpack.c.bf16 %v4136, %v4130
        %v4155 = vpack.c.bf16 %v4137, %v4131
        %v4156 = vpack.c.bf16 %v4144, %v4138
        %v4157 = vpack.c.bf16 %v4145, %v4139
        %v4158 = vpack.c.bf16 %v4146, %v4140
        %v4159 = vpack.c.bf16 %v4147, %v4141
        %v4160 = vpack.c.bf16 %v4148, %v4142
        %v4161 = vpack.c.bf16 %v4149, %v4143
        %v4162 = vld [vmem:[#allocation20] sm:$0xff]
        %v4163 = vld [vmem:[#allocation20 + $0x8] sm:$0xff]
        %v4164 = vld [vmem:[#allocation20 + $0x10] sm:$0xff]
        %v4165 = vld [vmem:[#allocation20 + $0x18] sm:$0xff]
        %v4166 = vld [vmem:[#allocation20 + $0x20] sm:$0xff]
        %v4167 = vld [vmem:[#allocation20 + $0x28] sm:$0xff]
        %v4168 = vld [vmem:[#allocation20 + $0x30] sm:$0xff]
        %v4169 = vld [vmem:[#allocation20 + $0x38] sm:$0xff]
        %v4170 = vld [vmem:[#allocation20 + $0x40] sm:$0xff]
        %v4171 = vld [vmem:[#allocation20 + $0x48] sm:$0xff]
        %v4172 = vld [vmem:[#allocation20 + $0x50] sm:$0xff]
        %v4173 = vld [vmem:[#allocation20 + $0x58] sm:$0xff]
        %v4174 = vld [vmem:[#allocation20 + $0x60] sm:$0xff]
        %v4175 = vld [vmem:[#allocation20 + $0x68] sm:$0xff]
        %v4176 = vld [vmem:[#allocation20 + $0x70] sm:$0xff]
        %v4177 = vld [vmem:[#allocation20 + $0x78] sm:$0xff]
        %v4178 = vld [vmem:[#allocation20 + $0x80] sm:$0xff]
        %v4179 = vld [vmem:[#allocation20 + $0x88] sm:$0xff]
        %v4180 = vld [vmem:[#allocation20 + $0x90] sm:$0xff]
        %v4181 = vld [vmem:[#allocation20 + $0x98] sm:$0xff]
        %v4182 = vld [vmem:[#allocation20 + $0xa0] sm:$0xff]
        %v4183 = vld [vmem:[#allocation20 + $0xa8] sm:$0xff]
        %v4184 = vld [vmem:[#allocation20 + $0xb0] sm:$0xff]
        %v4185 = vld [vmem:[#allocation20 + $0xb8] sm:$0xff]
        %v4186 = vld [vmem:[#allocation20 + $0xc0] sm:$0xff]
        %v4187 = vld [vmem:[#allocation20 + $0xc8] sm:$0xff]
        %v4188 = vld [vmem:[#allocation20 + $0xd0] sm:$0xff]
        %v4189 = vld [vmem:[#allocation20 + $0xd8] sm:$0xff]
        %v4190 = vld [vmem:[#allocation20 + $0xe0] sm:$0xff]
        %v4191 = vld [vmem:[#allocation20 + $0xe8] sm:$0xff]
        %v4192 = vld [vmem:[#allocation20 + $0xf0] sm:$0xff]
        %v4193 = vld [vmem:[#allocation20 + $0xf8] sm:$0xff]
        %v4194 = vld [vmem:[#allocation20 + $0x100] sm:$0xff]
        %v4195 = vld [vmem:[#allocation20 + $0x108] sm:$0xff]
        %v4196 = vld [vmem:[#allocation20 + $0x110] sm:$0xff]
        %v4197 = vld [vmem:[#allocation20 + $0x118] sm:$0xff]
        %v4198 = vld [vmem:[#allocation20 + $0x120] sm:$0xff]
        %v4199 = vld [vmem:[#allocation20 + $0x128] sm:$0xff]
        %v4200 = vld [vmem:[#allocation20 + $0x130] sm:$0xff]
        %v4201 = vld [vmem:[#allocation20 + $0x138] sm:$0xff]
        %v4202 = vld [vmem:[#allocation20 + $0x140] sm:$0xff]
        %v4203 = vld [vmem:[#allocation20 + $0x148] sm:$0xff]
        %v4204 = vld [vmem:[#allocation20 + $0x150] sm:$0xff]
        %v4205 = vld [vmem:[#allocation20 + $0x158] sm:$0xff]
        %v4206 = vld [vmem:[#allocation20 + $0x160] sm:$0xff]
        %v4207 = vld [vmem:[#allocation20 + $0x168] sm:$0xff]
        %v4208 = vld [vmem:[#allocation20 + $0x170] sm:$0xff]
        %v4209 = vld [vmem:[#allocation20 + $0x178] sm:$0xff]
        %v4210 = vld [vmem:[#allocation20 + $0x180] sm:$0xff]
        %v4211 = vld [vmem:[#allocation20 + $0x188] sm:$0xff]
        %v4212 = vld [vmem:[#allocation20 + $0x190] sm:$0xff]
        %v4213 = vld [vmem:[#allocation20 + $0x198] sm:$0xff]
        %v4214 = vld [vmem:[#allocation20 + $0x1a0] sm:$0xff]
        %v4215 = vld [vmem:[#allocation20 + $0x1a8] sm:$0xff]
        %v4216 = vld [vmem:[#allocation20 + $0x1b0] sm:$0xff]
        %v4217 = vld [vmem:[#allocation20 + $0x1b8] sm:$0xff]
        %v4218 = vld [vmem:[#allocation20 + $0x1c0] sm:$0xff]
        %v4219 = vld [vmem:[#allocation20 + $0x1c8] sm:$0xff]
        %v4220 = vld [vmem:[#allocation20 + $0x1d0] sm:$0xff]
        %v4221 = vld [vmem:[#allocation20 + $0x1d8] sm:$0xff]
        %v4222 = vld [vmem:[#allocation20 + $0x1e0] sm:$0xff]
        %v4223 = vld [vmem:[#allocation20 + $0x1e8] sm:$0xff]
        %v4224 = vld [vmem:[#allocation20 + $0x1f0] sm:$0xff]
        %v4225 = vld [vmem:[#allocation20 + $0x1f8] sm:$0xff]
        %v4226 = vld [vmem:[#allocation20 + $0x200] sm:$0xff]
        %v4227 = vld [vmem:[#allocation20 + $0x208] sm:$0xff]
        %v4228 = vld [vmem:[#allocation20 + $0x210] sm:$0xff]
        %v4229 = vld [vmem:[#allocation20 + $0x218] sm:$0xff]
        %v4230 = vld [vmem:[#allocation20 + $0x220] sm:$0xff]
        %v4231 = vld [vmem:[#allocation20 + $0x228] sm:$0xff]
        %v4232 = vld [vmem:[#allocation20 + $0x230] sm:$0xff]
        %v4233 = vld [vmem:[#allocation20 + $0x238] sm:$0xff]
        %v4234 = vld [vmem:[#allocation20 + $0x240] sm:$0xff]
        %v4235 = vld [vmem:[#allocation20 + $0x248] sm:$0xff]
        %v4236 = vld [vmem:[#allocation20 + $0x250] sm:$0xff]
        %v4237 = vld [vmem:[#allocation20 + $0x258] sm:$0xff]
        %v4238 = vld [vmem:[#allocation20 + $0x260] sm:$0xff]
        %v4239 = vld [vmem:[#allocation20 + $0x268] sm:$0xff]
        %v4240 = vld [vmem:[#allocation20 + $0x270] sm:$0xff]
        %v4241 = vld [vmem:[#allocation20 + $0x278] sm:$0xff]
        %v4242 = vld [vmem:[#allocation20 + $0x280] sm:$0xff]
        %v4243 = vld [vmem:[#allocation20 + $0x288] sm:$0xff]
        %v4244 = vld [vmem:[#allocation20 + $0x290] sm:$0xff]
        %v4245 = vld [vmem:[#allocation20 + $0x298] sm:$0xff]
        %v4246 = vld [vmem:[#allocation20 + $0x2a0] sm:$0xff]
        %v4247 = vld [vmem:[#allocation20 + $0x2a8] sm:$0xff]
        %v4248 = vld [vmem:[#allocation20 + $0x2b0] sm:$0xff]
        %v4249 = vld [vmem:[#allocation20 + $0x2b8] sm:$0xff]
        %v4250 = vld [vmem:[#allocation20 + $0x2c0] sm:$0xff]
        %v4251 = vld [vmem:[#allocation20 + $0x2c8] sm:$0xff]
        %v4252 = vld [vmem:[#allocation20 + $0x2d0] sm:$0xff]
        %v4253 = vld [vmem:[#allocation20 + $0x2d8] sm:$0xff]
        %v4254 = vld [vmem:[#allocation20 + $0x2e0] sm:$0xff]
        %v4255 = vld [vmem:[#allocation20 + $0x2e8] sm:$0xff]
        %v4256 = vld [vmem:[#allocation20 + $0x2f0] sm:$0xff]
        %v4257 = vld [vmem:[#allocation20 + $0x2f8] sm:$0xff]
        %v4258 = vld [vmem:[#allocation20 + $0x300] sm:$0xff]
        %v4259 = vld [vmem:[#allocation20 + $0x308] sm:$0xff]
        %v4260 = vld [vmem:[#allocation20 + $0x310] sm:$0xff]
        %v4261 = vld [vmem:[#allocation20 + $0x318] sm:$0xff]
        %v4262 = vld [vmem:[#allocation20 + $0x320] sm:$0xff]
        %v4263 = vld [vmem:[#allocation20 + $0x328] sm:$0xff]
        %v4264 = vld [vmem:[#allocation20 + $0x330] sm:$0xff]
        %v4265 = vld [vmem:[#allocation20 + $0x338] sm:$0xff]
        %v4266 = vld [vmem:[#allocation20 + $0x340] sm:$0xff]
        %v4267 = vld [vmem:[#allocation20 + $0x348] sm:$0xff]
        %v4268 = vld [vmem:[#allocation20 + $0x350] sm:$0xff]
        %v4269 = vld [vmem:[#allocation20 + $0x358] sm:$0xff]
        %v4270 = vld [vmem:[#allocation20 + $0x360] sm:$0xff]
        %v4271 = vld [vmem:[#allocation20 + $0x368] sm:$0xff]
        %v4272 = vld [vmem:[#allocation20 + $0x370] sm:$0xff]
        %v4273 = vld [vmem:[#allocation20 + $0x378] sm:$0xff]
        %v4274 = vld [vmem:[#allocation20 + $0x380] sm:$0xff]
        %v4275 = vld [vmem:[#allocation20 + $0x388] sm:$0xff]
        %v4276 = vld [vmem:[#allocation20 + $0x390] sm:$0xff]
        %v4277 = vld [vmem:[#allocation20 + $0x398] sm:$0xff]
        %v4278 = vld [vmem:[#allocation20 + $0x3a0] sm:$0xff]
        %v4279 = vld [vmem:[#allocation20 + $0x3a8] sm:$0xff]
        %v4280 = vld [vmem:[#allocation20 + $0x3b0] sm:$0xff]
        %v4281 = vld [vmem:[#allocation20 + $0x3b8] sm:$0xff]
        %v4282 = vld [vmem:[#allocation20 + $0x3c0] sm:$0xff]
        %v4283 = vld [vmem:[#allocation20 + $0x3c8] sm:$0xff]
        %v4284 = vld [vmem:[#allocation20 + $0x3d0] sm:$0xff]
        %v4285 = vld [vmem:[#allocation20 + $0x3d8] sm:$0xff]
        %v4286 = vld [vmem:[#allocation20 + $0x3e0] sm:$0xff]
        %v4287 = vld [vmem:[#allocation20 + $0x3e8] sm:$0xff]
        %v4288 = vld [vmem:[#allocation20 + $0x3f0] sm:$0xff]
        %v4289 = vld [vmem:[#allocation20 + $0x3f8] sm:$0xff]
        %v4290 = vld [vmem:[#allocation20 + $0x400] sm:$0xff]
        %v4291 = vld [vmem:[#allocation20 + $0x408] sm:$0xff]
        %v4292 = vld [vmem:[#allocation20 + $0x410] sm:$0xff]
        %v4293 = vld [vmem:[#allocation20 + $0x418] sm:$0xff]
        %v4294 = vld [vmem:[#allocation20 + $0x420] sm:$0xff]
        %v4295 = vld [vmem:[#allocation20 + $0x428] sm:$0xff]
        %v4296 = vld [vmem:[#allocation20 + $0x430] sm:$0xff]
        %v4297 = vld [vmem:[#allocation20 + $0x438] sm:$0xff]
        %v4298 = vld [vmem:[#allocation20 + $0x440] sm:$0xff]
        %v4299 = vld [vmem:[#allocation20 + $0x448] sm:$0xff]
        %v4300 = vld [vmem:[#allocation20 + $0x450] sm:$0xff]
        %v4301 = vld [vmem:[#allocation20 + $0x458] sm:$0xff]
        %v4302 = vld [vmem:[#allocation20 + $0x460] sm:$0xff]
        %v4303 = vld [vmem:[#allocation20 + $0x468] sm:$0xff]
        %v4304 = vld [vmem:[#allocation20 + $0x470] sm:$0xff]
        %v4305 = vld [vmem:[#allocation20 + $0x478] sm:$0xff]
        %v4306 = vld [vmem:[#allocation20 + $0x480] sm:$0xff]
        %v4307 = vld [vmem:[#allocation20 + $0x488] sm:$0xff]
        %v4308 = vld [vmem:[#allocation20 + $0x490] sm:$0xff]
        %v4309 = vld [vmem:[#allocation20 + $0x498] sm:$0xff]
        %v4310 = vld [vmem:[#allocation20 + $0x4a0] sm:$0xff]
        %v4311 = vld [vmem:[#allocation20 + $0x4a8] sm:$0xff]
        %v4312 = vld [vmem:[#allocation20 + $0x4b0] sm:$0xff]
        %v4313 = vld [vmem:[#allocation20 + $0x4b8] sm:$0xff]
        %v4314 = vld [vmem:[#allocation20 + $0x4c0] sm:$0xff]
        %v4315 = vld [vmem:[#allocation20 + $0x4c8] sm:$0xff]
        %v4316 = vld [vmem:[#allocation20 + $0x4d0] sm:$0xff]
        %v4317 = vld [vmem:[#allocation20 + $0x4d8] sm:$0xff]
        %v4318 = vld [vmem:[#allocation20 + $0x4e0] sm:$0xff]
        %v4319 = vld [vmem:[#allocation20 + $0x4e8] sm:$0xff]
        %v4320 = vld [vmem:[#allocation20 + $0x4f0] sm:$0xff]
        %v4321 = vld [vmem:[#allocation20 + $0x4f8] sm:$0xff]
        %v4322 = vld [vmem:[#allocation20 + $0x500] sm:$0xff]
        %v4323 = vld [vmem:[#allocation20 + $0x508] sm:$0xff]
        %v4324 = vld [vmem:[#allocation20 + $0x510] sm:$0xff]
        %v4325 = vld [vmem:[#allocation20 + $0x518] sm:$0xff]
        %v4326 = vld [vmem:[#allocation20 + $0x520] sm:$0xff]
        %v4327 = vld [vmem:[#allocation20 + $0x528] sm:$0xff]
        %v4328 = vld [vmem:[#allocation20 + $0x530] sm:$0xff]
        %v4329 = vld [vmem:[#allocation20 + $0x538] sm:$0xff]
        %v4330 = vld [vmem:[#allocation20 + $0x540] sm:$0xff]
        %v4331 = vld [vmem:[#allocation20 + $0x548] sm:$0xff]
        %v4332 = vld [vmem:[#allocation20 + $0x550] sm:$0xff]
        %v4333 = vld [vmem:[#allocation20 + $0x558] sm:$0xff]
        %v4334 = vld [vmem:[#allocation20 + $0x560] sm:$0xff]
        %v4335 = vld [vmem:[#allocation20 + $0x568] sm:$0xff]
        %v4336 = vld [vmem:[#allocation20 + $0x570] sm:$0xff]
        %v4337 = vld [vmem:[#allocation20 + $0x578] sm:$0xff]
        %v4338 = vld [vmem:[#allocation20 + $0x580] sm:$0xff]
        %v4339 = vld [vmem:[#allocation20 + $0x588] sm:$0xff]
        %v4340 = vld [vmem:[#allocation20 + $0x590] sm:$0xff]
        %v4341 = vld [vmem:[#allocation20 + $0x598] sm:$0xff]
        %v4342 = vld [vmem:[#allocation20 + $0x5a0] sm:$0xff]
        %v4343 = vld [vmem:[#allocation20 + $0x5a8] sm:$0xff]
        %v4344 = vld [vmem:[#allocation20 + $0x5b0] sm:$0xff]
        %v4345 = vld [vmem:[#allocation20 + $0x5b8] sm:$0xff]
        %v4346 = vld [vmem:[#allocation20 + $0x5c0] sm:$0xff]
        %v4347 = vld [vmem:[#allocation20 + $0x5c8] sm:$0xff]
        %v4348 = vld [vmem:[#allocation20 + $0x5d0] sm:$0xff]
        %v4349 = vld [vmem:[#allocation20 + $0x5d8] sm:$0xff]
        %v4350 = vld [vmem:[#allocation20 + $0x5e0] sm:$0xff]
        %v4351 = vld [vmem:[#allocation20 + $0x5e8] sm:$0xff]
        %v4352 = vld [vmem:[#allocation20 + $0x5f0] sm:$0xff]
        %v4353 = vld [vmem:[#allocation20 + $0x5f8] sm:$0xff]
        %v4354 = vld [vmem:[#allocation20 + $0x600] sm:$0xff]
        %v4355 = vld [vmem:[#allocation20 + $0x608] sm:$0xff]
        %v4356 = vld [vmem:[#allocation20 + $0x610] sm:$0xff]
        %v4357 = vld [vmem:[#allocation20 + $0x618] sm:$0xff]
        %v4358 = vld [vmem:[#allocation20 + $0x620] sm:$0xff]
        %v4359 = vld [vmem:[#allocation20 + $0x628] sm:$0xff]
        %v4360 = vld [vmem:[#allocation20 + $0x630] sm:$0xff]
        %v4361 = vld [vmem:[#allocation20 + $0x638] sm:$0xff]
        %v4362 = vld [vmem:[#allocation20 + $0x640] sm:$0xff]
        %v4363 = vld [vmem:[#allocation20 + $0x648] sm:$0xff]
        %v4364 = vld [vmem:[#allocation20 + $0x650] sm:$0xff]
        %v4365 = vld [vmem:[#allocation20 + $0x658] sm:$0xff]
        %v4366 = vld [vmem:[#allocation20 + $0x660] sm:$0xff]
        %v4367 = vld [vmem:[#allocation20 + $0x668] sm:$0xff]
        %v4368 = vld [vmem:[#allocation20 + $0x670] sm:$0xff]
        %v4369 = vld [vmem:[#allocation20 + $0x678] sm:$0xff]
        %v4370 = vld [vmem:[#allocation20 + $0x680] sm:$0xff]
        %v4371 = vld [vmem:[#allocation20 + $0x688] sm:$0xff]
        %v4372 = vld [vmem:[#allocation20 + $0x690] sm:$0xff]
        %v4373 = vld [vmem:[#allocation20 + $0x698] sm:$0xff]
        %v4374 = vld [vmem:[#allocation20 + $0x6a0] sm:$0xff]
        %v4375 = vld [vmem:[#allocation20 + $0x6a8] sm:$0xff]
        %v4376 = vld [vmem:[#allocation20 + $0x6b0] sm:$0xff]
        %v4377 = vld [vmem:[#allocation20 + $0x6b8] sm:$0xff]
        %v4378 = vld [vmem:[#allocation20 + $0x6c0] sm:$0xff]
        %v4379 = vld [vmem:[#allocation20 + $0x6c8] sm:$0xff]
        %v4380 = vld [vmem:[#allocation20 + $0x6d0] sm:$0xff]
        %v4381 = vld [vmem:[#allocation20 + $0x6d8] sm:$0xff]
        %v4382 = vld [vmem:[#allocation20 + $0x6e0] sm:$0xff]
        %v4383 = vld [vmem:[#allocation20 + $0x6e8] sm:$0xff]
        %v4384 = vld [vmem:[#allocation20 + $0x6f0] sm:$0xff]
        %v4385 = vld [vmem:[#allocation20 + $0x6f8] sm:$0xff]
        %v4386 = vld [vmem:[#allocation20 + $0x700] sm:$0xff]
        %v4387 = vld [vmem:[#allocation20 + $0x708] sm:$0xff]
        %v4388 = vld [vmem:[#allocation20 + $0x710] sm:$0xff]
        %v4389 = vld [vmem:[#allocation20 + $0x718] sm:$0xff]
        %v4390 = vld [vmem:[#allocation20 + $0x720] sm:$0xff]
        %v4391 = vld [vmem:[#allocation20 + $0x728] sm:$0xff]
        %v4392 = vld [vmem:[#allocation20 + $0x730] sm:$0xff]
        %v4393 = vld [vmem:[#allocation20 + $0x738] sm:$0xff]
        %v4394 = vld [vmem:[#allocation20 + $0x740] sm:$0xff]
        %v4395 = vld [vmem:[#allocation20 + $0x748] sm:$0xff]
        %v4396 = vld [vmem:[#allocation20 + $0x750] sm:$0xff]
        %v4397 = vld [vmem:[#allocation20 + $0x758] sm:$0xff]
        %v4398 = vld [vmem:[#allocation20 + $0x760] sm:$0xff]
        %v4399 = vld [vmem:[#allocation20 + $0x768] sm:$0xff]
        %v4400 = vld [vmem:[#allocation20 + $0x770] sm:$0xff]
        %v4401 = vld [vmem:[#allocation20 + $0x778] sm:$0xff]
        %v4402 = vld [vmem:[#allocation20 + $0x780] sm:$0xff]
        %v4403 = vld [vmem:[#allocation20 + $0x788] sm:$0xff]
        %v4404 = vld [vmem:[#allocation20 + $0x790] sm:$0xff]
        %v4405 = vld [vmem:[#allocation20 + $0x798] sm:$0xff]
        %v4406 = vld [vmem:[#allocation20 + $0x7a0] sm:$0xff]
        %v4407 = vld [vmem:[#allocation20 + $0x7a8] sm:$0xff]
        %v4408 = vld [vmem:[#allocation20 + $0x7b0] sm:$0xff]
        %v4409 = vld [vmem:[#allocation20 + $0x7b8] sm:$0xff]
        %v4410 = vld [vmem:[#allocation20 + $0x7c0] sm:$0xff]
        %v4411 = vld [vmem:[#allocation20 + $0x7c8] sm:$0xff]
        %v4412 = vld [vmem:[#allocation20 + $0x7d0] sm:$0xff]
        %v4413 = vld [vmem:[#allocation20 + $0x7d8] sm:$0xff]
        %v4414 = vld [vmem:[#allocation20 + $0x7e0] sm:$0xff]
        %v4415 = vld [vmem:[#allocation20 + $0x7e8] sm:$0xff]
        %v4416 = vld [vmem:[#allocation20 + $0x7f0] sm:$0xff]
        %v4417 = vld [vmem:[#allocation20 + $0x7f8] sm:$0xff]
        %v4418 = vld [vmem:[#allocation20 + $0x800] sm:$0xff]
        %v4419 = vld [vmem:[#allocation20 + $0x808] sm:$0xff]
        %v4420 = vld [vmem:[#allocation20 + $0x810] sm:$0xff]
        %v4421 = vld [vmem:[#allocation20 + $0x818] sm:$0xff]
        %v4422 = vld [vmem:[#allocation20 + $0x820] sm:$0xff]
        %v4423 = vld [vmem:[#allocation20 + $0x828] sm:$0xff]
        %v4424 = vld [vmem:[#allocation20 + $0x830] sm:$0xff]
        %v4425 = vld [vmem:[#allocation20 + $0x838] sm:$0xff]
        %v4426 = vld [vmem:[#allocation20 + $0x840] sm:$0xff]
        %v4427 = vld [vmem:[#allocation20 + $0x848] sm:$0xff]
        %v4428 = vld [vmem:[#allocation20 + $0x850] sm:$0xff]
        %v4429 = vld [vmem:[#allocation20 + $0x858] sm:$0xff]
        %v4430 = vld [vmem:[#allocation20 + $0x860] sm:$0xff]
        %v4431 = vld [vmem:[#allocation20 + $0x868] sm:$0xff]
        %v4432 = vld [vmem:[#allocation20 + $0x870] sm:$0xff]
        %v4433 = vld [vmem:[#allocation20 + $0x878] sm:$0xff]
        %v4434 = vld [vmem:[#allocation20 + $0x880] sm:$0xff]
        %v4435 = vld [vmem:[#allocation20 + $0x888] sm:$0xff]
        %v4436 = vld [vmem:[#allocation20 + $0x890] sm:$0xff]
        %v4437 = vld [vmem:[#allocation20 + $0x898] sm:$0xff]
        %v4438 = vld [vmem:[#allocation20 + $0x8a0] sm:$0xff]
        %v4439 = vld [vmem:[#allocation20 + $0x8a8] sm:$0xff]
        %v4440 = vld [vmem:[#allocation20 + $0x8b0] sm:$0xff]
        %v4441 = vld [vmem:[#allocation20 + $0x8b8] sm:$0xff]
        %v4442 = vld [vmem:[#allocation20 + $0x8c0] sm:$0xff]
        %v4443 = vld [vmem:[#allocation20 + $0x8c8] sm:$0xff]
        %v4444 = vld [vmem:[#allocation20 + $0x8d0] sm:$0xff]
        %v4445 = vld [vmem:[#allocation20 + $0x8d8] sm:$0xff]
        %v4446 = vld [vmem:[#allocation20 + $0x8e0] sm:$0xff]
        %v4447 = vld [vmem:[#allocation20 + $0x8e8] sm:$0xff]
        %v4448 = vld [vmem:[#allocation20 + $0x8f0] sm:$0xff]
        %v4449 = vld [vmem:[#allocation20 + $0x8f8] sm:$0xff]
        %v4450 = vld [vmem:[#allocation21] sm:$0x3f]
        %v4452 = vperm.slane %v4450, 0
        %v4453 = vperm.slane %v4450, 1
        %v4454 = vperm.slane %v4450, 2
        %v4455 = vperm.slane %v4450, 3
        %v4456 = vperm.slane %v4450, 4
        %v4457 = vperm.slane %v4450, 5
        %v4752 = vunpack.c.l.b16 %v4162
        %v4753 = vunpack.c.h.b16 %v4162
        %v4754 = vunpack.c.l.b16 %v4163
        %v4755 = vunpack.c.h.b16 %v4163
        %v4756 = vunpack.c.l.b16 %v4164
        %v4757 = vunpack.c.h.b16 %v4164
        %v4758 = vunpack.c.l.b16 %v4165
        %v4759 = vunpack.c.h.b16 %v4165
        %v4760 = vunpack.c.l.b16 %v4166
        %v4761 = vunpack.c.h.b16 %v4166
        %v4762 = vunpack.c.l.b16 %v4167
        %v4763 = vunpack.c.h.b16 %v4167
        %v4764 = vunpack.c.l.b16 %v4168
        %v4765 = vunpack.c.h.b16 %v4168
        %v4766 = vunpack.c.l.b16 %v4169
        %v4767 = vunpack.c.h.b16 %v4169
        %v4768 = vunpack.c.l.b16 %v4170
        %v4769 = vunpack.c.h.b16 %v4170
        %v4770 = vunpack.c.l.b16 %v4171
        %v4771 = vunpack.c.h.b16 %v4171
        %v4772 = vunpack.c.l.b16 %v4172
        %v4773 = vunpack.c.h.b16 %v4172
        %v4774 = vunpack.c.l.b16 %v4173
        %v4775 = vunpack.c.h.b16 %v4173
        %v4776 = vunpack.c.l.b16 %v4174
        %v4777 = vunpack.c.h.b16 %v4174
        %v4778 = vunpack.c.l.b16 %v4175
        %v4779 = vunpack.c.h.b16 %v4175
        %v4780 = vunpack.c.l.b16 %v4176
        %v4781 = vunpack.c.h.b16 %v4176
        %v4782 = vunpack.c.l.b16 %v4177
        %v4783 = vunpack.c.h.b16 %v4177
        %v4784 = vunpack.c.l.b16 %v4178
        %v4785 = vunpack.c.h.b16 %v4178
        %v4786 = vunpack.c.l.b16 %v4179
        %v4787 = vunpack.c.h.b16 %v4179
        %v4788 = vunpack.c.l.b16 %v4180
        %v4789 = vunpack.c.h.b16 %v4180
        %v4790 = vunpack.c.l.b16 %v4181
        %v4791 = vunpack.c.h.b16 %v4181
        %v4792 = vunpack.c.l.b16 %v4182
        %v4793 = vunpack.c.h.b16 %v4182
        %v4794 = vunpack.c.l.b16 %v4183
        %v4795 = vunpack.c.h.b16 %v4183
        %v4796 = vunpack.c.l.b16 %v4184
        %v4797 = vunpack.c.h.b16 %v4184
        %v4798 = vunpack.c.l.b16 %v4185
        %v4799 = vunpack.c.h.b16 %v4185
        %v4800 = vunpack.c.l.b16 %v4186
        %v4801 = vunpack.c.h.b16 %v4186
        %v4802 = vunpack.c.l.b16 %v4187
        %v4803 = vunpack.c.h.b16 %v4187
        %v4804 = vunpack.c.l.b16 %v4188
        %v4805 = vunpack.c.h.b16 %v4188
        %v4806 = vunpack.c.l.b16 %v4189
        %v4807 = vunpack.c.h.b16 %v4189
        %v4808 = vunpack.c.l.b16 %v4190
        %v4809 = vunpack.c.h.b16 %v4190
        %v4810 = vunpack.c.l.b16 %v4191
        %v4811 = vunpack.c.h.b16 %v4191
        %v4812 = vunpack.c.l.b16 %v4192
        %v4813 = vunpack.c.h.b16 %v4192
        %v4814 = vunpack.c.l.b16 %v4193
        %v4815 = vunpack.c.h.b16 %v4193
        %v4816 = vunpack.c.l.b16 %v4194
        %v4817 = vunpack.c.h.b16 %v4194
        %v4818 = vunpack.c.l.b16 %v4195
        %v4819 = vunpack.c.h.b16 %v4195
        %v4820 = vunpack.c.l.b16 %v4196
        %v4821 = vunpack.c.h.b16 %v4196
        %v4822 = vunpack.c.l.b16 %v4197
        %v4823 = vunpack.c.h.b16 %v4197
        %v4824 = vunpack.c.l.b16 %v4198
        %v4825 = vunpack.c.h.b16 %v4198
        %v4826 = vunpack.c.l.b16 %v4199
        %v4827 = vunpack.c.h.b16 %v4199
        %v4828 = vunpack.c.l.b16 %v4200
        %v4829 = vunpack.c.h.b16 %v4200
        %v4830 = vunpack.c.l.b16 %v4201
        %v4831 = vunpack.c.h.b16 %v4201
        %v4832 = vunpack.c.l.b16 %v4202
        %v4833 = vunpack.c.h.b16 %v4202
        %v4834 = vunpack.c.l.b16 %v4203
        %v4835 = vunpack.c.h.b16 %v4203
        %v4836 = vunpack.c.l.b16 %v4204
        %v4837 = vunpack.c.h.b16 %v4204
        %v4838 = vunpack.c.l.b16 %v4205
        %v4839 = vunpack.c.h.b16 %v4205
        %v4840 = vunpack.c.l.b16 %v4206
        %v4841 = vunpack.c.h.b16 %v4206
        %v4842 = vunpack.c.l.b16 %v4207
        %v4843 = vunpack.c.h.b16 %v4207
        %v4844 = vunpack.c.l.b16 %v4208
        %v4845 = vunpack.c.h.b16 %v4208
        %v4846 = vunpack.c.l.b16 %v4209
        %v4847 = vunpack.c.h.b16 %v4209
        %v4848 = vunpack.c.l.b16 %v4210
        %v4849 = vunpack.c.h.b16 %v4210
        %v4850 = vunpack.c.l.b16 %v4211
        %v4851 = vunpack.c.h.b16 %v4211
        %v4852 = vunpack.c.l.b16 %v4212
        %v4853 = vunpack.c.h.b16 %v4212
        %v4854 = vunpack.c.l.b16 %v4213
        %v4855 = vunpack.c.h.b16 %v4213
        %v4856 = vunpack.c.l.b16 %v4214
        %v4857 = vunpack.c.h.b16 %v4214
        %v4858 = vunpack.c.l.b16 %v4215
        %v4859 = vunpack.c.h.b16 %v4215
        %v4860 = vunpack.c.l.b16 %v4216
        %v4861 = vunpack.c.h.b16 %v4216
        %v4862 = vunpack.c.l.b16 %v4217
        %v4863 = vunpack.c.h.b16 %v4217
        %v4864 = vunpack.c.l.b16 %v4218
        %v4865 = vunpack.c.h.b16 %v4218
        %v4866 = vunpack.c.l.b16 %v4219
        %v4867 = vunpack.c.h.b16 %v4219
        %v4868 = vunpack.c.l.b16 %v4220
        %v4869 = vunpack.c.h.b16 %v4220
        %v4870 = vunpack.c.l.b16 %v4221
        %v4871 = vunpack.c.h.b16 %v4221
        %v4872 = vunpack.c.l.b16 %v4222
        %v4873 = vunpack.c.h.b16 %v4222
        %v4874 = vunpack.c.l.b16 %v4223
        %v4875 = vunpack.c.h.b16 %v4223
        %v4876 = vunpack.c.l.b16 %v4224
        %v4877 = vunpack.c.h.b16 %v4224
        %v4878 = vunpack.c.l.b16 %v4225
        %v4879 = vunpack.c.h.b16 %v4225
        %v4880 = vunpack.c.l.b16 %v4226
        %v4881 = vunpack.c.h.b16 %v4226
        %v4882 = vunpack.c.l.b16 %v4227
        %v4883 = vunpack.c.h.b16 %v4227
        %v4884 = vunpack.c.l.b16 %v4228
        %v4885 = vunpack.c.h.b16 %v4228
        %v4886 = vunpack.c.l.b16 %v4229
        %v4887 = vunpack.c.h.b16 %v4229
        %v4888 = vunpack.c.l.b16 %v4230
        %v4889 = vunpack.c.h.b16 %v4230
        %v4890 = vunpack.c.l.b16 %v4231
        %v4891 = vunpack.c.h.b16 %v4231
        %v4892 = vunpack.c.l.b16 %v4232
        %v4893 = vunpack.c.h.b16 %v4232
        %v4894 = vunpack.c.l.b16 %v4233
        %v4895 = vunpack.c.h.b16 %v4233
        %v4896 = vunpack.c.l.b16 %v4234
        %v4897 = vunpack.c.h.b16 %v4234
        %v4898 = vunpack.c.l.b16 %v4235
        %v4899 = vunpack.c.h.b16 %v4235
        %v4900 = vunpack.c.l.b16 %v4236
        %v4901 = vunpack.c.h.b16 %v4236
        %v4902 = vunpack.c.l.b16 %v4237
        %v4903 = vunpack.c.h.b16 %v4237
        %v4904 = vunpack.c.l.b16 %v4238
        %v4905 = vunpack.c.h.b16 %v4238
        %v4906 = vunpack.c.l.b16 %v4239
        %v4907 = vunpack.c.h.b16 %v4239
        %v4908 = vunpack.c.l.b16 %v4240
        %v4909 = vunpack.c.h.b16 %v4240
        %v4910 = vunpack.c.l.b16 %v4241
        %v4911 = vunpack.c.h.b16 %v4241
        %v4912 = vunpack.c.l.b16 %v4242
        %v4913 = vunpack.c.h.b16 %v4242
        %v4914 = vunpack.c.l.b16 %v4243
        %v4915 = vunpack.c.h.b16 %v4243
        %v4916 = vunpack.c.l.b16 %v4244
        %v4917 = vunpack.c.h.b16 %v4244
        %v4918 = vunpack.c.l.b16 %v4245
        %v4919 = vunpack.c.h.b16 %v4245
        %v4920 = vunpack.c.l.b16 %v4246
        %v4921 = vunpack.c.h.b16 %v4246
        %v4922 = vunpack.c.l.b16 %v4247
        %v4923 = vunpack.c.h.b16 %v4247
        %v4924 = vunpack.c.l.b16 %v4248
        %v4925 = vunpack.c.h.b16 %v4248
        %v4926 = vunpack.c.l.b16 %v4249
        %v4927 = vunpack.c.h.b16 %v4249
        %v4928 = vunpack.c.l.b16 %v4250
        %v4929 = vunpack.c.h.b16 %v4250
        %v4930 = vunpack.c.l.b16 %v4251
        %v4931 = vunpack.c.h.b16 %v4251
        %v4932 = vunpack.c.l.b16 %v4252
        %v4933 = vunpack.c.h.b16 %v4252
        %v4934 = vunpack.c.l.b16 %v4253
        %v4935 = vunpack.c.h.b16 %v4253
        %v4936 = vunpack.c.l.b16 %v4254
        %v4937 = vunpack.c.h.b16 %v4254
        %v4938 = vunpack.c.l.b16 %v4255
        %v4939 = vunpack.c.h.b16 %v4255
        %v4940 = vunpack.c.l.b16 %v4256
        %v4941 = vunpack.c.h.b16 %v4256
        %v4942 = vunpack.c.l.b16 %v4257
        %v4943 = vunpack.c.h.b16 %v4257
        %v4944 = vunpack.c.l.b16 %v4258
        %v4945 = vunpack.c.h.b16 %v4258
        %v4946 = vunpack.c.l.b16 %v4259
        %v4947 = vunpack.c.h.b16 %v4259
        %v4948 = vunpack.c.l.b16 %v4260
        %v4949 = vunpack.c.h.b16 %v4260
        %v4950 = vunpack.c.l.b16 %v4261
        %v4951 = vunpack.c.h.b16 %v4261
        %v4952 = vunpack.c.l.b16 %v4262
        %v4953 = vunpack.c.h.b16 %v4262
        %v4954 = vunpack.c.l.b16 %v4263
        %v4955 = vunpack.c.h.b16 %v4263
        %v4956 = vunpack.c.l.b16 %v4264
        %v4957 = vunpack.c.h.b16 %v4264
        %v4958 = vunpack.c.l.b16 %v4265
        %v4959 = vunpack.c.h.b16 %v4265
        %v4960 = vunpack.c.l.b16 %v4266
        %v4961 = vunpack.c.h.b16 %v4266
        %v4962 = vunpack.c.l.b16 %v4267
        %v4963 = vunpack.c.h.b16 %v4267
        %v4964 = vunpack.c.l.b16 %v4268
        %v4965 = vunpack.c.h.b16 %v4268
        %v4966 = vunpack.c.l.b16 %v4269
        %v4967 = vunpack.c.h.b16 %v4269
        %v4968 = vunpack.c.l.b16 %v4270
        %v4969 = vunpack.c.h.b16 %v4270
        %v4970 = vunpack.c.l.b16 %v4271
        %v4971 = vunpack.c.h.b16 %v4271
        %v4972 = vunpack.c.l.b16 %v4272
        %v4973 = vunpack.c.h.b16 %v4272
        %v4974 = vunpack.c.l.b16 %v4273
        %v4975 = vunpack.c.h.b16 %v4273
        %v4976 = vunpack.c.l.b16 %v4274
        %v4977 = vunpack.c.h.b16 %v4274
        %v4978 = vunpack.c.l.b16 %v4275
        %v4979 = vunpack.c.h.b16 %v4275
        %v4980 = vunpack.c.l.b16 %v4276
        %v4981 = vunpack.c.h.b16 %v4276
        %v4982 = vunpack.c.l.b16 %v4277
        %v4983 = vunpack.c.h.b16 %v4277
        %v4984 = vunpack.c.l.b16 %v4278
        %v4985 = vunpack.c.h.b16 %v4278
        %v4986 = vunpack.c.l.b16 %v4279
        %v4987 = vunpack.c.h.b16 %v4279
        %v4988 = vunpack.c.l.b16 %v4280
        %v4989 = vunpack.c.h.b16 %v4280
        %v4990 = vunpack.c.l.b16 %v4281
        %v4991 = vunpack.c.h.b16 %v4281
        %v4992 = vunpack.c.l.b16 %v4282
        %v4993 = vunpack.c.h.b16 %v4282
        %v4994 = vunpack.c.l.b16 %v4283
        %v4995 = vunpack.c.h.b16 %v4283
        %v4996 = vunpack.c.l.b16 %v4284
        %v4997 = vunpack.c.h.b16 %v4284
        %v4998 = vunpack.c.l.b16 %v4285
        %v4999 = vunpack.c.h.b16 %v4285
        %v5000 = vunpack.c.l.b16 %v4286
        %v5001 = vunpack.c.h.b16 %v4286
        %v5002 = vunpack.c.l.b16 %v4287
        %v5003 = vunpack.c.h.b16 %v4287
        %v5004 = vunpack.c.l.b16 %v4288
        %v5005 = vunpack.c.h.b16 %v4288
        %v5006 = vunpack.c.l.b16 %v4289
        %v5007 = vunpack.c.h.b16 %v4289
        %v5008 = vunpack.c.l.b16 %v4290
        %v5009 = vunpack.c.h.b16 %v4290
        %v5010 = vunpack.c.l.b16 %v4291
        %v5011 = vunpack.c.h.b16 %v4291
        %v5012 = vunpack.c.l.b16 %v4292
        %v5013 = vunpack.c.h.b16 %v4292
        %v5014 = vunpack.c.l.b16 %v4293
        %v5015 = vunpack.c.h.b16 %v4293
        %v5016 = vunpack.c.l.b16 %v4294
        %v5017 = vunpack.c.h.b16 %v4294
        %v5018 = vunpack.c.l.b16 %v4295
        %v5019 = vunpack.c.h.b16 %v4295
        %v5020 = vunpack.c.l.b16 %v4296
        %v5021 = vunpack.c.h.b16 %v4296
        %v5022 = vunpack.c.l.b16 %v4297
        %v5023 = vunpack.c.h.b16 %v4297
        %v5024 = vunpack.c.l.b16 %v4298
        %v5025 = vunpack.c.h.b16 %v4298
        %v5026 = vunpack.c.l.b16 %v4299
        %v5027 = vunpack.c.h.b16 %v4299
        %v5028 = vunpack.c.l.b16 %v4300
        %v5029 = vunpack.c.h.b16 %v4300
        %v5030 = vunpack.c.l.b16 %v4301
        %v5031 = vunpack.c.h.b16 %v4301
        %v5032 = vunpack.c.l.b16 %v4302
        %v5033 = vunpack.c.h.b16 %v4302
        %v5034 = vunpack.c.l.b16 %v4303
        %v5035 = vunpack.c.h.b16 %v4303
        %v5036 = vunpack.c.l.b16 %v4304
        %v5037 = vunpack.c.h.b16 %v4304
        %v5038 = vunpack.c.l.b16 %v4305
        %v5039 = vunpack.c.h.b16 %v4305
        %v5040 = vunpack.c.l.b16 %v4306
        %v5041 = vunpack.c.h.b16 %v4306
        %v5042 = vunpack.c.l.b16 %v4307
        %v5043 = vunpack.c.h.b16 %v4307
        %v5044 = vunpack.c.l.b16 %v4308
        %v5045 = vunpack.c.h.b16 %v4308
        %v5046 = vunpack.c.l.b16 %v4309
        %v5047 = vunpack.c.h.b16 %v4309
        %v5048 = vunpack.c.l.b16 %v4310
        %v5049 = vunpack.c.h.b16 %v4310
        %v5050 = vunpack.c.l.b16 %v4311
        %v5051 = vunpack.c.h.b16 %v4311
        %v5052 = vunpack.c.l.b16 %v4312
        %v5053 = vunpack.c.h.b16 %v4312
        %v5054 = vunpack.c.l.b16 %v4313
        %v5055 = vunpack.c.h.b16 %v4313
        %v5056 = vunpack.c.l.b16 %v4314
        %v5057 = vunpack.c.h.b16 %v4314
        %v5058 = vunpack.c.l.b16 %v4315
        %v5059 = vunpack.c.h.b16 %v4315
        %v5060 = vunpack.c.l.b16 %v4316
        %v5061 = vunpack.c.h.b16 %v4316
        %v5062 = vunpack.c.l.b16 %v4317
        %v5063 = vunpack.c.h.b16 %v4317
        %v5064 = vunpack.c.l.b16 %v4318
        %v5065 = vunpack.c.h.b16 %v4318
        %v5066 = vunpack.c.l.b16 %v4319
        %v5067 = vunpack.c.h.b16 %v4319
        %v5068 = vunpack.c.l.b16 %v4320
        %v5069 = vunpack.c.h.b16 %v4320
        %v5070 = vunpack.c.l.b16 %v4321
        %v5071 = vunpack.c.h.b16 %v4321
        %v5072 = vunpack.c.l.b16 %v4322
        %v5073 = vunpack.c.h.b16 %v4322
        %v5074 = vunpack.c.l.b16 %v4323
        %v5075 = vunpack.c.h.b16 %v4323
        %v5076 = vunpack.c.l.b16 %v4324
        %v5077 = vunpack.c.h.b16 %v4324
        %v5078 = vunpack.c.l.b16 %v4325
        %v5079 = vunpack.c.h.b16 %v4325
        %v5080 = vunpack.c.l.b16 %v4326
        %v5081 = vunpack.c.h.b16 %v4326
        %v5082 = vunpack.c.l.b16 %v4327
        %v5083 = vunpack.c.h.b16 %v4327
        %v5084 = vunpack.c.l.b16 %v4328
        %v5085 = vunpack.c.h.b16 %v4328
        %v5086 = vunpack.c.l.b16 %v4329
        %v5087 = vunpack.c.h.b16 %v4329
        %v5088 = vunpack.c.l.b16 %v4330
        %v5089 = vunpack.c.h.b16 %v4330
        %v5090 = vunpack.c.l.b16 %v4331
        %v5091 = vunpack.c.h.b16 %v4331
        %v5092 = vunpack.c.l.b16 %v4332
        %v5093 = vunpack.c.h.b16 %v4332
        %v5094 = vunpack.c.l.b16 %v4333
        %v5095 = vunpack.c.h.b16 %v4333
        %v5096 = vunpack.c.l.b16 %v4334
        %v5097 = vunpack.c.h.b16 %v4334
        %v5098 = vunpack.c.l.b16 %v4335
        %v5099 = vunpack.c.h.b16 %v4335
        %v5100 = vunpack.c.l.b16 %v4336
        %v5101 = vunpack.c.h.b16 %v4336
        %v5102 = vunpack.c.l.b16 %v4337
        %v5103 = vunpack.c.h.b16 %v4337
        %v5104 = vunpack.c.l.b16 %v4338
        %v5105 = vunpack.c.h.b16 %v4338
        %v5106 = vunpack.c.l.b16 %v4339
        %v5107 = vunpack.c.h.b16 %v4339
        %v5108 = vunpack.c.l.b16 %v4340
        %v5109 = vunpack.c.h.b16 %v4340
        %v5110 = vunpack.c.l.b16 %v4341
        %v5111 = vunpack.c.h.b16 %v4341
        %v5112 = vunpack.c.l.b16 %v4342
        %v5113 = vunpack.c.h.b16 %v4342
        %v5114 = vunpack.c.l.b16 %v4343
        %v5115 = vunpack.c.h.b16 %v4343
        %v5116 = vunpack.c.l.b16 %v4344
        %v5117 = vunpack.c.h.b16 %v4344
        %v5118 = vunpack.c.l.b16 %v4345
        %v5119 = vunpack.c.h.b16 %v4345
        %v5120 = vunpack.c.l.b16 %v4346
        %v5121 = vunpack.c.h.b16 %v4346
        %v5122 = vunpack.c.l.b16 %v4347
        %v5123 = vunpack.c.h.b16 %v4347
        %v5124 = vunpack.c.l.b16 %v4348
        %v5125 = vunpack.c.h.b16 %v4348
        %v5126 = vunpack.c.l.b16 %v4349
        %v5127 = vunpack.c.h.b16 %v4349
        %v5128 = vunpack.c.l.b16 %v4350
        %v5129 = vunpack.c.h.b16 %v4350
        %v5130 = vunpack.c.l.b16 %v4351
        %v5131 = vunpack.c.h.b16 %v4351
        %v5132 = vunpack.c.l.b16 %v4352
        %v5133 = vunpack.c.h.b16 %v4352
        %v5134 = vunpack.c.l.b16 %v4353
        %v5135 = vunpack.c.h.b16 %v4353
        %v5136 = vunpack.c.l.b16 %v4354
        %v5137 = vunpack.c.h.b16 %v4354
        %v5138 = vunpack.c.l.b16 %v4355
        %v5139 = vunpack.c.h.b16 %v4355
        %v5140 = vunpack.c.l.b16 %v4356
        %v5141 = vunpack.c.h.b16 %v4356
        %v5142 = vunpack.c.l.b16 %v4357
        %v5143 = vunpack.c.h.b16 %v4357
        %v5144 = vunpack.c.l.b16 %v4358
        %v5145 = vunpack.c.h.b16 %v4358
        %v5146 = vunpack.c.l.b16 %v4359
        %v5147 = vunpack.c.h.b16 %v4359
        %v5148 = vunpack.c.l.b16 %v4360
        %v5149 = vunpack.c.h.b16 %v4360
        %v5150 = vunpack.c.l.b16 %v4361
        %v5151 = vunpack.c.h.b16 %v4361
        %v5152 = vunpack.c.l.b16 %v4362
        %v5153 = vunpack.c.h.b16 %v4362
        %v5154 = vunpack.c.l.b16 %v4363
        %v5155 = vunpack.c.h.b16 %v4363
        %v5156 = vunpack.c.l.b16 %v4364
        %v5157 = vunpack.c.h.b16 %v4364
        %v5158 = vunpack.c.l.b16 %v4365
        %v5159 = vunpack.c.h.b16 %v4365
        %v5160 = vunpack.c.l.b16 %v4366
        %v5161 = vunpack.c.h.b16 %v4366
        %v5162 = vunpack.c.l.b16 %v4367
        %v5163 = vunpack.c.h.b16 %v4367
        %v5164 = vunpack.c.l.b16 %v4368
        %v5165 = vunpack.c.h.b16 %v4368
        %v5166 = vunpack.c.l.b16 %v4369
        %v5167 = vunpack.c.h.b16 %v4369
        %v5168 = vunpack.c.l.b16 %v4370
        %v5169 = vunpack.c.h.b16 %v4370
        %v5170 = vunpack.c.l.b16 %v4371
        %v5171 = vunpack.c.h.b16 %v4371
        %v5172 = vunpack.c.l.b16 %v4372
        %v5173 = vunpack.c.h.b16 %v4372
        %v5174 = vunpack.c.l.b16 %v4373
        %v5175 = vunpack.c.h.b16 %v4373
        %v5176 = vunpack.c.l.b16 %v4374
        %v5177 = vunpack.c.h.b16 %v4374
        %v5178 = vunpack.c.l.b16 %v4375
        %v5179 = vunpack.c.h.b16 %v4375
        %v5180 = vunpack.c.l.b16 %v4376
        %v5181 = vunpack.c.h.b16 %v4376
        %v5182 = vunpack.c.l.b16 %v4377
        %v5183 = vunpack.c.h.b16 %v4377
        %v5184 = vunpack.c.l.b16 %v4378
        %v5185 = vunpack.c.h.b16 %v4378
        %v5186 = vunpack.c.l.b16 %v4379
        %v5187 = vunpack.c.h.b16 %v4379
        %v5188 = vunpack.c.l.b16 %v4380
        %v5189 = vunpack.c.h.b16 %v4380
        %v5190 = vunpack.c.l.b16 %v4381
        %v5191 = vunpack.c.h.b16 %v4381
        %v5192 = vunpack.c.l.b16 %v4382
        %v5193 = vunpack.c.h.b16 %v4382
        %v5194 = vunpack.c.l.b16 %v4383
        %v5195 = vunpack.c.h.b16 %v4383
        %v5196 = vunpack.c.l.b16 %v4384
        %v5197 = vunpack.c.h.b16 %v4384
        %v5198 = vunpack.c.l.b16 %v4385
        %v5199 = vunpack.c.h.b16 %v4385
        %v5200 = vunpack.c.l.b16 %v4386
        %v5201 = vunpack.c.h.b16 %v4386
        %v5202 = vunpack.c.l.b16 %v4387
        %v5203 = vunpack.c.h.b16 %v4387
        %v5204 = vunpack.c.l.b16 %v4388
        %v5205 = vunpack.c.h.b16 %v4388
        %v5206 = vunpack.c.l.b16 %v4389
        %v5207 = vunpack.c.h.b16 %v4389
        %v5208 = vunpack.c.l.b16 %v4390
        %v5209 = vunpack.c.h.b16 %v4390
        %v5210 = vunpack.c.l.b16 %v4391
        %v5211 = vunpack.c.h.b16 %v4391
        %v5212 = vunpack.c.l.b16 %v4392
        %v5213 = vunpack.c.h.b16 %v4392
        %v5214 = vunpack.c.l.b16 %v4393
        %v5215 = vunpack.c.h.b16 %v4393
        %v5216 = vunpack.c.l.b16 %v4394
        %v5217 = vunpack.c.h.b16 %v4394
        %v5218 = vunpack.c.l.b16 %v4395
        %v5219 = vunpack.c.h.b16 %v4395
        %v5220 = vunpack.c.l.b16 %v4396
        %v5221 = vunpack.c.h.b16 %v4396
        %v5222 = vunpack.c.l.b16 %v4397
        %v5223 = vunpack.c.h.b16 %v4397
        %v5224 = vunpack.c.l.b16 %v4398
        %v5225 = vunpack.c.h.b16 %v4398
        %v5226 = vunpack.c.l.b16 %v4399
        %v5227 = vunpack.c.h.b16 %v4399
        %v5228 = vunpack.c.l.b16 %v4400
        %v5229 = vunpack.c.h.b16 %v4400
        %v5230 = vunpack.c.l.b16 %v4401
        %v5231 = vunpack.c.h.b16 %v4401
        %v5232 = vunpack.c.l.b16 %v4402
        %v5233 = vunpack.c.h.b16 %v4402
        %v5234 = vunpack.c.l.b16 %v4403
        %v5235 = vunpack.c.h.b16 %v4403
        %v5236 = vunpack.c.l.b16 %v4404
        %v5237 = vunpack.c.h.b16 %v4404
        %v5238 = vunpack.c.l.b16 %v4405
        %v5239 = vunpack.c.h.b16 %v4405
        %v5240 = vunpack.c.l.b16 %v4406
        %v5241 = vunpack.c.h.b16 %v4406
        %v5242 = vunpack.c.l.b16 %v4407
        %v5243 = vunpack.c.h.b16 %v4407
        %v5244 = vunpack.c.l.b16 %v4408
        %v5245 = vunpack.c.h.b16 %v4408
        %v5246 = vunpack.c.l.b16 %v4409
        %v5247 = vunpack.c.h.b16 %v4409
        %v5248 = vunpack.c.l.b16 %v4410
        %v5249 = vunpack.c.h.b16 %v4410
        %v5250 = vunpack.c.l.b16 %v4411
        %v5251 = vunpack.c.h.b16 %v4411
        %v5252 = vunpack.c.l.b16 %v4412
        %v5253 = vunpack.c.h.b16 %v4412
        %v5254 = vunpack.c.l.b16 %v4413
        %v5255 = vunpack.c.h.b16 %v4413
        %v5256 = vunpack.c.l.b16 %v4414
        %v5257 = vunpack.c.h.b16 %v4414
        %v5258 = vunpack.c.l.b16 %v4415
        %v5259 = vunpack.c.h.b16 %v4415
        %v5260 = vunpack.c.l.b16 %v4416
        %v5261 = vunpack.c.h.b16 %v4416
        %v5262 = vunpack.c.l.b16 %v4417
        %v5263 = vunpack.c.h.b16 %v4417
        %v5264 = vunpack.c.l.b16 %v4418
        %v5265 = vunpack.c.h.b16 %v4418
        %v5266 = vunpack.c.l.b16 %v4419
        %v5267 = vunpack.c.h.b16 %v4419
        %v5268 = vunpack.c.l.b16 %v4420
        %v5269 = vunpack.c.h.b16 %v4420
        %v5270 = vunpack.c.l.b16 %v4421
        %v5271 = vunpack.c.h.b16 %v4421
        %v5272 = vunpack.c.l.b16 %v4422
        %v5273 = vunpack.c.h.b16 %v4422
        %v5274 = vunpack.c.l.b16 %v4423
        %v5275 = vunpack.c.h.b16 %v4423
        %v5276 = vunpack.c.l.b16 %v4424
        %v5277 = vunpack.c.h.b16 %v4424
        %v5278 = vunpack.c.l.b16 %v4425
        %v5279 = vunpack.c.h.b16 %v4425
        %v5280 = vunpack.c.l.b16 %v4426
        %v5281 = vunpack.c.h.b16 %v4426
        %v5282 = vunpack.c.l.b16 %v4427
        %v5283 = vunpack.c.h.b16 %v4427
        %v5284 = vunpack.c.l.b16 %v4428
        %v5285 = vunpack.c.h.b16 %v4428
        %v5286 = vunpack.c.l.b16 %v4429
        %v5287 = vunpack.c.h.b16 %v4429
        %v5288 = vunpack.c.l.b16 %v4430
        %v5289 = vunpack.c.h.b16 %v4430
        %v5290 = vunpack.c.l.b16 %v4431
        %v5291 = vunpack.c.h.b16 %v4431
        %v5292 = vunpack.c.l.b16 %v4432
        %v5293 = vunpack.c.h.b16 %v4432
        %v5294 = vunpack.c.l.b16 %v4433
        %v5295 = vunpack.c.h.b16 %v4433
        %v5296 = vunpack.c.l.b16 %v4434
        %v5297 = vunpack.c.h.b16 %v4434
        %v5298 = vunpack.c.l.b16 %v4435
        %v5299 = vunpack.c.h.b16 %v4435
        %v5300 = vunpack.c.l.b16 %v4436
        %v5301 = vunpack.c.h.b16 %v4436
        %v5302 = vunpack.c.l.b16 %v4437
        %v5303 = vunpack.c.h.b16 %v4437
        %v5304 = vunpack.c.l.b16 %v4438
        %v5305 = vunpack.c.h.b16 %v4438
        %v5306 = vunpack.c.l.b16 %v4439
        %v5307 = vunpack.c.h.b16 %v4439
        %v5308 = vunpack.c.l.b16 %v4440
        %v5309 = vunpack.c.h.b16 %v4440
        %v5310 = vunpack.c.l.b16 %v4441
        %v5311 = vunpack.c.h.b16 %v4441
        %v5312 = vunpack.c.l.b16 %v4442
        %v5313 = vunpack.c.h.b16 %v4442
        %v5314 = vunpack.c.l.b16 %v4443
        %v5315 = vunpack.c.h.b16 %v4443
        %v5316 = vunpack.c.l.b16 %v4444
        %v5317 = vunpack.c.h.b16 %v4444
        %v5318 = vunpack.c.l.b16 %v4445
        %v5319 = vunpack.c.h.b16 %v4445
        %v5320 = vunpack.c.l.b16 %v4446
        %v5321 = vunpack.c.h.b16 %v4446
        %v5322 = vunpack.c.l.b16 %v4447
        %v5323 = vunpack.c.h.b16 %v4447
        %v5324 = vunpack.c.l.b16 %v4448
        %v5325 = vunpack.c.h.b16 %v4448
        %v5326 = vunpack.c.l.b16 %v4449
        %v5327 = vunpack.c.h.b16 %v4449
        %v5328 = vpack.c.b16 %v4758, %v4752
        %v5329 = vpack.c.b16 %v4759, %v4753
        %v5330 = vpack.c.b16 %v4760, %v4754
        %v5331 = vpack.c.b16 %v4761, %v4755
        %v5332 = vpack.c.b16 %v4762, %v4756
        %v5333 = vpack.c.b16 %v4763, %v4757
        %v5334 = vpack.c.b16 %v4770, %v4764
        %v5335 = vpack.c.b16 %v4771, %v4765
        %v5336 = vpack.c.b16 %v4772, %v4766
        %v5337 = vpack.c.b16 %v4773, %v4767
        %v5338 = vpack.c.b16 %v4774, %v4768
        %v5339 = vpack.c.b16 %v4775, %v4769
        %v5340 = vpack.c.b16 %v4782, %v4776
        %v5341 = vpack.c.b16 %v4783, %v4777
        %v5342 = vpack.c.b16 %v4784, %v4778
        %v5343 = vpack.c.b16 %v4785, %v4779
        %v5344 = vpack.c.b16 %v4786, %v4780
        %v5345 = vpack.c.b16 %v4787, %v4781
        %v5346 = vpack.c.b16 %v4794, %v4788
        %v5347 = vpack.c.b16 %v4795, %v4789
        %v5348 = vpack.c.b16 %v4796, %v4790
        %v5349 = vpack.c.b16 %v4797, %v4791
        %v5350 = vpack.c.b16 %v4798, %v4792
        %v5351 = vpack.c.b16 %v4799, %v4793
        %v5352 = vpack.c.b16 %v4806, %v4800
        %v5353 = vpack.c.b16 %v4807, %v4801
        %v5354 = vpack.c.b16 %v4808, %v4802
        %v5355 = vpack.c.b16 %v4809, %v4803
        %v5356 = vpack.c.b16 %v4810, %v4804
        %v5357 = vpack.c.b16 %v4811, %v4805
        %v5358 = vpack.c.b16 %v4818, %v4812
        %v5359 = vpack.c.b16 %v4819, %v4813
        %v5360 = vpack.c.b16 %v4820, %v4814
        %v5361 = vpack.c.b16 %v4821, %v4815
        %v5362 = vpack.c.b16 %v4822, %v4816
        %v5363 = vpack.c.b16 %v4823, %v4817
        %v5364 = vpack.c.b16 %v4830, %v4824
        %v5365 = vpack.c.b16 %v4831, %v4825
        %v5366 = vpack.c.b16 %v4832, %v4826
        %v5367 = vpack.c.b16 %v4833, %v4827
        %v5368 = vpack.c.b16 %v4834, %v4828
        %v5369 = vpack.c.b16 %v4835, %v4829
        %v5370 = vpack.c.b16 %v4842, %v4836
        %v5371 = vpack.c.b16 %v4843, %v4837
        %v5372 = vpack.c.b16 %v4844, %v4838
        %v5373 = vpack.c.b16 %v4845, %v4839
        %v5374 = vpack.c.b16 %v4846, %v4840
        %v5375 = vpack.c.b16 %v4847, %v4841
        %v5376 = vpack.c.b16 %v4854, %v4848
        %v5377 = vpack.c.b16 %v4855, %v4849
        %v5378 = vpack.c.b16 %v4856, %v4850
        %v5379 = vpack.c.b16 %v4857, %v4851
        %v5380 = vpack.c.b16 %v4858, %v4852
        %v5381 = vpack.c.b16 %v4859, %v4853
        %v5382 = vpack.c.b16 %v4866, %v4860
        %v5383 = vpack.c.b16 %v4867, %v4861
        %v5384 = vpack.c.b16 %v4868, %v4862
        %v5385 = vpack.c.b16 %v4869, %v4863
        %v5386 = vpack.c.b16 %v4870, %v4864
        %v5387 = vpack.c.b16 %v4871, %v4865
        %v5388 = vpack.c.b16 %v4878, %v4872
        %v5389 = vpack.c.b16 %v4879, %v4873
        %v5390 = vpack.c.b16 %v4880, %v4874
        %v5391 = vpack.c.b16 %v4881, %v4875
        %v5392 = vpack.c.b16 %v4882, %v4876
        %v5393 = vpack.c.b16 %v4883, %v4877
        %v5394 = vpack.c.b16 %v4890, %v4884
        %v5395 = vpack.c.b16 %v4891, %v4885
        %v5396 = vpack.c.b16 %v4892, %v4886
        %v5397 = vpack.c.b16 %v4893, %v4887
        %v5398 = vpack.c.b16 %v4894, %v4888
        %v5399 = vpack.c.b16 %v4895, %v4889
        %v5400 = vpack.c.b16 %v4902, %v4896
        %v5401 = vpack.c.b16 %v4903, %v4897
        %v5402 = vpack.c.b16 %v4904, %v4898
        %v5403 = vpack.c.b16 %v4905, %v4899
        %v5404 = vpack.c.b16 %v4906, %v4900
        %v5405 = vpack.c.b16 %v4907, %v4901
        %v5406 = vpack.c.b16 %v4914, %v4908
        %v5407 = vpack.c.b16 %v4915, %v4909
        %v5408 = vpack.c.b16 %v4916, %v4910
        %v5409 = vpack.c.b16 %v4917, %v4911
        %v5410 = vpack.c.b16 %v4918, %v4912
        %v5411 = vpack.c.b16 %v4919, %v4913
        %v5412 = vpack.c.b16 %v4926, %v4920
        %v5413 = vpack.c.b16 %v4927, %v4921
        %v5414 = vpack.c.b16 %v4928, %v4922
        %v5415 = vpack.c.b16 %v4929, %v4923
        %v5416 = vpack.c.b16 %v4930, %v4924
        %v5417 = vpack.c.b16 %v4931, %v4925
        %v5418 = vpack.c.b16 %v4938, %v4932
        %v5419 = vpack.c.b16 %v4939, %v4933
        %v5420 = vpack.c.b16 %v4940, %v4934
        %v5421 = vpack.c.b16 %v4941, %v4935
        %v5422 = vpack.c.b16 %v4942, %v4936
        %v5423 = vpack.c.b16 %v4943, %v4937
        %v5424 = vpack.c.b16 %v4950, %v4944
        %v5425 = vpack.c.b16 %v4951, %v4945
        %v5426 = vpack.c.b16 %v4952, %v4946
        %v5427 = vpack.c.b16 %v4953, %v4947
        %v5428 = vpack.c.b16 %v4954, %v4948
        %v5429 = vpack.c.b16 %v4955, %v4949
        %v5430 = vpack.c.b16 %v4962, %v4956
        %v5431 = vpack.c.b16 %v4963, %v4957
        %v5432 = vpack.c.b16 %v4964, %v4958
        %v5433 = vpack.c.b16 %v4965, %v4959
        %v5434 = vpack.c.b16 %v4966, %v4960
        %v5435 = vpack.c.b16 %v4967, %v4961
        %v5436 = vpack.c.b16 %v4974, %v4968
        %v5437 = vpack.c.b16 %v4975, %v4969
        %v5438 = vpack.c.b16 %v4976, %v4970
        %v5439 = vpack.c.b16 %v4977, %v4971
        %v5440 = vpack.c.b16 %v4978, %v4972
        %v5441 = vpack.c.b16 %v4979, %v4973
        %v5442 = vpack.c.b16 %v4986, %v4980
        %v5443 = vpack.c.b16 %v4987, %v4981
        %v5444 = vpack.c.b16 %v4988, %v4982
        %v5445 = vpack.c.b16 %v4989, %v4983
        %v5446 = vpack.c.b16 %v4990, %v4984
        %v5447 = vpack.c.b16 %v4991, %v4985
        %v5448 = vpack.c.b16 %v4998, %v4992
        %v5449 = vpack.c.b16 %v4999, %v4993
        %v5450 = vpack.c.b16 %v5000, %v4994
        %v5451 = vpack.c.b16 %v5001, %v4995
        %v5452 = vpack.c.b16 %v5002, %v4996
        %v5453 = vpack.c.b16 %v5003, %v4997
        %v5454 = vpack.c.b16 %v5010, %v5004
        %v5455 = vpack.c.b16 %v5011, %v5005
        %v5456 = vpack.c.b16 %v5012, %v5006
        %v5457 = vpack.c.b16 %v5013, %v5007
        %v5458 = vpack.c.b16 %v5014, %v5008
        %v5459 = vpack.c.b16 %v5015, %v5009
        %v5460 = vpack.c.b16 %v5022, %v5016
        %v5461 = vpack.c.b16 %v5023, %v5017
        %v5462 = vpack.c.b16 %v5024, %v5018
        %v5463 = vpack.c.b16 %v5025, %v5019
        %v5464 = vpack.c.b16 %v5026, %v5020
        %v5465 = vpack.c.b16 %v5027, %v5021
        %v5466 = vpack.c.b16 %v5034, %v5028
        %v5467 = vpack.c.b16 %v5035, %v5029
        %v5468 = vpack.c.b16 %v5036, %v5030
        %v5469 = vpack.c.b16 %v5037, %v5031
        %v5470 = vpack.c.b16 %v5038, %v5032
        %v5471 = vpack.c.b16 %v5039, %v5033
        %v5472 = vpack.c.b16 %v5046, %v5040
        %v5473 = vpack.c.b16 %v5047, %v5041
        %v5474 = vpack.c.b16 %v5048, %v5042
        %v5475 = vpack.c.b16 %v5049, %v5043
        %v5476 = vpack.c.b16 %v5050, %v5044
        %v5477 = vpack.c.b16 %v5051, %v5045
        %v5478 = vpack.c.b16 %v5058, %v5052
        %v5479 = vpack.c.b16 %v5059, %v5053
        %v5480 = vpack.c.b16 %v5060, %v5054
        %v5481 = vpack.c.b16 %v5061, %v5055
        %v5482 = vpack.c.b16 %v5062, %v5056
        %v5483 = vpack.c.b16 %v5063, %v5057
        %v5484 = vpack.c.b16 %v5070, %v5064
        %v5485 = vpack.c.b16 %v5071, %v5065
        %v5486 = vpack.c.b16 %v5072, %v5066
        %v5487 = vpack.c.b16 %v5073, %v5067
        %v5488 = vpack.c.b16 %v5074, %v5068
        %v5489 = vpack.c.b16 %v5075, %v5069
        %v5490 = vpack.c.b16 %v5082, %v5076
        %v5491 = vpack.c.b16 %v5083, %v5077
        %v5492 = vpack.c.b16 %v5084, %v5078
        %v5493 = vpack.c.b16 %v5085, %v5079
        %v5494 = vpack.c.b16 %v5086, %v5080
        %v5495 = vpack.c.b16 %v5087, %v5081
        %v5496 = vpack.c.b16 %v5094, %v5088
        %v5497 = vpack.c.b16 %v5095, %v5089
        %v5498 = vpack.c.b16 %v5096, %v5090
        %v5499 = vpack.c.b16 %v5097, %v5091
        %v5500 = vpack.c.b16 %v5098, %v5092
        %v5501 = vpack.c.b16 %v5099, %v5093
        %v5502 = vpack.c.b16 %v5106, %v5100
        %v5503 = vpack.c.b16 %v5107, %v5101
        %v5504 = vpack.c.b16 %v5108, %v5102
        %v5505 = vpack.c.b16 %v5109, %v5103
        %v5506 = vpack.c.b16 %v5110, %v5104
        %v5507 = vpack.c.b16 %v5111, %v5105
        %v5508 = vpack.c.b16 %v5118, %v5112
        %v5509 = vpack.c.b16 %v5119, %v5113
        %v5510 = vpack.c.b16 %v5120, %v5114
        %v5511 = vpack.c.b16 %v5121, %v5115
        %v5512 = vpack.c.b16 %v5122, %v5116
        %v5513 = vpack.c.b16 %v5123, %v5117
        %v5514 = vpack.c.b16 %v5130, %v5124
        %v5515 = vpack.c.b16 %v5131, %v5125
        %v5516 = vpack.c.b16 %v5132, %v5126
        %v5517 = vpack.c.b16 %v5133, %v5127
        %v5518 = vpack.c.b16 %v5134, %v5128
        %v5519 = vpack.c.b16 %v5135, %v5129
        %v5520 = vpack.c.b16 %v5142, %v5136
        %v5521 = vpack.c.b16 %v5143, %v5137
        %v5522 = vpack.c.b16 %v5144, %v5138
        %v5523 = vpack.c.b16 %v5145, %v5139
        %v5524 = vpack.c.b16 %v5146, %v5140
        %v5525 = vpack.c.b16 %v5147, %v5141
        %v5526 = vpack.c.b16 %v5154, %v5148
        %v5527 = vpack.c.b16 %v5155, %v5149
        %v5528 = vpack.c.b16 %v5156, %v5150
        %v5529 = vpack.c.b16 %v5157, %v5151
        %v5530 = vpack.c.b16 %v5158, %v5152
        %v5531 = vpack.c.b16 %v5159, %v5153
        %v5532 = vpack.c.b16 %v5166, %v5160
        %v5533 = vpack.c.b16 %v5167, %v5161
        %v5534 = vpack.c.b16 %v5168, %v5162
        %v5535 = vpack.c.b16 %v5169, %v5163
        %v5536 = vpack.c.b16 %v5170, %v5164
        %v5537 = vpack.c.b16 %v5171, %v5165
        %v5538 = vpack.c.b16 %v5178, %v5172
        %v5539 = vpack.c.b16 %v5179, %v5173
        %v5540 = vpack.c.b16 %v5180, %v5174
        %v5541 = vpack.c.b16 %v5181, %v5175
        %v5542 = vpack.c.b16 %v5182, %v5176
        %v5543 = vpack.c.b16 %v5183, %v5177
        %v5544 = vpack.c.b16 %v5190, %v5184
        %v5545 = vpack.c.b16 %v5191, %v5185
        %v5546 = vpack.c.b16 %v5192, %v5186
        %v5547 = vpack.c.b16 %v5193, %v5187
        %v5548 = vpack.c.b16 %v5194, %v5188
        %v5549 = vpack.c.b16 %v5195, %v5189
        %v5550 = vpack.c.b16 %v5202, %v5196
        %v5551 = vpack.c.b16 %v5203, %v5197
        %v5552 = vpack.c.b16 %v5204, %v5198
        %v5553 = vpack.c.b16 %v5205, %v5199
        %v5554 = vpack.c.b16 %v5206, %v5200
        %v5555 = vpack.c.b16 %v5207, %v5201
        %v5556 = vpack.c.b16 %v5214, %v5208
        %v5557 = vpack.c.b16 %v5215, %v5209
        %v5558 = vpack.c.b16 %v5216, %v5210
        %v5559 = vpack.c.b16 %v5217, %v5211
        %v5560 = vpack.c.b16 %v5218, %v5212
        %v5561 = vpack.c.b16 %v5219, %v5213
        %v5562 = vpack.c.b16 %v5226, %v5220
        %v5563 = vpack.c.b16 %v5227, %v5221
        %v5564 = vpack.c.b16 %v5228, %v5222
        %v5565 = vpack.c.b16 %v5229, %v5223
        %v5566 = vpack.c.b16 %v5230, %v5224
        %v5567 = vpack.c.b16 %v5231, %v5225
        %v5568 = vpack.c.b16 %v5238, %v5232
        %v5569 = vpack.c.b16 %v5239, %v5233
        %v5570 = vpack.c.b16 %v5240, %v5234
        %v5571 = vpack.c.b16 %v5241, %v5235
        %v5572 = vpack.c.b16 %v5242, %v5236
        %v5573 = vpack.c.b16 %v5243, %v5237
        %v5574 = vpack.c.b16 %v5250, %v5244
        %v5575 = vpack.c.b16 %v5251, %v5245
        %v5576 = vpack.c.b16 %v5252, %v5246
        %v5577 = vpack.c.b16 %v5253, %v5247
        %v5578 = vpack.c.b16 %v5254, %v5248
        %v5579 = vpack.c.b16 %v5255, %v5249
        %v5580 = vpack.c.b16 %v5262, %v5256
        %v5581 = vpack.c.b16 %v5263, %v5257
        %v5582 = vpack.c.b16 %v5264, %v5258
        %v5583 = vpack.c.b16 %v5265, %v5259
        %v5584 = vpack.c.b16 %v5266, %v5260
        %v5585 = vpack.c.b16 %v5267, %v5261
        %v5586 = vpack.c.b16 %v5274, %v5268
        %v5587 = vpack.c.b16 %v5275, %v5269
        %v5588 = vpack.c.b16 %v5276, %v5270
        %v5589 = vpack.c.b16 %v5277, %v5271
        %v5590 = vpack.c.b16 %v5278, %v5272
        %v5591 = vpack.c.b16 %v5279, %v5273
        %v5592 = vpack.c.b16 %v5286, %v5280
        %v5593 = vpack.c.b16 %v5287, %v5281
        %v5594 = vpack.c.b16 %v5288, %v5282
        %v5595 = vpack.c.b16 %v5289, %v5283
        %v5596 = vpack.c.b16 %v5290, %v5284
        %v5597 = vpack.c.b16 %v5291, %v5285
        %v5598 = vpack.c.b16 %v5298, %v5292
        %v5599 = vpack.c.b16 %v5299, %v5293
        %v5600 = vpack.c.b16 %v5300, %v5294
        %v5601 = vpack.c.b16 %v5301, %v5295
        %v5602 = vpack.c.b16 %v5302, %v5296
        %v5603 = vpack.c.b16 %v5303, %v5297
        %v5604 = vpack.c.b16 %v5310, %v5304
        %v5605 = vpack.c.b16 %v5311, %v5305
        %v5606 = vpack.c.b16 %v5312, %v5306
        %v5607 = vpack.c.b16 %v5313, %v5307
        %v5608 = vpack.c.b16 %v5314, %v5308
        %v5609 = vpack.c.b16 %v5315, %v5309
        %v5610 = vpack.c.b16 %v5322, %v5316
        %v5611 = vpack.c.b16 %v5323, %v5317
        %v5612 = vpack.c.b16 %v5324, %v5318
        %v5613 = vpack.c.b16 %v5325, %v5319
        %v5614 = vpack.c.b16 %v5326, %v5320
        %v5615 = vpack.c.b16 %v5327, %v5321
        %5904 = vmatpush.bf16.msra.mxu0 %v5370
        %5905 = vmatpush.bf16.msra.mxu0 %v5364
        %5906 = vmatpush.bf16.msra.mxu0 %v5358
        %5907 = vmatpush.bf16.msra.mxu0 %v5352
        %5908 = vmatpush.bf16.msra.mxu0 %v5346
        %5909 = vmatpush.bf16.msra.mxu0 %v5340
        %5910 = vmatpush.bf16.msra.mxu0 %v5334
        %5911 = vmatpush.bf16.msra.mxu0 %v5328
        %5912 = vmatmul.bf16.gmra.mxu0 %v4150
        %v5913 = vpop.f32.mrf.mxu0
        %v5914 = vadd.f32 %v4452, %v5913
        %v5915 = vpop.f32.mrf.mxu0
        %v5916 = vadd.f32 %v4452, %v5915
        %5917 = vmatmul.bf16.gmra.mxu0 %v4156
        %v5918 = vpop.f32.mrf.mxu0
        %v5919 = vadd.f32 %v4452, %v5918
        %v5920 = vpop.f32.mrf.mxu0
        %v5921 = vadd.f32 %v4452, %v5920
        %5922 = vdwg.mxu0
        %5923 = vmatpush.bf16.msra.mxu0 %v5418
        %5924 = vmatpush.bf16.msra.mxu0 %v5412
        %5925 = vmatpush.bf16.msra.mxu0 %v5406
        %5926 = vmatpush.bf16.msra.mxu0 %v5400
        %5927 = vmatpush.bf16.msra.mxu0 %v5394
        %5928 = vmatpush.bf16.msra.mxu0 %v5388
        %5929 = vmatpush.bf16.msra.mxu0 %v5382
        %5930 = vmatpush.bf16.msra.mxu0 %v5376
        %5931 = vmatmul.bf16.gmra.mxu0 %v4151
        %v5932 = vpop.f32.mrf.mxu0
        %v5933 = vadd.f32 %v5914, %v5932
        %v5934 = vpop.f32.mrf.mxu0
        %v5935 = vadd.f32 %v5916, %v5934
        %5936 = vmatmul.bf16.gmra.mxu0 %v4157
        %v5937 = vpop.f32.mrf.mxu0
        %v5938 = vadd.f32 %v5919, %v5937
        %v5939 = vpop.f32.mrf.mxu0
        %v5940 = vadd.f32 %v5921, %v5939
        %5941 = vdwg.mxu0
        %5942 = vmatpush.bf16.msra.mxu0 %v5466
        %5943 = vmatpush.bf16.msra.mxu0 %v5460
        %5944 = vmatpush.bf16.msra.mxu0 %v5454
        %5945 = vmatpush.bf16.msra.mxu0 %v5448
        %5946 = vmatpush.bf16.msra.mxu0 %v5442
        %5947 = vmatpush.bf16.msra.mxu0 %v5436
        %5948 = vmatpush.bf16.msra.mxu0 %v5430
        %5949 = vmatpush.bf16.msra.mxu0 %v5424
        %5950 = vmatmul.bf16.gmra.mxu0 %v4152
        %v5951 = vpop.f32.mrf.mxu0
        %v5952 = vadd.f32 %v5933, %v5951
        %v5953 = vpop.f32.mrf.mxu0
        %v5954 = vadd.f32 %v5935, %v5953
        %5955 = vmatmul.bf16.gmra.mxu0 %v4158
        %v5956 = vpop.f32.mrf.mxu0
        %v5957 = vadd.f32 %v5938, %v5956
        %v5958 = vpop.f32.mrf.mxu0
        %v5959 = vadd.f32 %v5940, %v5958
        %5960 = vdwg.mxu0
        %5961 = vmatpush.bf16.msra.mxu0 %v5514
        %5962 = vmatpush.bf16.msra.mxu0 %v5508
        %5963 = vmatpush.bf16.msra.mxu0 %v5502
        %5964 = vmatpush.bf16.msra.mxu0 %v5496
        %5965 = vmatpush.bf16.msra.mxu0 %v5490
        %5966 = vmatpush.bf16.msra.mxu0 %v5484
        %5967 = vmatpush.bf16.msra.mxu0 %v5478
        %5968 = vmatpush.bf16.msra.mxu0 %v5472
        %5969 = vmatmul.bf16.gmra.mxu0 %v4153
        %v5970 = vpop.f32.mrf.mxu0
        %v5971 = vadd.f32 %v5952, %v5970
        %v5972 = vpop.f32.mrf.mxu0
        %v5973 = vadd.f32 %v5954, %v5972
        %5974 = vmatmul.bf16.gmra.mxu0 %v4159
        %v5975 = vpop.f32.mrf.mxu0
        %v5976 = vadd.f32 %v5957, %v5975
        %v5977 = vpop.f32.mrf.mxu0
        %v5978 = vadd.f32 %v5959, %v5977
        %5979 = vdwg.mxu0
        %5980 = vmatpush.bf16.msra.mxu0 %v5562
        %5981 = vmatpush.bf16.msra.mxu0 %v5556
        %5982 = vmatpush.bf16.msra.mxu0 %v5550
        %5983 = vmatpush.bf16.msra.mxu0 %v5544
        %5984 = vmatpush.bf16.msra.mxu0 %v5538
        %5985 = vmatpush.bf16.msra.mxu0 %v5532
        %5986 = vmatpush.bf16.msra.mxu0 %v5526
        %5987 = vmatpush.bf16.msra.mxu0 %v5520
        %5988 = vmatmul.bf16.gmra.mxu0 %v4154
        %v5989 = vpop.f32.mrf.mxu0
        %v5990 = vadd.f32 %v5971, %v5989
        %v5991 = vpop.f32.mrf.mxu0
        %v5992 = vadd.f32 %v5973, %v5991
        %5993 = vmatmul.bf16.gmra.mxu0 %v4160
        %v5994 = vpop.f32.mrf.mxu0
        %v5995 = vadd.f32 %v5976, %v5994
        %v5996 = vpop.f32.mrf.mxu0
        %v5997 = vadd.f32 %v5978, %v5996
        %5998 = vdwg.mxu0
        %5999 = vmatpush.bf16.msra.mxu0 %v5610
        %6000 = vmatpush.bf16.msra.mxu0 %v5604
        %6001 = vmatpush.bf16.msra.mxu0 %v5598
        %6002 = vmatpush.bf16.msra.mxu0 %v5592
        %6003 = vmatpush.bf16.msra.mxu0 %v5586
        %6004 = vmatpush.bf16.msra.mxu0 %v5580
        %6005 = vmatpush.bf16.msra.mxu0 %v5574
        %6006 = vmatpush.bf16.msra.mxu0 %v5568
        %6007 = vmatmul.bf16.gmra.mxu0 %v4155
        %v6008 = vpop.f32.mrf.mxu0
        %v6009 = vadd.f32 %v5990, %v6008
        %v6010 = vpop.f32.mrf.mxu0
        %v6011 = vadd.f32 %v5992, %v6010
        %6012 = vmatmul.bf16.gmra.mxu0 %v4161
        %v6013 = vpop.f32.mrf.mxu0
        %v6014 = vadd.f32 %v5995, %v6013
        %v6015 = vpop.f32.mrf.mxu0
        %v6016 = vadd.f32 %v5997, %v6015
        %6017 = vdwg.mxu0
        %6018 = vmatpush.bf16.msra.mxu0 %v5371
        %6019 = vmatpush.bf16.msra.mxu0 %v5365
        %6020 = vmatpush.bf16.msra.mxu0 %v5359
        %6021 = vmatpush.bf16.msra.mxu0 %v5353
        %6022 = vmatpush.bf16.msra.mxu0 %v5347
        %6023 = vmatpush.bf16.msra.mxu0 %v5341
        %6024 = vmatpush.bf16.msra.mxu0 %v5335
        %6025 = vmatpush.bf16.msra.mxu0 %v5329
        %6026 = vmatmul.bf16.gmra.mxu0 %v4150
        %v6027 = vpop.f32.mrf.mxu0
        %v6028 = vadd.f32 %v4453, %v6027
        %v6029 = vpop.f32.mrf.mxu0
        %v6030 = vadd.f32 %v4453, %v6029
        %6031 = vmatmul.bf16.gmra.mxu0 %v4156
        %v6032 = vpop.f32.mrf.mxu0
        %v6033 = vadd.f32 %v4453, %v6032
        %v6034 = vpop.f32.mrf.mxu0
        %v6035 = vadd.f32 %v4453, %v6034
        %6036 = vdwg.mxu0
        %6037 = vmatpush.bf16.msra.mxu0 %v5419
        %6038 = vmatpush.bf16.msra.mxu0 %v5413
        %6039 = vmatpush.bf16.msra.mxu0 %v5407
        %6040 = vmatpush.bf16.msra.mxu0 %v5401
        %6041 = vmatpush.bf16.msra.mxu0 %v5395
        %6042 = vmatpush.bf16.msra.mxu0 %v5389
        %6043 = vmatpush.bf16.msra.mxu0 %v5383
        %6044 = vmatpush.bf16.msra.mxu0 %v5377
        %6045 = vmatmul.bf16.gmra.mxu0 %v4151
        %v6046 = vpop.f32.mrf.mxu0
        %v6047 = vadd.f32 %v6028, %v6046
        %v6048 = vpop.f32.mrf.mxu0
        %v6049 = vadd.f32 %v6030, %v6048
        %6050 = vmatmul.bf16.gmra.mxu0 %v4157
        %v6051 = vpop.f32.mrf.mxu0
        %v6052 = vadd.f32 %v6033, %v6051
        %v6053 = vpop.f32.mrf.mxu0
        %v6054 = vadd.f32 %v6035, %v6053
        %6055 = vdwg.mxu0
        %6056 = vmatpush.bf16.msra.mxu0 %v5467
        %6057 = vmatpush.bf16.msra.mxu0 %v5461
        %6058 = vmatpush.bf16.msra.mxu0 %v5455
        %6059 = vmatpush.bf16.msra.mxu0 %v5449
        %6060 = vmatpush.bf16.msra.mxu0 %v5443
        %6061 = vmatpush.bf16.msra.mxu0 %v5437
        %6062 = vmatpush.bf16.msra.mxu0 %v5431
        %6063 = vmatpush.bf16.msra.mxu0 %v5425
        %6064 = vmatmul.bf16.gmra.mxu0 %v4152
        %v6065 = vpop.f32.mrf.mxu0
        %v6066 = vadd.f32 %v6047, %v6065
        %v6067 = vpop.f32.mrf.mxu0
        %v6068 = vadd.f32 %v6049, %v6067
        %6069 = vmatmul.bf16.gmra.mxu0 %v4158
        %v6070 = vpop.f32.mrf.mxu0
        %v6071 = vadd.f32 %v6052, %v6070
        %v6072 = vpop.f32.mrf.mxu0
        %v6073 = vadd.f32 %v6054, %v6072
        %6074 = vdwg.mxu0
        %6075 = vmatpush.bf16.msra.mxu0 %v5515
        %6076 = vmatpush.bf16.msra.mxu0 %v5509
        %6077 = vmatpush.bf16.msra.mxu0 %v5503
        %6078 = vmatpush.bf16.msra.mxu0 %v5497
        %6079 = vmatpush.bf16.msra.mxu0 %v5491
        %6080 = vmatpush.bf16.msra.mxu0 %v5485
        %6081 = vmatpush.bf16.msra.mxu0 %v5479
        %6082 = vmatpush.bf16.msra.mxu0 %v5473
        %6083 = vmatmul.bf16.gmra.mxu0 %v4153
        %v6084 = vpop.f32.mrf.mxu0
        %v6085 = vadd.f32 %v6066, %v6084
        %v6086 = vpop.f32.mrf.mxu0
        %v6087 = vadd.f32 %v6068, %v6086
        %6088 = vmatmul.bf16.gmra.mxu0 %v4159
        %v6089 = vpop.f32.mrf.mxu0
        %v6090 = vadd.f32 %v6071, %v6089
        %v6091 = vpop.f32.mrf.mxu0
        %v6092 = vadd.f32 %v6073, %v6091
        %6093 = vdwg.mxu0
        %6094 = vmatpush.bf16.msra.mxu0 %v5563
        %6095 = vmatpush.bf16.msra.mxu0 %v5557
        %6096 = vmatpush.bf16.msra.mxu0 %v5551
        %6097 = vmatpush.bf16.msra.mxu0 %v5545
        %6098 = vmatpush.bf16.msra.mxu0 %v5539
        %6099 = vmatpush.bf16.msra.mxu0 %v5533
        %6100 = vmatpush.bf16.msra.mxu0 %v5527
        %6101 = vmatpush.bf16.msra.mxu0 %v5521
        %6102 = vmatmul.bf16.gmra.mxu0 %v4154
        %v6103 = vpop.f32.mrf.mxu0
        %v6104 = vadd.f32 %v6085, %v6103
        %v6105 = vpop.f32.mrf.mxu0
        %v6106 = vadd.f32 %v6087, %v6105
        %6107 = vmatmul.bf16.gmra.mxu0 %v4160
        %v6108 = vpop.f32.mrf.mxu0
        %v6109 = vadd.f32 %v6090, %v6108
        %v6110 = vpop.f32.mrf.mxu0
        %v6111 = vadd.f32 %v6092, %v6110
        %6112 = vdwg.mxu0
        %6113 = vmatpush.bf16.msra.mxu0 %v5611
        %6114 = vmatpush.bf16.msra.mxu0 %v5605
        %6115 = vmatpush.bf16.msra.mxu0 %v5599
        %6116 = vmatpush.bf16.msra.mxu0 %v5593
        %6117 = vmatpush.bf16.msra.mxu0 %v5587
        %6118 = vmatpush.bf16.msra.mxu0 %v5581
        %6119 = vmatpush.bf16.msra.mxu0 %v5575
        %6120 = vmatpush.bf16.msra.mxu0 %v5569
        %6121 = vmatmul.bf16.gmra.mxu0 %v4155
        %v6122 = vpop.f32.mrf.mxu0
        %v6123 = vadd.f32 %v6104, %v6122
        %v6124 = vpop.f32.mrf.mxu0
        %v6125 = vadd.f32 %v6106, %v6124
        %6126 = vmatmul.bf16.gmra.mxu0 %v4161
        %v6127 = vpop.f32.mrf.mxu0
        %v6128 = vadd.f32 %v6109, %v6127
        %v6129 = vpop.f32.mrf.mxu0
        %v6130 = vadd.f32 %v6111, %v6129
        %6131 = vdwg.mxu0
        %6132 = vmatpush.bf16.msra.mxu0 %v5372
        %6133 = vmatpush.bf16.msra.mxu0 %v5366
        %6134 = vmatpush.bf16.msra.mxu0 %v5360
        %6135 = vmatpush.bf16.msra.mxu0 %v5354
        %6136 = vmatpush.bf16.msra.mxu0 %v5348
        %6137 = vmatpush.bf16.msra.mxu0 %v5342
        %6138 = vmatpush.bf16.msra.mxu0 %v5336
        %6139 = vmatpush.bf16.msra.mxu0 %v5330
        %6140 = vmatmul.bf16.gmra.mxu0 %v4150
        %v6141 = vpop.f32.mrf.mxu0
        %v6142 = vadd.f32 %v4454, %v6141
        %v6143 = vpop.f32.mrf.mxu0
        %v6144 = vadd.f32 %v4454, %v6143
        %6145 = vmatmul.bf16.gmra.mxu0 %v4156
        %v6146 = vpop.f32.mrf.mxu0
        %v6147 = vadd.f32 %v4454, %v6146
        %v6148 = vpop.f32.mrf.mxu0
        %v6149 = vadd.f32 %v4454, %v6148
        %6150 = vdwg.mxu0
        %6151 = vmatpush.bf16.msra.mxu0 %v5420
        %6152 = vmatpush.bf16.msra.mxu0 %v5414
        %6153 = vmatpush.bf16.msra.mxu0 %v5408
        %6154 = vmatpush.bf16.msra.mxu0 %v5402
        %6155 = vmatpush.bf16.msra.mxu0 %v5396
        %6156 = vmatpush.bf16.msra.mxu0 %v5390
        %6157 = vmatpush.bf16.msra.mxu0 %v5384
        %6158 = vmatpush.bf16.msra.mxu0 %v5378
        %6159 = vmatmul.bf16.gmra.mxu0 %v4151
        %v6160 = vpop.f32.mrf.mxu0
        %v6161 = vadd.f32 %v6142, %v6160
        %v6162 = vpop.f32.mrf.mxu0
        %v6163 = vadd.f32 %v6144, %v6162
        %6164 = vmatmul.bf16.gmra.mxu0 %v4157
        %v6165 = vpop.f32.mrf.mxu0
        %v6166 = vadd.f32 %v6147, %v6165
        %v6167 = vpop.f32.mrf.mxu0
        %v6168 = vadd.f32 %v6149, %v6167
        %6169 = vdwg.mxu0
        %6170 = vmatpush.bf16.msra.mxu0 %v5468
        %6171 = vmatpush.bf16.msra.mxu0 %v5462
        %6172 = vmatpush.bf16.msra.mxu0 %v5456
        %6173 = vmatpush.bf16.msra.mxu0 %v5450
        %6174 = vmatpush.bf16.msra.mxu0 %v5444
        %6175 = vmatpush.bf16.msra.mxu0 %v5438
        %6176 = vmatpush.bf16.msra.mxu0 %v5432
        %6177 = vmatpush.bf16.msra.mxu0 %v5426
        %6178 = vmatmul.bf16.gmra.mxu0 %v4152
        %v6179 = vpop.f32.mrf.mxu0
        %v6180 = vadd.f32 %v6161, %v6179
        %v6181 = vpop.f32.mrf.mxu0
        %v6182 = vadd.f32 %v6163, %v6181
        %6183 = vmatmul.bf16.gmra.mxu0 %v4158
        %v6184 = vpop.f32.mrf.mxu0
        %v6185 = vadd.f32 %v6166, %v6184
        %v6186 = vpop.f32.mrf.mxu0
        %v6187 = vadd.f32 %v6168, %v6186
        %6188 = vdwg.mxu0
        %6189 = vmatpush.bf16.msra.mxu0 %v5516
        %6190 = vmatpush.bf16.msra.mxu0 %v5510
        %6191 = vmatpush.bf16.msra.mxu0 %v5504
        %6192 = vmatpush.bf16.msra.mxu0 %v5498
        %6193 = vmatpush.bf16.msra.mxu0 %v5492
        %6194 = vmatpush.bf16.msra.mxu0 %v5486
        %6195 = vmatpush.bf16.msra.mxu0 %v5480
        %6196 = vmatpush.bf16.msra.mxu0 %v5474
        %6197 = vmatmul.bf16.gmra.mxu0 %v4153
        %v6198 = vpop.f32.mrf.mxu0
        %v6199 = vadd.f32 %v6180, %v6198
        %v6200 = vpop.f32.mrf.mxu0
        %v6201 = vadd.f32 %v6182, %v6200
        %6202 = vmatmul.bf16.gmra.mxu0 %v4159
        %v6203 = vpop.f32.mrf.mxu0
        %v6204 = vadd.f32 %v6185, %v6203
        %v6205 = vpop.f32.mrf.mxu0
        %v6206 = vadd.f32 %v6187, %v6205
        %6207 = vdwg.mxu0
        %6208 = vmatpush.bf16.msra.mxu0 %v5564
        %6209 = vmatpush.bf16.msra.mxu0 %v5558
        %6210 = vmatpush.bf16.msra.mxu0 %v5552
        %6211 = vmatpush.bf16.msra.mxu0 %v5546
        %6212 = vmatpush.bf16.msra.mxu0 %v5540
        %6213 = vmatpush.bf16.msra.mxu0 %v5534
        %6214 = vmatpush.bf16.msra.mxu0 %v5528
        %6215 = vmatpush.bf16.msra.mxu0 %v5522
        %6216 = vmatmul.bf16.gmra.mxu0 %v4154
        %v6217 = vpop.f32.mrf.mxu0
        %v6218 = vadd.f32 %v6199, %v6217
        %v6219 = vpop.f32.mrf.mxu0
        %v6220 = vadd.f32 %v6201, %v6219
        %6221 = vmatmul.bf16.gmra.mxu0 %v4160
        %v6222 = vpop.f32.mrf.mxu0
        %v6223 = vadd.f32 %v6204, %v6222
        %v6224 = vpop.f32.mrf.mxu0
        %v6225 = vadd.f32 %v6206, %v6224
        %6226 = vdwg.mxu0
        %6227 = vmatpush.bf16.msra.mxu0 %v5612
        %6228 = vmatpush.bf16.msra.mxu0 %v5606
        %6229 = vmatpush.bf16.msra.mxu0 %v5600
        %6230 = vmatpush.bf16.msra.mxu0 %v5594
        %6231 = vmatpush.bf16.msra.mxu0 %v5588
        %6232 = vmatpush.bf16.msra.mxu0 %v5582
        %6233 = vmatpush.bf16.msra.mxu0 %v5576
        %6234 = vmatpush.bf16.msra.mxu0 %v5570
        %6235 = vmatmul.bf16.gmra.mxu0 %v4155
        %v6236 = vpop.f32.mrf.mxu0
        %v6237 = vadd.f32 %v6218, %v6236
        %v6238 = vpop.f32.mrf.mxu0
        %v6239 = vadd.f32 %v6220, %v6238
        %6240 = vmatmul.bf16.gmra.mxu0 %v4161
        %v6241 = vpop.f32.mrf.mxu0
        %v6242 = vadd.f32 %v6223, %v6241
        %v6243 = vpop.f32.mrf.mxu0
        %v6244 = vadd.f32 %v6225, %v6243
        %6245 = vdwg.mxu0
        %6246 = vmatpush.bf16.msra.mxu0 %v5373
        %6247 = vmatpush.bf16.msra.mxu0 %v5367
        %6248 = vmatpush.bf16.msra.mxu0 %v5361
        %6249 = vmatpush.bf16.msra.mxu0 %v5355
        %6250 = vmatpush.bf16.msra.mxu0 %v5349
        %6251 = vmatpush.bf16.msra.mxu0 %v5343
        %6252 = vmatpush.bf16.msra.mxu0 %v5337
        %6253 = vmatpush.bf16.msra.mxu0 %v5331
        %6254 = vmatmul.bf16.gmra.mxu0 %v4150
        %v6255 = vpop.f32.mrf.mxu0
        %v6256 = vadd.f32 %v4455, %v6255
        %v6257 = vpop.f32.mrf.mxu0
        %v6258 = vadd.f32 %v4455, %v6257
        %6259 = vmatmul.bf16.gmra.mxu0 %v4156
        %v6260 = vpop.f32.mrf.mxu0
        %v6261 = vadd.f32 %v4455, %v6260
        %v6262 = vpop.f32.mrf.mxu0
        %v6263 = vadd.f32 %v4455, %v6262
        %6264 = vdwg.mxu0
        %6265 = vmatpush.bf16.msra.mxu0 %v5421
        %6266 = vmatpush.bf16.msra.mxu0 %v5415
        %6267 = vmatpush.bf16.msra.mxu0 %v5409
        %6268 = vmatpush.bf16.msra.mxu0 %v5403
        %6269 = vmatpush.bf16.msra.mxu0 %v5397
        %6270 = vmatpush.bf16.msra.mxu0 %v5391
        %6271 = vmatpush.bf16.msra.mxu0 %v5385
        %6272 = vmatpush.bf16.msra.mxu0 %v5379
        %6273 = vmatmul.bf16.gmra.mxu0 %v4151
        %v6274 = vpop.f32.mrf.mxu0
        %v6275 = vadd.f32 %v6256, %v6274
        %v6276 = vpop.f32.mrf.mxu0
        %v6277 = vadd.f32 %v6258, %v6276
        %6278 = vmatmul.bf16.gmra.mxu0 %v4157
        %v6279 = vpop.f32.mrf.mxu0
        %v6280 = vadd.f32 %v6261, %v6279
        %v6281 = vpop.f32.mrf.mxu0
        %v6282 = vadd.f32 %v6263, %v6281
        %6283 = vdwg.mxu0
        %6284 = vmatpush.bf16.msra.mxu0 %v5469
        %6285 = vmatpush.bf16.msra.mxu0 %v5463
        %6286 = vmatpush.bf16.msra.mxu0 %v5457
        %6287 = vmatpush.bf16.msra.mxu0 %v5451
        %6288 = vmatpush.bf16.msra.mxu0 %v5445
        %6289 = vmatpush.bf16.msra.mxu0 %v5439
        %6290 = vmatpush.bf16.msra.mxu0 %v5433
        %6291 = vmatpush.bf16.msra.mxu0 %v5427
        %6292 = vmatmul.bf16.gmra.mxu0 %v4152
        %v6293 = vpop.f32.mrf.mxu0
        %v6294 = vadd.f32 %v6275, %v6293
        %v6295 = vpop.f32.mrf.mxu0
        %v6296 = vadd.f32 %v6277, %v6295
        %6297 = vmatmul.bf16.gmra.mxu0 %v4158
        %v6298 = vpop.f32.mrf.mxu0
        %v6299 = vadd.f32 %v6280, %v6298
        %v6300 = vpop.f32.mrf.mxu0
        %v6301 = vadd.f32 %v6282, %v6300
        %6302 = vdwg.mxu0
        %6303 = vmatpush.bf16.msra.mxu0 %v5517
        %6304 = vmatpush.bf16.msra.mxu0 %v5511
        %6305 = vmatpush.bf16.msra.mxu0 %v5505
        %6306 = vmatpush.bf16.msra.mxu0 %v5499
        %6307 = vmatpush.bf16.msra.mxu0 %v5493
        %6308 = vmatpush.bf16.msra.mxu0 %v5487
        %6309 = vmatpush.bf16.msra.mxu0 %v5481
        %6310 = vmatpush.bf16.msra.mxu0 %v5475
        %6311 = vmatmul.bf16.gmra.mxu0 %v4153
        %v6312 = vpop.f32.mrf.mxu0
        %v6313 = vadd.f32 %v6294, %v6312
        %v6314 = vpop.f32.mrf.mxu0
        %v6315 = vadd.f32 %v6296, %v6314
        %6316 = vmatmul.bf16.gmra.mxu0 %v4159
        %v6317 = vpop.f32.mrf.mxu0
        %v6318 = vadd.f32 %v6299, %v6317
        %v6319 = vpop.f32.mrf.mxu0
        %v6320 = vadd.f32 %v6301, %v6319
        %6321 = vdwg.mxu0
        %6322 = vmatpush.bf16.msra.mxu0 %v5565
        %6323 = vmatpush.bf16.msra.mxu0 %v5559
        %6324 = vmatpush.bf16.msra.mxu0 %v5553
        %6325 = vmatpush.bf16.msra.mxu0 %v5547
        %6326 = vmatpush.bf16.msra.mxu0 %v5541
        %6327 = vmatpush.bf16.msra.mxu0 %v5535
        %6328 = vmatpush.bf16.msra.mxu0 %v5529
        %6329 = vmatpush.bf16.msra.mxu0 %v5523
        %6330 = vmatmul.bf16.gmra.mxu0 %v4154
        %v6331 = vpop.f32.mrf.mxu0
        %v6332 = vadd.f32 %v6313, %v6331
        %v6333 = vpop.f32.mrf.mxu0
        %v6334 = vadd.f32 %v6315, %v6333
        %6335 = vmatmul.bf16.gmra.mxu0 %v4160
        %v6336 = vpop.f32.mrf.mxu0
        %v6337 = vadd.f32 %v6318, %v6336
        %v6338 = vpop.f32.mrf.mxu0
        %v6339 = vadd.f32 %v6320, %v6338
        %6340 = vdwg.mxu0
        %6341 = vmatpush.bf16.msra.mxu0 %v5613
        %6342 = vmatpush.bf16.msra.mxu0 %v5607
        %6343 = vmatpush.bf16.msra.mxu0 %v5601
        %6344 = vmatpush.bf16.msra.mxu0 %v5595
        %6345 = vmatpush.bf16.msra.mxu0 %v5589
        %6346 = vmatpush.bf16.msra.mxu0 %v5583
        %6347 = vmatpush.bf16.msra.mxu0 %v5577
        %6348 = vmatpush.bf16.msra.mxu0 %v5571
        %6349 = vmatmul.bf16.gmra.mxu0 %v4155
        %v6350 = vpop.f32.mrf.mxu0
        %v6351 = vadd.f32 %v6332, %v6350
        %v6352 = vpop.f32.mrf.mxu0
        %v6353 = vadd.f32 %v6334, %v6352
        %6354 = vmatmul.bf16.gmra.mxu0 %v4161
        %v6355 = vpop.f32.mrf.mxu0
        %v6356 = vadd.f32 %v6337, %v6355
        %v6357 = vpop.f32.mrf.mxu0
        %v6358 = vadd.f32 %v6339, %v6357
        %6359 = vdwg.mxu0
        %6360 = vmatpush.bf16.msra.mxu0 %v5374
        %6361 = vmatpush.bf16.msra.mxu0 %v5368
        %6362 = vmatpush.bf16.msra.mxu0 %v5362
        %6363 = vmatpush.bf16.msra.mxu0 %v5356
        %6364 = vmatpush.bf16.msra.mxu0 %v5350
        %6365 = vmatpush.bf16.msra.mxu0 %v5344
        %6366 = vmatpush.bf16.msra.mxu0 %v5338
        %6367 = vmatpush.bf16.msra.mxu0 %v5332
        %6368 = vmatmul.bf16.gmra.mxu0 %v4150
        %v6369 = vpop.f32.mrf.mxu0
        %v6370 = vadd.f32 %v4456, %v6369
        %v6371 = vpop.f32.mrf.mxu0
        %v6372 = vadd.f32 %v4456, %v6371
        %6373 = vmatmul.bf16.gmra.mxu0 %v4156
        %v6374 = vpop.f32.mrf.mxu0
        %v6375 = vadd.f32 %v4456, %v6374
        %v6376 = vpop.f32.mrf.mxu0
        %v6377 = vadd.f32 %v4456, %v6376
        %6378 = vdwg.mxu0
        %6379 = vmatpush.bf16.msra.mxu0 %v5422
        %6380 = vmatpush.bf16.msra.mxu0 %v5416
        %6381 = vmatpush.bf16.msra.mxu0 %v5410
        %6382 = vmatpush.bf16.msra.mxu0 %v5404
        %6383 = vmatpush.bf16.msra.mxu0 %v5398
        %6384 = vmatpush.bf16.msra.mxu0 %v5392
        %6385 = vmatpush.bf16.msra.mxu0 %v5386
        %6386 = vmatpush.bf16.msra.mxu0 %v5380
        %6387 = vmatmul.bf16.gmra.mxu0 %v4151
        %v6388 = vpop.f32.mrf.mxu0
        %v6389 = vadd.f32 %v6370, %v6388
        %v6390 = vpop.f32.mrf.mxu0
        %v6391 = vadd.f32 %v6372, %v6390
        %6392 = vmatmul.bf16.gmra.mxu0 %v4157
        %v6393 = vpop.f32.mrf.mxu0
        %v6394 = vadd.f32 %v6375, %v6393
        %v6395 = vpop.f32.mrf.mxu0
        %v6396 = vadd.f32 %v6377, %v6395
        %6397 = vdwg.mxu0
        %6398 = vmatpush.bf16.msra.mxu0 %v5470
        %6399 = vmatpush.bf16.msra.mxu0 %v5464
        %6400 = vmatpush.bf16.msra.mxu0 %v5458
        %6401 = vmatpush.bf16.msra.mxu0 %v5452
        %6402 = vmatpush.bf16.msra.mxu0 %v5446
        %6403 = vmatpush.bf16.msra.mxu0 %v5440
        %6404 = vmatpush.bf16.msra.mxu0 %v5434
        %6405 = vmatpush.bf16.msra.mxu0 %v5428
        %6406 = vmatmul.bf16.gmra.mxu0 %v4152
        %v6407 = vpop.f32.mrf.mxu0
        %v6408 = vadd.f32 %v6389, %v6407
        %v6409 = vpop.f32.mrf.mxu0
        %v6410 = vadd.f32 %v6391, %v6409
        %6411 = vmatmul.bf16.gmra.mxu0 %v4158
        %v6412 = vpop.f32.mrf.mxu0
        %v6413 = vadd.f32 %v6394, %v6412
        %v6414 = vpop.f32.mrf.mxu0
        %v6415 = vadd.f32 %v6396, %v6414
        %6416 = vdwg.mxu0
        %6417 = vmatpush.bf16.msra.mxu0 %v5518
        %6418 = vmatpush.bf16.msra.mxu0 %v5512
        %6419 = vmatpush.bf16.msra.mxu0 %v5506
        %6420 = vmatpush.bf16.msra.mxu0 %v5500
        %6421 = vmatpush.bf16.msra.mxu0 %v5494
        %6422 = vmatpush.bf16.msra.mxu0 %v5488
        %6423 = vmatpush.bf16.msra.mxu0 %v5482
        %6424 = vmatpush.bf16.msra.mxu0 %v5476
        %6425 = vmatmul.bf16.gmra.mxu0 %v4153
        %v6426 = vpop.f32.mrf.mxu0
        %v6427 = vadd.f32 %v6408, %v6426
        %v6428 = vpop.f32.mrf.mxu0
        %v6429 = vadd.f32 %v6410, %v6428
        %6430 = vmatmul.bf16.gmra.mxu0 %v4159
        %v6431 = vpop.f32.mrf.mxu0
        %v6432 = vadd.f32 %v6413, %v6431
        %v6433 = vpop.f32.mrf.mxu0
        %v6434 = vadd.f32 %v6415, %v6433
        %6435 = vdwg.mxu0
        %6436 = vmatpush.bf16.msra.mxu0 %v5566
        %6437 = vmatpush.bf16.msra.mxu0 %v5560
        %6438 = vmatpush.bf16.msra.mxu0 %v5554
        %6439 = vmatpush.bf16.msra.mxu0 %v5548
        %6440 = vmatpush.bf16.msra.mxu0 %v5542
        %6441 = vmatpush.bf16.msra.mxu0 %v5536
        %6442 = vmatpush.bf16.msra.mxu0 %v5530
        %6443 = vmatpush.bf16.msra.mxu0 %v5524
        %6444 = vmatmul.bf16.gmra.mxu0 %v4154
        %v6445 = vpop.f32.mrf.mxu0
        %v6446 = vadd.f32 %v6427, %v6445
        %v6447 = vpop.f32.mrf.mxu0
        %v6448 = vadd.f32 %v6429, %v6447
        %6449 = vmatmul.bf16.gmra.mxu0 %v4160
        %v6450 = vpop.f32.mrf.mxu0
        %v6451 = vadd.f32 %v6432, %v6450
        %v6452 = vpop.f32.mrf.mxu0
        %v6453 = vadd.f32 %v6434, %v6452
        %6454 = vdwg.mxu0
        %6455 = vmatpush.bf16.msra.mxu0 %v5614
        %6456 = vmatpush.bf16.msra.mxu0 %v5608
        %6457 = vmatpush.bf16.msra.mxu0 %v5602
        %6458 = vmatpush.bf16.msra.mxu0 %v5596
        %6459 = vmatpush.bf16.msra.mxu0 %v5590
        %6460 = vmatpush.bf16.msra.mxu0 %v5584
        %6461 = vmatpush.bf16.msra.mxu0 %v5578
        %6462 = vmatpush.bf16.msra.mxu0 %v5572
        %6463 = vmatmul.bf16.gmra.mxu0 %v4155
        %v6464 = vpop.f32.mrf.mxu0
        %v6465 = vadd.f32 %v6446, %v6464
        %v6466 = vpop.f32.mrf.mxu0
        %v6467 = vadd.f32 %v6448, %v6466
        %6468 = vmatmul.bf16.gmra.mxu0 %v4161
        %v6469 = vpop.f32.mrf.mxu0
        %v6470 = vadd.f32 %v6451, %v6469
        %v6471 = vpop.f32.mrf.mxu0
        %v6472 = vadd.f32 %v6453, %v6471
        %6473 = vdwg.mxu0
        %6474 = vmatpush.bf16.msra.mxu0 %v5375
        %6475 = vmatpush.bf16.msra.mxu0 %v5369
        %6476 = vmatpush.bf16.msra.mxu0 %v5363
        %6477 = vmatpush.bf16.msra.mxu0 %v5357
        %6478 = vmatpush.bf16.msra.mxu0 %v5351
        %6479 = vmatpush.bf16.msra.mxu0 %v5345
        %6480 = vmatpush.bf16.msra.mxu0 %v5339
        %6481 = vmatpush.bf16.msra.mxu0 %v5333
        %6482 = vmatmul.bf16.gmra.mxu0 %v4150
        %v6483 = vpop.f32.mrf.mxu0
        %v6484 = vadd.f32 %v4457, %v6483
        %v6485 = vpop.f32.mrf.mxu0
        %v6486 = vadd.f32 %v4457, %v6485
        %6487 = vmatmul.bf16.gmra.mxu0 %v4156
        %v6488 = vpop.f32.mrf.mxu0
        %v6489 = vadd.f32 %v4457, %v6488
        %v6490 = vpop.f32.mrf.mxu0
        %v6491 = vadd.f32 %v4457, %v6490
        %6492 = vdwg.mxu0
        %6493 = vmatpush.bf16.msra.mxu0 %v5423
        %6494 = vmatpush.bf16.msra.mxu0 %v5417
        %6495 = vmatpush.bf16.msra.mxu0 %v5411
        %6496 = vmatpush.bf16.msra.mxu0 %v5405
        %6497 = vmatpush.bf16.msra.mxu0 %v5399
        %6498 = vmatpush.bf16.msra.mxu0 %v5393
        %6499 = vmatpush.bf16.msra.mxu0 %v5387
        %6500 = vmatpush.bf16.msra.mxu0 %v5381
        %6501 = vmatmul.bf16.gmra.mxu0 %v4151
        %v6502 = vpop.f32.mrf.mxu0
        %v6503 = vadd.f32 %v6484, %v6502
        %v6504 = vpop.f32.mrf.mxu0
        %v6505 = vadd.f32 %v6486, %v6504
        %6506 = vmatmul.bf16.gmra.mxu0 %v4157
        %v6507 = vpop.f32.mrf.mxu0
        %v6508 = vadd.f32 %v6489, %v6507
        %v6509 = vpop.f32.mrf.mxu0
        %v6510 = vadd.f32 %v6491, %v6509
        %6511 = vdwg.mxu0
        %6512 = vmatpush.bf16.msra.mxu0 %v5471
        %6513 = vmatpush.bf16.msra.mxu0 %v5465
        %6514 = vmatpush.bf16.msra.mxu0 %v5459
        %6515 = vmatpush.bf16.msra.mxu0 %v5453
        %6516 = vmatpush.bf16.msra.mxu0 %v5447
        %6517 = vmatpush.bf16.msra.mxu0 %v5441
        %6518 = vmatpush.bf16.msra.mxu0 %v5435
        %6519 = vmatpush.bf16.msra.mxu0 %v5429
        %6520 = vmatmul.bf16.gmra.mxu0 %v4152
        %v6521 = vpop.f32.mrf.mxu0
        %v6522 = vadd.f32 %v6503, %v6521
        %v6523 = vpop.f32.mrf.mxu0
        %v6524 = vadd.f32 %v6505, %v6523
        %6525 = vmatmul.bf16.gmra.mxu0 %v4158
        %v6526 = vpop.f32.mrf.mxu0
        %v6527 = vadd.f32 %v6508, %v6526
        %v6528 = vpop.f32.mrf.mxu0
        %v6529 = vadd.f32 %v6510, %v6528
        %6530 = vdwg.mxu0
        %6531 = vmatpush.bf16.msra.mxu0 %v5519
        %6532 = vmatpush.bf16.msra.mxu0 %v5513
        %6533 = vmatpush.bf16.msra.mxu0 %v5507
        %6534 = vmatpush.bf16.msra.mxu0 %v5501
        %6535 = vmatpush.bf16.msra.mxu0 %v5495
        %6536 = vmatpush.bf16.msra.mxu0 %v5489
        %6537 = vmatpush.bf16.msra.mxu0 %v5483
        %6538 = vmatpush.bf16.msra.mxu0 %v5477
        %6539 = vmatmul.bf16.gmra.mxu0 %v4153
        %v6540 = vpop.f32.mrf.mxu0
        %v6541 = vadd.f32 %v6522, %v6540
        %v6542 = vpop.f32.mrf.mxu0
        %v6543 = vadd.f32 %v6524, %v6542
        %6544 = vmatmul.bf16.gmra.mxu0 %v4159
        %v6545 = vpop.f32.mrf.mxu0
        %v6546 = vadd.f32 %v6527, %v6545
        %v6547 = vpop.f32.mrf.mxu0
        %v6548 = vadd.f32 %v6529, %v6547
        %6549 = vdwg.mxu0
        %6550 = vmatpush.bf16.msra.mxu0 %v5567
        %6551 = vmatpush.bf16.msra.mxu0 %v5561
        %6552 = vmatpush.bf16.msra.mxu0 %v5555
        %6553 = vmatpush.bf16.msra.mxu0 %v5549
        %6554 = vmatpush.bf16.msra.mxu0 %v5543
        %6555 = vmatpush.bf16.msra.mxu0 %v5537
        %6556 = vmatpush.bf16.msra.mxu0 %v5531
        %6557 = vmatpush.bf16.msra.mxu0 %v5525
        %6558 = vmatmul.bf16.gmra.mxu0 %v4154
        %v6559 = vpop.f32.mrf.mxu0
        %v6560 = vadd.f32 %v6541, %v6559
        %v6561 = vpop.f32.mrf.mxu0
        %v6562 = vadd.f32 %v6543, %v6561
        %6563 = vmatmul.bf16.gmra.mxu0 %v4160
        %v6564 = vpop.f32.mrf.mxu0
        %v6565 = vadd.f32 %v6546, %v6564
        %v6566 = vpop.f32.mrf.mxu0
        %v6567 = vadd.f32 %v6548, %v6566
        %6568 = vdwg.mxu0
        %6569 = vmatpush.bf16.msra.mxu0 %v5615
        %6570 = vmatpush.bf16.msra.mxu0 %v5609
        %6571 = vmatpush.bf16.msra.mxu0 %v5603
        %6572 = vmatpush.bf16.msra.mxu0 %v5597
        %6573 = vmatpush.bf16.msra.mxu0 %v5591
        %6574 = vmatpush.bf16.msra.mxu0 %v5585
        %6575 = vmatpush.bf16.msra.mxu0 %v5579
        %6576 = vmatpush.bf16.msra.mxu0 %v5573
        %6577 = vmatmul.bf16.gmra.mxu0 %v4155
        %v6578 = vpop.f32.mrf.mxu0
        %v6579 = vadd.f32 %v6560, %v6578
        %v6580 = vpop.f32.mrf.mxu0
        %v6581 = vadd.f32 %v6562, %v6580
        %6582 = vmatmul.bf16.gmra.mxu0 %v4161
        %v6583 = vpop.f32.mrf.mxu0
        %v6584 = vadd.f32 %v6565, %v6583
        %v6585 = vpop.f32.mrf.mxu0
        %v6586 = vadd.f32 %v6567, %v6585
        %6587 = vdwg.mxu0
        %v6588 = vmax.f32 %v6009, 0.0
        %v6589 = vmax.f32 %v6123, 0.0
        %v6590 = vmax.f32 %v6237, 0.0
        %v6591 = vmax.f32 %v6351, 0.0
        %v6592 = vmax.f32 %v6465, 0.0
        %v6593 = vmax.f32 %v6579, 0.0
        %v6594 = vmax.f32 %v6011, 0.0
        %v6595 = vmax.f32 %v6125, 0.0
        %v6596 = vmax.f32 %v6239, 0.0
        %v6597 = vmax.f32 %v6353, 0.0
        %v6598 = vmax.f32 %v6467, 0.0
        %v6599 = vmax.f32 %v6581, 0.0
        %v6600 = vmax.f32 %v6014, 0.0
        %v6601 = vmax.f32 %v6128, 0.0
        %v6602 = vmax.f32 %v6242, 0.0
        %v6603 = vmax.f32 %v6356, 0.0
        %v6604 = vmax.f32 %v6470, 0.0
        %v6605 = vmax.f32 %v6584, 0.0
        %v6606 = vmax.f32 %v6016, 0.0
        %v6607 = vmax.f32 %v6130, 0.0
        %v6608 = vmax.f32 %v6244, 0.0
        %v6609 = vmax.f32 %v6358, 0.0
        %v6610 = vmax.f32 %v6472, 0.0
        %v6611 = vmax.f32 %v6586, 0.0
        %v6612 = vld [vmem:[#allocation23] sm:$0x3f]
        %v6613 = vld [vmem:[#allocation3] sm:$0x1]
        %v6615 = vperm.slane %v6612, 0
        %v6616 = vperm.slane %v6612, 1
        %v6617 = vperm.slane %v6612, 2
        %v6618 = vperm.slane %v6612, 3
        %v6619 = vperm.slane %v6612, 4
        %v6620 = vperm.slane %v6612, 5
        %v6627 = vmul.f32 %v6588, %v6615
        %v6628 = vmul.f32 %v6589, %v6616
        %v6629 = vmul.f32 %v6590, %v6617
        %v6630 = vmul.f32 %v6591, %v6618
        %v6631 = vmul.f32 %v6592, %v6619
        %v6632 = vmul.f32 %v6593, %v6620
        %v6633 = vmul.f32 %v6594, %v6615
        %v6634 = vmul.f32 %v6595, %v6616
        %v6635 = vmul.f32 %v6596, %v6617
        %v6636 = vmul.f32 %v6597, %v6618
        %v6637 = vmul.f32 %v6598, %v6619
        %v6638 = vmul.f32 %v6599, %v6620
        %v6639 = vmul.f32 %v6600, %v6615
        %v6640 = vmul.f32 %v6601, %v6616
        %v6641 = vmul.f32 %v6602, %v6617
        %v6642 = vmul.f32 %v6603, %v6618
        %v6643 = vmul.f32 %v6604, %v6619
        %v6644 = vmul.f32 %v6605, %v6620
        %v6645 = vmul.f32 %v6606, %v6615
        %v6646 = vmul.f32 %v6607, %v6616
        %v6647 = vmul.f32 %v6608, %v6617
        %v6648 = vmul.f32 %v6609, %v6618
        %v6649 = vmul.f32 %v6610, %v6619
        %v6650 = vmul.f32 %v6611, %v6620
        %v6651 = vadd.f32 %v6627, %v6628
        %v6652 = vadd.f32 %v6651, %v6629
        %v6653 = vadd.f32 %v6652, %v6630
        %v6654 = vadd.f32 %v6653, %v6631
        %v6655 = vadd.f32 %v6654, %v6632
        %6656 = vadd.xlane.f32.xlu0 %v6655
        %v6657 = vpop.xlane.xlu0 %6656
        %v6658 = vadd.f32 %v6633, %v6634
        %v6659 = vadd.f32 %v6658, %v6635
        %v6660 = vadd.f32 %v6659, %v6636
        %v6661 = vadd.f32 %v6660, %v6637
        %v6662 = vadd.f32 %v6661, %v6638
        %6663 = vadd.xlane.f32.xlu0 %v6662
        %v6664 = vpop.xlane.xlu0 %6663
        %v6665 = vadd.f32 %v6639, %v6640
        %v6666 = vadd.f32 %v6665, %v6641
        %v6667 = vadd.f32 %v6666, %v6642
        %v6668 = vadd.f32 %v6667, %v6643
        %v6669 = vadd.f32 %v6668, %v6644
        %6670 = vadd.xlane.f32.xlu0 %v6669
        %v6671 = vpop.xlane.xlu0 %6670
        %v6672 = vadd.f32 %v6645, %v6646
        %v6673 = vadd.f32 %v6672, %v6647
        %v6674 = vadd.f32 %v6673, %v6648
        %v6675 = vadd.f32 %v6674, %v6649
        %v6676 = vadd.f32 %v6675, %v6650
        %6677 = vadd.xlane.f32.xlu0 %v6676
        %v6678 = vpop.xlane.xlu0 %6677
        %v6680 = vperm.slane %v6613, 0
        %v6682 = vadd.f32 %v6657, %v6680
        %v6683 = vadd.f32 %v6664, %v6680
        %v6684 = vadd.f32 %v6671, %v6680
        %v6685 = vadd.f32 %v6678, %v6680
        %v6686 = vtanh.pop %v6682
        %v6687 = vtanh.pop %v6683
        %v6688 = vtanh.pop %v6684
        %v6689 = vtanh.pop %v6685
        %v6690 = vmul.f32 %v6686, 2.0
        %v6691 = vmul.f32 %v6687, 2.0
        %v6692 = vmul.f32 %v6688, 2.0
        %v6693 = vmul.f32 %v6689, 2.0
        %6694 = vst.msk [vmem:[%s809] sm:$0xff] %vm3693, %v6690
        %6695 = vst.msk [vmem:[%s809 + $0x8] sm:$0xff] %vm3693, %v6691
        %6696 = vst.msk [vmem:[%s809 + $0x10] sm:$0xff] %vm3693, %v6692
        %6697 = vst.msk [vmem:[%s809 + $0x18] sm:$0xff] %vm3693, %v6693
        %vm6698 = vcmask 15360
        %6699 = vst.msk [vmem:[%s815] sm:$0xff] %vm6698, %v3701
        %6700 = vst.msk [vmem:[%s815 + $0x8] sm:$0xff] %vm6698, %v3702
        %6701 = vst.msk [vmem:[%s815 + $0x10] sm:$0xff] %vm6698, %v3703
        %6702 = vst.msk [vmem:[%s815 + $0x18] sm:$0xff] %vm6698, %v3704
        %6703 = vst.msk [vmem:[%s821] sm:$0xff] %vm6698, %v3870
        %6704 = vst.msk [vmem:[%s821 + $0x8] sm:$0xff] %vm6698, %v3872
        %6705 = vst.msk [vmem:[%s821 + $0x10] sm:$0xff] %vm6698, %v3874
        %6706 = vst.msk [vmem:[%s821 + $0x18] sm:$0xff] %vm6698, %v3876
        %s6707 = smul.u32 4, %s39
        %p6708 = scmp.lt.s32.totalorder %s6707, 7
        %s6709 = scalar_select %p6708, %s6707, 7
        %s6710 = smul.addr %s6709, 8
        %s6711 = scalar_lea.vmem %s16, %s6710
        %s6712 = smul.u32 4, %s39
        %p6713 = scmp.lt.s32.totalorder %s6712, 7
        %s6714 = scalar_select %p6713, %s6712, 7
        %s6715 = smul.addr %s6714, 8
        %s6716 = scalar_lea.vmem %s17, %s6715
        %s6717 = smul.u32 4, %s39
        %p6718 = scmp.lt.s32.totalorder %s6717, 7
        %s6719 = scalar_select %p6718, %s6717, 7
        %s6720 = smul.addr %s6719, 8
        %s6721 = scalar_lea.vmem %s18, %s6720
        // Predicated region
        $region137: #{vae_forward.1} parent=83 // pred_check
          %p6722 = pneg %p403
        $region138: #{vae_forward.1} parent=83 // pred_check_branch
          %6724 = sbr.rel (%p6722) target = $region140
        $region139: #{vae_forward.1} parent=83 // pred_region
          %s6725 = smul.u32 4, %s39
        $region140: #{vae_forward.1} parent=83 // pred_fallthru
          _
        // Predicated region
        $region141: #{vae_forward.1} parent=83 // pred_check
          %p6726 = pneg %p429
        $region142: #{vae_forward.1} parent=83 // pred_check_branch
          %6728 = sbr.rel (%p6726) target = $region144
        $region143: #{vae_forward.1} parent=83 // pred_region
          %s6729 = smul.u32 4, %s39
        $region144: #{vae_forward.1} parent=83 // pred_fallthru
          _
        // Predicated region
        $region145: #{vae_forward.1} parent=83 // pred_check
          %p6730 = pneg %p455
        $region146: #{vae_forward.1} parent=83 // pred_check_branch
          %6732 = sbr.rel (%p6730) target = $region148
        $region147: #{vae_forward.1} parent=83 // pred_region
          %s6733 = smul.u32 4, %s39
        $region148: #{vae_forward.1} parent=83 // pred_fallthru
          _
      $region84: #{vae_forward.1} parent=5 // pred_fallthru
        _
      %p6734 = scmp.le.s32.totalorder 2, %s34
      // Predicated region
      $region149: #{vae_forward.1} parent=5 // pred_check
        %p6735 = pneg %p6734
      $region150: #{vae_forward.1} parent=5 // pred_check_branch
        %6737 = sbr.rel (%p6735) target = $region152
      $region151: #{vae_forward.1} parent=5 // pred_region
        %s6738 = ssub.s32 %s34, 2
        // Predicated region
        $region153: #{vae_forward.1} parent=151 // pred_check
          %p6739 = pneg %p409
        $region154: #{vae_forward.1} parent=151 // pred_check_branch
          %6741 = sbr.rel (%p6739) target = $region156
        $region155: #{vae_forward.1} parent=151 // pred_region
          %s6742 = smul.u32 4, %s40
          %p6743 = scmp.lt.s32.totalorder %s6742, 7
          %s6744 = scalar_select %p6743, %s6742, 7
          %s6745 = smul.addr %s6744, 8
          %s6746 = scalar_lea.vmem %s16, %s6745
        $region156: #{vae_forward.1} parent=151 // pred_fallthru
          _
        // Predicated region
        $region157: #{vae_forward.1} parent=151 // pred_check
          %p6747 = pneg %p435
        $region158: #{vae_forward.1} parent=151 // pred_check_branch
          %6749 = sbr.rel (%p6747) target = $region160
        $region159: #{vae_forward.1} parent=151 // pred_region
          %s6750 = smul.u32 4, %s40
          %p6751 = scmp.lt.s32.totalorder %s6750, 7
          %s6752 = scalar_select %p6751, %s6750, 7
          %s6753 = smul.addr %s6752, 8
          %s6754 = scalar_lea.vmem %s17, %s6753
        $region160: #{vae_forward.1} parent=151 // pred_fallthru
          _
        // Predicated region
        $region161: #{vae_forward.1} parent=151 // pred_check
          %p6755 = pneg %p461
        $region162: #{vae_forward.1} parent=151 // pred_check_branch
          %6757 = sbr.rel (%p6755) target = $region164
        $region163: #{vae_forward.1} parent=151 // pred_region
          %s6758 = smul.u32 4, %s40
          %p6759 = scmp.lt.s32.totalorder %s6758, 7
          %s6760 = scalar_select %p6759, %s6758, 7
          %s6761 = smul.addr %s6760, 8
          %s6762 = scalar_lea.vmem %s18, %s6761
        $region164: #{vae_forward.1} parent=151 // pred_fallthru
          _
      $region152: #{vae_forward.1} parent=5 // pred_fallthru
        _
    $region6: #{vae_forward.1} parent=1 // loop_footer
      %s38 = sadd.s32 1, %s34
    $region7: #{vae_forward.1} parent=1 // loop_footer_branch
      %33 = sbr.rel target = $region3
    $region8: #{vae_forward.1} parent=1 // loop_exit
      _
    %6763 = vsyncpa [#allocation5], 1
    %s6764 = scalar_lea.sflag [#allocation5], 1
    %6765 = vsyncpa %s6764, 1
    %6766 = vsyncpa [#allocation7], 1
    %6767 = vsyncpa [#allocation10], 1
    %6768 = vsyncpa [#allocation13], 1
    %6769 = vsyncpa [#allocation16], 1
    %6770 = vsyncpa [#allocation19], 1
    %6771 = vsyncpa [#allocation22], 1

</llo_original>
